<compile_context>
chip_gen: v7x
topology: tpu7x:2x2x1
jax: 0.10.0
libtpu: 0.0.40
codegen_flags: <defaults>
</compile_context>

<pallas_src>
import functools
from math import sqrt

import jax
import jax.numpy as jnp
from jax import lax
from jax.experimental import pallas as pl
from jax.experimental.pallas import tpu as pltpu

_INV_SQRT2 = 0.7071067811865476
_LANE = 128
_PH = 64  # padded half-width of the up-projection output


def _gelu_exact(x):
    # PyTorch F.gelu default (approximate='none'): 0.5*x*(1+erf(x/sqrt(2)))
    return 0.5 * x * (1.0 + lax.erf(x * _INV_SQRT2))


def _slstm_seq_kernel(d, H, rows, pack, unroll,
                      seq_ref, state_in_ref, vec_ref, wmat_ref,
                      out_ref, state_out_ref, state_s):
    """Runs `rows * pack` sLSTM timesteps for one (batch_block, T_block).

    seq_ref       : (rows, b_blk, pack*d)   pack timesteps per 128-lane row
    state_in_ref  : (b_blk, 4H)             packed [c | n | h | m] at t=0
    vec_ref       : (8, 128)                packed row-vector params
    wmat_ref      : (d+3H+PH, 128)          [Wx; Wr; Wup_pad; P_pad; Wdown_pad]
    out_ref       : (rows, b_blk, pack*d)   residual outputs (lane-dense)
    state_out_ref : (b_blk, 4H)             final packed state
    state_s       : VMEM scratch (b_blk, 4H) recurrent carry across T blocks
    """
    f32 = jnp.float32
    PH = _PH
    ti = pl.program_id(1)

    # ---- packed row-vector params (one vreg, loaded once per grid step) ----
    V = vec_ref[...]
    ln_w = V[0:1, 0:d]
    ln_b = V[1:2, 0:d]
    gn_w = V[2:3, 0:H]
    gn_b = V[3:4, 0:H]
    down_b = V[4:5, 0:d]
    b_gates = V[5:6, :]          # (1, 4H) = (1, 128)
    up_b = V[6:7, :]             # (1, 128), halves at lanes 0 / PH

    # ---- merged weight slab (VMEM-resident across the whole call) ----
    Wx = wmat_ref[0:d, :]                              # (d, 4H)
    Wr = wmat_ref[d:d + H, :]                          # (H, 4H)
    Wup = wmat_ref[d + H:d + 2 * H, :]                 # (H, 128) padded halves
    P = wmat_ref[d + 2 * H:d + 3 * H, :][:, 0:H]       # (H, H) GroupNorm proj
    Wdown = wmat_ref[d + 3 * H:d + 3 * H + PH, :][:, 0:d]   # (PH, d) zero-pad K

    def step(x_raw, st):
        c_p, n_p, h_p, m_p = st

        # LayerNorm(input_size), eps=1e-5
        mu = jnp.mean(x_raw, axis=-1, keepdims=True)
        cen = x_raw - mu
        var = jnp.mean(cen * cen, axis=-1, keepdims=True)
        x_t = cen * lax.rsqrt(var + 1e-5) * ln_w + ln_b

        # fused gate matmuls -> one (b, 128) lane-dense gate slab
        g = (jnp.dot(x_t, Wx, preferred_element_type=f32)
             + jnp.dot(h_p, Wr, preferred_element_type=f32)
             + b_gates)
        i_t = g[:, 0:H]
        f_t = g[:, H:2 * H]
        z_t = g[:, 2 * H:3 * H]
        o_t = g[:, 3 * H:4 * H]

        # stabilized exponential gating
        m_t = jnp.maximum(f_t + m_p, i_t)
        i_e = jnp.exp(i_t - m_t)
        f_e = jnp.exp(f_t - m_t + m_p)
        z_a = jnp.tanh(z_t)
        o_a = jax.nn.sigmoid(o_t)

        c_t = f_e * c_p + i_e * z_a
        n_t = f_e * n_p + i_e
        # EUP approx reciprocal + one Newton step (rel err ~1e-7)
        r = pl.reciprocal(n_t, approx=True)
        r = r * (2.0 - n_t * r)
        h_t = o_a * (c_t * r)

        # GroupNorm via precomputed projector P = (G G^T)/head_size
        mean_c = jnp.dot(h_t, P, preferred_element_type=f32)
        hc = h_t - mean_c
        var_c = jnp.dot(hc * hc, P, preferred_element_type=f32)
        gn = hc * lax.rsqrt(var_c + 1e-5) * gn_w + gn_b

        # up_proj (single padded matmul) + GELU mix + down_proj
        up = jnp.dot(gn, Wup, preferred_element_type=f32) + up_b   # (b, 128)
        mixed = up[:, 0:PH] + _gelu_exact(up[:, PH:2 * PH])        # pad lanes 0
        down = jnp.dot(mixed, Wdown, preferred_element_type=f32) + down_b

        return (c_t, n_t, h_t, m_t), down + x_raw

    # Initialize the VMEM-resident recurrent state at the first T block.
    @pl.when(ti == 0)
    def _():
        state_s[...] = state_in_ref[...]

    def row_body(rr, st):
        seq_row = seq_ref[rr]                     # (b_blk, pack*d), dense load
        outs = []
        for j in range(pack):                     # static unroll over pack
            st, o = step(seq_row[:, j * d:(j + 1) * d], st)
            outs.append(o)
        # one lane-dense store per row (pack timesteps per 128-lane row)
        out_ref[rr] = jnp.concatenate(outs, axis=1)
        return st

    S = state_s[...]
    st0 = (S[:, 0:H], S[:, H:2 * H], S[:, 2 * H:3 * H], S[:, 3 * H:4 * H])
    c_t, n_t, h_t, m_t = lax.fori_loop(0, rows, row_body, st0, unroll=unroll)

    # single dense 128-lane store of the packed state (carried across T blocks)
    state_s[...] = jnp.concatenate([c_t, n_t, h_t, m_t], axis=1)

    @pl.when(ti == pl.num_programs(1) - 1)
    def _():
        state_out_ref[...] = state_s[...]


# ----------------------- parameter packing (once) -----------------------
def pack_slstm_params(params, input_size, head_size, head_num):
    """Pack all sLSTM parameters into (vec, wmat). Call ONCE, reuse."""
    f32 = jnp.float32
    d = input_size
    H = head_num * head_size
    proj_dim = params["down_w"].shape[0]
    assert 4 * H == _LANE, "packing assumes 4*head_num*head_size == 128 lanes"
    assert proj_dim <= _PH and d <= _LANE and H <= _LANE

    def pad_row(v):
        v = jnp.asarray(v, f32).reshape(-1)
        return jnp.pad(v, (0, _LANE - v.shape[0]))

    b_gates = jnp.concatenate(
        [params["bi"], params["bf"], params["bz"], params["bo"]])
    up_b = (jnp.zeros((_LANE,), f32)
            .at[0:proj_dim].set(params["up1_b"].astype(f32))
            .at[_PH:_PH + proj_dim].set(params["up2_b"].astype(f32)))
    vec = jnp.stack([
        pad_row(params["ln_w"]), pad_row(params["ln_b"]),
        pad_row(params["gn_w"]), pad_row(params["gn_b"]),
        pad_row(params["down_b"]), pad_row(b_gates), up_b,
        jnp.zeros((_LANE,), f32),
    ])  # (8, 128)

    Wx = jnp.concatenate(
        [params["wi"], params["wf"], params["wz"], params["wo"]], axis=1)
    Wr = jnp.concatenate(
        [params["ri"], params["rf"], params["rz"], params["ro"]], axis=1)
    Wup = (jnp.zeros((H, _LANE), f32)
           .at[:, 0:proj_dim].set(params["up1_w"].astype(f32))
           .at[:, _PH:_PH + proj_dim].set(params["up2_w"].astype(f32)))
    grp = jnp.arange(H) // head_size
    P = (grp[:, None] == grp[None, :]).astype(f32) / float(head_size)
    P_pad = jnp.zeros((H, _LANE), f32).at[:, 0:H].set(P)
    Wdown_pad = (jnp.zeros((_PH, _LANE), f32)
                 .at[0:proj_dim, 0:d].set(params["down_w"].astype(f32)))
    # merged slab: [Wx; Wr; Wup_pad; P_pad; Wdown_pad]  -> (d+3H+PH, 128)
    wmat = jnp.concatenate(
        [Wx.astype(f32), Wr.astype(f32), Wup, P_pad, Wdown_pad], axis=0)
    return vec, wmat


def _pack_state(hid, B, H):
    parts = []
    for x in hid:
        x = jnp.asarray(x, jnp.float32)
        if x.ndim == 1:
            x = jnp.broadcast_to(x[None, :], (B, H))
        parts.append(x)
    return jnp.concatenate(parts, axis=-1)   # (B, 4H)


# ----------------------------- forwards -----------------------------
def slstm_sequence_forward(seq, hid, packed, head_num, head_size,
                           *, t_block=128, b_block=8):
    """Run T sLSTM steps in ONE pallas_call.

    seq : (T, B, d) f32.  hid: tuple of 4 arrays, each (H,) or (B, H).
    Returns (out (T, B, d), (c, n, h, m) each (B, H)).
    """
    vec, wmat = packed
    f32 = jnp.float32
    T, B, d = seq.shape
    H = head_num * head_size
    assert 4 * H == _LANE
    assert B % 8 == 0, "batch must be a multiple of the f32 sublane count (8)"
    b_block = min(b_block, B)
    assert B % b_block == 0 and b_block % 8 == 0

    # pack `pack` consecutive timesteps into one 128-lane row (lane-dense I/O)
    if _LANE % d == 0 and T % (_LANE // d) == 0:
        pack = _LANE // d
    else:
        pack = 1   # fallback: block last dim equals full array last dim
    n_rows = T // pack
    rows = max(1, min(t_block // pack if t_block >= pack else 1, n_rows))
    while n_rows % rows:
        rows -= 1
    nt = n_rows // rows
    nb = B // b_block

    seq_p = (seq.astype(f32)
             .reshape(n_rows, pack, B, d)
             .transpose(0, 2, 1, 3)
             .reshape(n_rows, B, pack * d))
    state0 = _pack_state(hid, B, H)

    kernel = functools.partial(_slstm_seq_kernel, d, H, rows, pack, rows <= 8)

    grid_spec = pltpu.PrefetchScalarGridSpec(
        num_scalar_prefetch=0,
        grid=(nb, nt),
        in_specs=[
            pl.BlockSpec((rows, b_block, pack * d), lambda bi, ti: (ti, bi, 0)),
            pl.BlockSpec((b_block, 4 * H), lambda bi, ti: (bi, 0)),
            pl.BlockSpec((8, _LANE), lambda bi, ti: (0, 0)),
            pl.BlockSpec(wmat.shape, lambda bi, ti: (0, 0)),
        ],
        out_specs=[
            pl.BlockSpec((rows, b_block, pack * d), lambda bi, ti: (ti, bi, 0)),
            pl.BlockSpec((b_block, 4 * H), lambda bi, ti: (bi, 0)),
        ],
        scratch_shapes=[pltpu.VMEM((b_block, 4 * H), f32)],
    )

    out_p, state_new = pl.pallas_call(
        kernel,
        out_shape=(jax.ShapeDtypeStruct((n_rows, B, pack * d), f32),
                   jax.ShapeDtypeStruct((B, 4 * H), f32)),
        grid_spec=grid_spec,
        compiler_params=pltpu.CompilerParams(
            dimension_semantics=("parallel", "arbitrary"),
            vmem_limit_bytes=32 * 1024 * 1024),
    )(seq_p, state0, vec, wmat)

    out = (out_p.reshape(n_rows, B, pack, d)
           .transpose(0, 2, 1, 3)
           .reshape(T, B, d))
    return out, (state_new[:, 0:H], state_new[:, H:2 * H],
                 state_new[:, 2 * H:3 * H], state_new[:, 3 * H:4 * H])


def slstm_forward(seq, hid, packed, head_num, head_size):
    """Single-step forward matching sLSTM.forward(seq, hid). seq: (B, d)."""
    out, hid_new = slstm_sequence_forward(seq[None], hid, packed,
                                          head_num, head_size, t_block=1)
    return out[0], hid_new


# ---------------- deterministic parameter init (synthetic) ----------------
def init_params(key, input_size, head_size, head_num, p_factor=4.0 / 3.0):
    H = head_num * head_size
    proj_dim = int(p_factor * H)
    ks = list(jax.random.split(key, 32))
    nk = iter(ks)
    f32 = jnp.float32

    def linear(fan_in, fan_out):
        bound = 1.0 / sqrt(fan_in)
        w = jax.random.uniform(next(nk), (fan_in, fan_out), f32, -bound, bound)
        b = jax.random.uniform(next(nk), (fan_out,), f32, -bound, bound)
        return w, b

    def block_diag_param():
        blocks = [jax.random.normal(next(nk), (head_size, head_size), f32)
                  for _ in range(head_num)]
        return jax.scipy.linalg.block_diag(*blocks)

    wi, bi = linear(input_size, H)
    wf, bf = linear(input_size, H)
    wz, bz = linear(input_size, H)
    wo, bo = linear(input_size, H)
    up_w, up_b = linear(H, 2 * proj_dim)
    down_w, down_b = linear(proj_dim, input_size)

    return dict(
        ln_w=jnp.ones((input_size,), f32), ln_b=jnp.zeros((input_size,), f32),
        wi=wi, bi=bi, wf=wf, bf=bf, wz=wz, bz=bz, wo=wo, bo=bo,
        ri=block_diag_param(), rf=block_diag_param(),
        rz=block_diag_param(), ro=block_diag_param(),
        gn_w=jnp.ones((H,), f32), gn_b=jnp.zeros((H,), f32),
        up1_w=up_w[:, :proj_dim], up1_b=up_b[:proj_dim],
        up2_w=up_w[:, proj_dim:], up2_b=up_b[proj_dim:],
        down_w=down_w, down_b=down_b,
    )


# ---------------- pure-JAX reference (for sanity check) ----------------
def slstm_reference(seq, hid, params, head_num, head_size):
    f32 = jnp.float32
    b, d = seq.shape
    H = head_num * head_size
    c0, n0, h0, m0 = (x.astype(f32) for x in hid)

    mu = seq.mean(-1, keepdims=True)
    var = ((seq - mu) ** 2).mean(-1, keepdims=True)
    x_t = (seq - mu) / jnp.sqrt(var + 1e-5) * params["ln_w"] + params["ln_b"]

    def lin(x, w, bb):
        return x @ w + bb

    i_t = lin(x_t, params["wi"], params["bi"]) + h0 @ params["ri"]
    f_t = lin(x_t, params["wf"], params["bf"]) + h0 @ params["rf"]
    z_t = lin(x_t, params["wz"], params["bz"]) + h0 @ params["rz"]
    o_t = lin(x_t, params["wo"], params["bo"]) + h0 @ params["ro"]

    m_t = jnp.maximum(f_t + m0, i_t)
    i_e = jnp.exp(i_t - m_t)
    f_e = jnp.exp(f_t - m_t + m0)
    z_a = jnp.tanh(z_t)
    o_a = jax.nn.sigmoid(o_t)

    c_t = f_e * c0 + i_e * z_a
    n_t = f_e * n0 + i_e
    h_t = o_a * (c_t / n_t)

    hg = h_t.reshape(b, head_num, head_size)
    gmu = hg.mean(-1, keepdims=True)
    gvar = ((hg - gmu) ** 2).mean(-1, keepdims=True)
    out = ((hg - gmu) / jnp.sqrt(gvar + 1e-5)).reshape(b, H)
    out = out * params["gn_w"] + params["gn_b"]

    out1 = lin(out, params["up1_w"], params["up1_b"])
    out2 = lin(out, params["up2_w"], params["up2_b"])
    out = out1 + 0.5 * out2 * (1.0 + lax.erf(out2 * _INV_SQRT2))
    out = lin(out, params["down_w"], params["down_b"])
    return out + seq, (c_t, n_t, h_t, m_t)


def slstm_reference_seq(seq, hid, params, head_num, head_size):
    T, B, d = seq.shape
    H = head_num * head_size
    hid_b = tuple(
        jnp.broadcast_to(jnp.asarray(x, jnp.float32)[None, :], (B, H))
        if jnp.asarray(x).ndim == 1 else jnp.asarray(x, jnp.float32)
        for x in hid)

    def body(carry, x):
        out, new = slstm_reference(x, carry, params, head_num, head_size)
        return new, out

    final, outs = lax.scan(body, hid_b, seq)
    return outs, final


if __name__ == "__main__":
    input_size, head_size, head_num = 32, 8, 4
    B, T = 16, 16                 # B multiple of 8 (f32 sublanes); 2 batch blocks
    H = head_num * head_size

    key = jax.random.PRNGKey(0)
    kp, kx = jax.random.split(key)
    params = init_params(kp, input_size, head_size, head_num)
    seq = jax.random.normal(kx, (T, B, input_size), jnp.float32)

    # Pack parameters ONCE (hoisted out of the per-step / per-call path).
    packed = pack_slstm_params(params, input_size, head_size, head_num)

    # init_hidden(): c=0, n=1, h=0, m=0 (each of shape (H,), broadcast over batch)
    hid = (jnp.zeros((H,), jnp.float32), jnp.ones((H,), jnp.float32),
           jnp.zeros((H,), jnp.float32), jnp.zeros((H,), jnp.float32))

    # --- full-sequence fused kernel: T timesteps in one pallas_call ---
    out, (c_t, n_t, h_t, m_t) = slstm_sequence_forward(
        seq, hid, packed, head_num, head_size, t_block=8, b_block=8)
    jax.block_until_ready((out, c_t, n_t, h_t, m_t))

    ref_out, (rc, rn, rh, rm) = slstm_reference_seq(
        seq, hid, params, head_num, head_size)
    for a, r in ((out, ref_out), (c_t, rc), (n_t, rn), (h_t, rh), (m_t, rm)):
        assert jnp.allclose(a, r, atol=2e-3, rtol=2e-3), "seq mismatch vs reference"

    # --- single-step path (exact module forward(seq, hid) semantics) ---
    out1, hid1 = slstm_forward(seq[0], hid, packed, head_num, head_size)
    jax.block_until_ready(out1)
    ref1, rhid1 = slstm_reference(seq[0], hid, params, head_num, head_size)
    assert jnp.allclose(out1, ref1, atol=1e-3, rtol=1e-3), "step mismatch"
    for a, r in zip(hid1, rhid1):
        assert jnp.allclose(a, r, atol=1e-3, rtol=1e-3), "state mismatch"

    print("KERNEL_OK")
</pallas_src>

<mosaic_0001>
module attributes {stable_mosaic.version = 11 : i64} {
  func.func @_slstm_seq_kernel(%arg0: i32, %arg1: i32, %arg2: memref<2x8x128xf32, #tpu.memory_space<vmem>>, %arg3: memref<8x128xf32, #tpu.memory_space<vmem>>, %arg4: memref<8x128xf32, #tpu.memory_space<vmem>>, %arg5: memref<192x128xf32, #tpu.memory_space<vmem>>, %arg6: memref<2x8x128xf32, #tpu.memory_space<vmem>>, %arg7: memref<8x128xf32, #tpu.memory_space<vmem>>, %arg8: memref<8x128xf32, #tpu.memory_space<vmem>>) attributes {dimension_semantics = [#tpu.dimension_semantics<parallel>, #tpu.dimension_semantics<arbitrary>], iteration_bounds = array<i64: 2, 2>, scalar_prefetch = 0 : i64, scratch_operands = 1 : i64, tpu.core_type = #tpu.core_type<tc>, window_params = [{transform_indices = @transform_0, window_bounds = array<i64: 2, 8, 128>}, {transform_indices = @transform_1, window_bounds = array<i64: 8, 128>}, {pipeline_mode = #tpu.pipeline_mode<synchronous>, transform_indices = @transform_2, window_bounds = array<i64: 8, 128>}, {pipeline_mode = #tpu.pipeline_mode<synchronous>, transform_indices = @transform_3, window_bounds = array<i64: 192, 128>}, {transform_indices = @transform_4, window_bounds = array<i64: 2, 8, 128>}, {transform_indices = @transform_5, window_bounds = array<i64: 8, 128>}]} {
    %c0 = arith.constant 0 : index
    %c0_0 = arith.constant 0 : index
    %0 = vector.load %arg4[%c0, %c0_0] : memref<8x128xf32, #tpu.memory_space<vmem>>, vector<8x128xf32>
    %1 = vector.extract_strided_slice %0 {offsets = [0, 0], sizes = [1, 32], strides = [1, 1]} : vector<8x128xf32> to vector<1x32xf32>
    %2 = vector.extract_strided_slice %0 {offsets = [1, 0], sizes = [1, 32], strides = [1, 1]} : vector<8x128xf32> to vector<1x32xf32>
    %3 = vector.extract_strided_slice %0 {offsets = [2, 0], sizes = [1, 32], strides = [1, 1]} : vector<8x128xf32> to vector<1x32xf32>
    %4 = vector.extract_strided_slice %0 {offsets = [3, 0], sizes = [1, 32], strides = [1, 1]} : vector<8x128xf32> to vector<1x32xf32>
    %5 = vector.extract_strided_slice %0 {offsets = [4, 0], sizes = [1, 32], strides = [1, 1]} : vector<8x128xf32> to vector<1x32xf32>
    %6 = vector.extract_strided_slice %0 {offsets = [5, 0], sizes = [1, 128], strides = [1, 1]} : vector<8x128xf32> to vector<1x128xf32>
    %7 = vector.extract_strided_slice %0 {offsets = [6, 0], sizes = [1, 128], strides = [1, 1]} : vector<8x128xf32> to vector<1x128xf32>
    %c0_1 = arith.constant 0 : index
    %c0_2 = arith.constant 0 : index
    %8 = vector.load %arg5[%c0_1, %c0_2] : memref<192x128xf32, #tpu.memory_space<vmem>>, vector<32x128xf32>
    %c32 = arith.constant 32 : index
    %c0_3 = arith.constant 0 : index
    %9 = vector.load %arg5[%c32, %c0_3] : memref<192x128xf32, #tpu.memory_space<vmem>>, vector<32x128xf32>
    %c64 = arith.constant 64 : index
    %c0_4 = arith.constant 0 : index
    %10 = vector.load %arg5[%c64, %c0_4] : memref<192x128xf32, #tpu.memory_space<vmem>>, vector<32x128xf32>
    %c96 = arith.constant 96 : index
    %c0_5 = arith.constant 0 : index
    %11 = vector.load %arg5[%c96, %c0_5] : memref<192x128xf32, #tpu.memory_space<vmem>>, vector<32x128xf32>
    %12 = vector.extract_strided_slice %11 {offsets = [0, 0], sizes = [32, 32], strides = [1, 1]} : vector<32x128xf32> to vector<32x32xf32>
    %c128 = arith.constant 128 : index
    %c0_6 = arith.constant 0 : index
    %13 = vector.load %arg5[%c128, %c0_6] : memref<192x128xf32, #tpu.memory_space<vmem>>, vector<64x128xf32>
    %14 = vector.extract_strided_slice %13 {offsets = [0, 0], sizes = [64, 32], strides = [1, 1]} : vector<64x128xf32> to vector<64x32xf32>
    %c0_i32 = arith.constant 0 : i32
    %15 = arith.cmpi eq, %arg1, %c0_i32 : i32
    %16 = arith.extui %15 : i1 to i32
    %c0_i32_7 = arith.constant 0 : i32
    %17 = arith.cmpi ne, %16, %c0_i32_7 : i32
    scf.if %17 {
      %c0_158 = arith.constant 0 : index
      %c0_159 = arith.constant 0 : index
      %724 = vector.load %arg3[%c0_158, %c0_159] : memref<8x128xf32, #tpu.memory_space<vmem>>, vector<8x128xf32>
      %c0_160 = arith.constant 0 : index
      %c0_161 = arith.constant 0 : index
      %725 = vector.load %arg8[%c0_160, %c0_161] : memref<8x128xf32, #tpu.memory_space<vmem>>, vector<8x128xf32>
      tpu.vector_store %arg8[%c0_160, %c0_161], %724 {strides = array<i32>} : memref<8x128xf32, #tpu.memory_space<vmem>>, vector<8x128xf32>,
    } else {
    }
    %c0_8 = arith.constant 0 : index
    %c0_9 = arith.constant 0 : index
    %18 = vector.load %arg8[%c0_8, %c0_9] : memref<8x128xf32, #tpu.memory_space<vmem>>, vector<8x128xf32>
    %19 = vector.extract_strided_slice %18 {offsets = [0, 0], sizes = [8, 32], strides = [1, 1]} : vector<8x128xf32> to vector<8x32xf32>
    %20 = vector.extract_strided_slice %18 {offsets = [0, 32], sizes = [8, 32], strides = [1, 1]} : vector<8x128xf32> to vector<8x32xf32>
    %21 = vector.extract_strided_slice %18 {offsets = [0, 64], sizes = [8, 32], strides = [1, 1]} : vector<8x128xf32> to vector<8x32xf32>
    %22 = vector.extract_strided_slice %18 {offsets = [0, 96], sizes = [8, 32], strides = [1, 1]} : vector<8x128xf32> to vector<8x32xf32>
    %c0_i32_10 = arith.constant 0 : i32
    %23 = arith.index_cast %c0_i32_10 : i32 to index
    %c0_11 = arith.constant 0 : index
    %c0_12 = arith.constant 0 : index
    %24 = vector.load %arg2[%23, %c0_11, %c0_12] : memref<2x8x128xf32, #tpu.memory_space<vmem>>, vector<1x8x128xf32>
    %25 = vector.shape_cast %24 : vector<1x8x128xf32> to vector<8x128xf32>
    %26 = vector.extract_strided_slice %25 {offsets = [0, 0], sizes = [8, 32], strides = [1, 1]} : vector<8x128xf32> to vector<8x32xf32>
    %cst = arith.constant dense<0.000000e+00> : vector<8xf32>
    %27 = vector.multi_reduction <add>, %26, %cst [1] : vector<8x32xf32> to vector<8xf32>
    %28 = vector.shape_cast %27 : vector<8xf32> to vector<8x1xf32>
    %cst_13 = arith.constant 3.200000e+01 : f32
    %29 = vector.broadcast %cst_13 : f32 to vector<8x1xf32>
    %30 = arith.divf %28, %29 : vector<8x1xf32>
    %31 = vector.broadcast %30 : vector<8x1xf32> to vector<8x32xf32>
    %32 = arith.subf %26, %31 : vector<8x32xf32>
    %33 = arith.mulf %32, %32 : vector<8x32xf32>
    %cst_14 = arith.constant dense<0.000000e+00> : vector<8xf32>
    %34 = vector.multi_reduction <add>, %33, %cst_14 [1] : vector<8x32xf32> to vector<8xf32>
    %35 = vector.shape_cast %34 : vector<8xf32> to vector<8x1xf32>
    %cst_15 = arith.constant 3.200000e+01 : f32
    %36 = vector.broadcast %cst_15 : f32 to vector<8x1xf32>
    %37 = arith.divf %35, %36 : vector<8x1xf32>
    %cst_16 = arith.constant 9.99999974E-6 : f32
    %38 = vector.broadcast %cst_16 : f32 to vector<8x1xf32>
    %39 = arith.addf %37, %38 : vector<8x1xf32>
    %40 = math.rsqrt %39 : vector<8x1xf32>
    %41 = vector.broadcast %40 : vector<8x1xf32> to vector<8x32xf32>
    %42 = arith.mulf %32, %41 : vector<8x32xf32>
    %43 = vector.broadcast %1 : vector<1x32xf32> to vector<8x32xf32>
    %44 = arith.mulf %42, %43 : vector<8x32xf32>
    %45 = vector.broadcast %2 : vector<1x32xf32> to vector<8x32xf32>
    %46 = arith.addf %44, %45 : vector<8x32xf32>
    %cst_17 = arith.constant dense<0.000000e+00> : vector<8x128xf32>
    %47 = tpu.matmul %46, %8, %cst_17 {dimension_numbers = #tpu.dot_dimension_numbers<[1], [0], [0], [1], [0, 0, 1, 1], [], []>} : vector<8x32xf32>, vector<32x128xf32>, vector<8x128xf32> -> vector<8x128xf32>
    %cst_18 = arith.constant dense<0.000000e+00> : vector<8x128xf32>
    %48 = tpu.matmul %21, %9, %cst_18 {dimension_numbers = #tpu.dot_dimension_numbers<[1], [0], [0], [1], [0, 0, 1, 1], [], []>} : vector<8x32xf32>, vector<32x128xf32>, vector<8x128xf32> -> vector<8x128xf32>
    %49 = arith.addf %47, %48 : vector<8x128xf32>
    %50 = vector.broadcast %6 : vector<1x128xf32> to vector<8x128xf32>
    %51 = arith.addf %49, %50 : vector<8x128xf32>
    %52 = vector.extract_strided_slice %51 {offsets = [0, 0], sizes = [8, 32], strides = [1, 1]} : vector<8x128xf32> to vector<8x32xf32>
    %53 = vector.extract_strided_slice %51 {offsets = [0, 32], sizes = [8, 32], strides = [1, 1]} : vector<8x128xf32> to vector<8x32xf32>
    %54 = vector.extract_strided_slice %51 {offsets = [0, 64], sizes = [8, 32], strides = [1, 1]} : vector<8x128xf32> to vector<8x32xf32>
    %55 = vector.extract_strided_slice %51 {offsets = [0, 96], sizes = [8, 32], strides = [1, 1]} : vector<8x128xf32> to vector<8x32xf32>
    %56 = arith.addf %53, %22 : vector<8x32xf32>
    %57 = arith.maximumf %56, %52 : vector<8x32xf32>
    %58 = arith.subf %52, %57 : vector<8x32xf32>
    %59 = math.exp %58 : vector<8x32xf32>
    %60 = arith.subf %53, %57 : vector<8x32xf32>
    %61 = arith.addf %60, %22 : vector<8x32xf32>
    %62 = math.exp %61 : vector<8x32xf32>
    %63 = math.tanh %54 : vector<8x32xf32>
    %64 = arith.negf %55 : vector<8x32xf32>
    %65 = math.exp %64 : vector<8x32xf32>
    %cst_19 = arith.constant 1.000000e+00 : f32
    %66 = vector.broadcast %cst_19 : f32 to vector<8x32xf32>
    %67 = arith.addf %66, %65 : vector<8x32xf32>
    %68 = arith.divf %66, %67 : vector<8x32xf32>
    %69 = arith.mulf %62, %19 : vector<8x32xf32>
    %70 = arith.mulf %59, %63 : vector<8x32xf32>
    %71 = arith.addf %69, %70 : vector<8x32xf32>
    %72 = arith.mulf %62, %20 : vector<8x32xf32>
    %73 = arith.addf %72, %59 : vector<8x32xf32>
    %74 = tpu.reciprocal %73 {approx = true} : vector<8x32xf32> -> vector<8x32xf32>
    %75 = arith.mulf %73, %74 : vector<8x32xf32>
    %cst_20 = arith.constant 2.000000e+00 : f32
    %76 = vector.broadcast %cst_20 : f32 to vector<8x32xf32>
    %77 = arith.subf %76, %75 : vector<8x32xf32>
    %78 = arith.mulf %74, %77 : vector<8x32xf32>
    %79 = arith.mulf %71, %78 : vector<8x32xf32>
    %80 = arith.mulf %68, %79 : vector<8x32xf32>
    %cst_21 = arith.constant dense<0.000000e+00> : vector<8x32xf32>
    %81 = tpu.matmul %80, %12, %cst_21 {dimension_numbers = #tpu.dot_dimension_numbers<[1], [0], [0], [1], [0, 0, 1, 1], [], []>} : vector<8x32xf32>, vector<32x32xf32>, vector<8x32xf32> -> vector<8x32xf32>
    %82 = arith.subf %80, %81 : vector<8x32xf32>
    %83 = arith.mulf %82, %82 : vector<8x32xf32>
    %cst_22 = arith.constant dense<0.000000e+00> : vector<8x32xf32>
    %84 = tpu.matmul %83, %12, %cst_22 {dimension_numbers = #tpu.dot_dimension_numbers<[1], [0], [0], [1], [0, 0, 1, 1], [], []>} : vector<8x32xf32>, vector<32x32xf32>, vector<8x32xf32> -> vector<8x32xf32>
    %cst_23 = arith.constant 9.99999974E-6 : f32
    %85 = vector.broadcast %cst_23 : f32 to vector<8x32xf32>
    %86 = arith.addf %84, %85 : vector<8x32xf32>
    %87 = math.rsqrt %86 : vector<8x32xf32>
    %88 = arith.mulf %82, %87 : vector<8x32xf32>
    %89 = vector.broadcast %3 : vector<1x32xf32> to vector<8x32xf32>
    %90 = arith.mulf %88, %89 : vector<8x32xf32>
    %91 = vector.broadcast %4 : vector<1x32xf32> to vector<8x32xf32>
    %92 = arith.addf %90, %91 : vector<8x32xf32>
    %cst_24 = arith.constant dense<0.000000e+00> : vector<8x128xf32>
    %93 = tpu.matmul %92, %10, %cst_24 {dimension_numbers = #tpu.dot_dimension_numbers<[1], [0], [0], [1], [0, 0, 1, 1], [], []>} : vector<8x32xf32>, vector<32x128xf32>, vector<8x128xf32> -> vector<8x128xf32>
    %94 = vector.broadcast %7 : vector<1x128xf32> to vector<8x128xf32>
    %95 = arith.addf %93, %94 : vector<8x128xf32>
    %96 = vector.extract_strided_slice %95 {offsets = [0, 0], sizes = [8, 64], strides = [1, 1]} : vector<8x128xf32> to vector<8x64xf32>
    %97 = vector.extract_strided_slice %95 {offsets = [0, 64], sizes = [8, 64], strides = [1, 1]} : vector<8x128xf32> to vector<8x64xf32>
    %cst_25 = arith.constant 5.000000e-01 : f32
    %98 = vector.broadcast %cst_25 : f32 to vector<8x64xf32>
    %99 = arith.mulf %98, %97 : vector<8x64xf32>
    %cst_26 = arith.constant 0.707106769 : f32
    %100 = vector.broadcast %cst_26 : f32 to vector<8x64xf32>
    %101 = arith.mulf %97, %100 : vector<8x64xf32>
    %102 = math.erf %101 : vector<8x64xf32>
    %cst_27 = arith.constant 1.000000e+00 : f32
    %103 = vector.broadcast %cst_27 : f32 to vector<8x64xf32>
    %104 = arith.addf %103, %102 : vector<8x64xf32>
    %105 = arith.mulf %99, %104 : vector<8x64xf32>
    %106 = arith.addf %96, %105 : vector<8x64xf32>
    %cst_28 = arith.constant dense<0.000000e+00> : vector<8x32xf32>
    %107 = tpu.matmul %106, %14, %cst_28 {dimension_numbers = #tpu.dot_dimension_numbers<[1], [0], [0], [1], [0, 0, 1, 1], [], []>} : vector<8x64xf32>, vector<64x32xf32>, vector<8x32xf32> -> vector<8x32xf32>
    %108 = vector.broadcast %5 : vector<1x32xf32> to vector<8x32xf32>
    %109 = arith.addf %107, %108 : vector<8x32xf32>
    %110 = arith.addf %109, %26 : vector<8x32xf32>
    %111 = vector.extract_strided_slice %25 {offsets = [0, 32], sizes = [8, 32], strides = [1, 1]} : vector<8x128xf32> to vector<8x32xf32>
    %cst_29 = arith.constant dense<0.000000e+00> : vector<8xf32>
    %112 = vector.multi_reduction <add>, %111, %cst_29 [1] : vector<8x32xf32> to vector<8xf32>
    %113 = vector.shape_cast %112 : vector<8xf32> to vector<8x1xf32>
    %cst_30 = arith.constant 3.200000e+01 : f32
    %114 = vector.broadcast %cst_30 : f32 to vector<8x1xf32>
    %115 = arith.divf %113, %114 : vector<8x1xf32>
    %116 = vector.broadcast %115 : vector<8x1xf32> to vector<8x32xf32>
    %117 = arith.subf %111, %116 : vector<8x32xf32>
    %118 = arith.mulf %117, %117 : vector<8x32xf32>
    %cst_31 = arith.constant dense<0.000000e+00> : vector<8xf32>
    %119 = vector.multi_reduction <add>, %118, %cst_31 [1] : vector<8x32xf32> to vector<8xf32>
    %120 = vector.shape_cast %119 : vector<8xf32> to vector<8x1xf32>
    %cst_32 = arith.constant 3.200000e+01 : f32
    %121 = vector.broadcast %cst_32 : f32 to vector<8x1xf32>
    %122 = arith.divf %120, %121 : vector<8x1xf32>
    %cst_33 = arith.constant 9.99999974E-6 : f32
    %123 = vector.broadcast %cst_33 : f32 to vector<8x1xf32>
    %124 = arith.addf %122, %123 : vector<8x1xf32>
    %125 = math.rsqrt %124 : vector<8x1xf32>
    %126 = vector.broadcast %125 : vector<8x1xf32> to vector<8x32xf32>
    %127 = arith.mulf %117, %126 : vector<8x32xf32>
    %128 = vector.broadcast %1 : vector<1x32xf32> to vector<8x32xf32>
    %129 = arith.mulf %127, %128 : vector<8x32xf32>
    %130 = vector.broadcast %2 : vector<1x32xf32> to vector<8x32xf32>
    %131 = arith.addf %129, %130 : vector<8x32xf32>
    %cst_34 = arith.constant dense<0.000000e+00> : vector<8x128xf32>
    %132 = tpu.matmul %131, %8, %cst_34 {dimension_numbers = #tpu.dot_dimension_numbers<[1], [0], [0], [1], [0, 0, 1, 1], [], []>} : vector<8x32xf32>, vector<32x128xf32>, vector<8x128xf32> -> vector<8x128xf32>
    %cst_35 = arith.constant dense<0.000000e+00> : vector<8x128xf32>
    %133 = tpu.matmul %80, %9, %cst_35 {dimension_numbers = #tpu.dot_dimension_numbers<[1], [0], [0], [1], [0, 0, 1, 1], [], []>} : vector<8x32xf32>, vector<32x128xf32>, vector<8x128xf32> -> vector<8x128xf32>
    %134 = arith.addf %132, %133 : vector<8x128xf32>
    %135 = vector.broadcast %6 : vector<1x128xf32> to vector<8x128xf32>
    %136 = arith.addf %134, %135 : vector<8x128xf32>
    %137 = vector.extract_strided_slice %136 {offsets = [0, 0], sizes = [8, 32], strides = [1, 1]} : vector<8x128xf32> to vector<8x32xf32>
    %138 = vector.extract_strided_slice %136 {offsets = [0, 32], sizes = [8, 32], strides = [1, 1]} : vector<8x128xf32> to vector<8x32xf32>
    %139 = vector.extract_strided_slice %136 {offsets = [0, 64], sizes = [8, 32], strides = [1, 1]} : vector<8x128xf32> to vector<8x32xf32>
    %140 = vector.extract_strided_slice %136 {offsets = [0, 96], sizes = [8, 32], strides = [1, 1]} : vector<8x128xf32> to vector<8x32xf32>
    %141 = arith.addf %138, %57 : vector<8x32xf32>
    %142 = arith.maximumf %141, %137 : vector<8x32xf32>
    %143 = arith.subf %137, %142 : vector<8x32xf32>
    %144 = math.exp %143 : vector<8x32xf32>
    %145 = arith.subf %138, %142 : vector<8x32xf32>
    %146 = arith.addf %145, %57 : vector<8x32xf32>
    %147 = math.exp %146 : vector<8x32xf32>
    %148 = math.tanh %139 : vector<8x32xf32>
    %149 = arith.negf %140 : vector<8x32xf32>
    %150 = math.exp %149 : vector<8x32xf32>
    %cst_36 = arith.constant 1.000000e+00 : f32
    %151 = vector.broadcast %cst_36 : f32 to vector<8x32xf32>
    %152 = arith.addf %151, %150 : vector<8x32xf32>
    %153 = arith.divf %151, %152 : vector<8x32xf32>
    %154 = arith.mulf %147, %71 : vector<8x32xf32>
    %155 = arith.mulf %144, %148 : vector<8x32xf32>
    %156 = arith.addf %154, %155 : vector<8x32xf32>
    %157 = arith.mulf %147, %73 : vector<8x32xf32>
    %158 = arith.addf %157, %144 : vector<8x32xf32>
    %159 = tpu.reciprocal %158 {approx = true} : vector<8x32xf32> -> vector<8x32xf32>
    %160 = arith.mulf %158, %159 : vector<8x32xf32>
    %cst_37 = arith.constant 2.000000e+00 : f32
    %161 = vector.broadcast %cst_37 : f32 to vector<8x32xf32>
    %162 = arith.subf %161, %160 : vector<8x32xf32>
    %163 = arith.mulf %159, %162 : vector<8x32xf32>
    %164 = arith.mulf %156, %163 : vector<8x32xf32>
    %165 = arith.mulf %153, %164 : vector<8x32xf32>
    %cst_38 = arith.constant dense<0.000000e+00> : vector<8x32xf32>
    %166 = tpu.matmul %165, %12, %cst_38 {dimension_numbers = #tpu.dot_dimension_numbers<[1], [0], [0], [1], [0, 0, 1, 1], [], []>} : vector<8x32xf32>, vector<32x32xf32>, vector<8x32xf32> -> vector<8x32xf32>
    %167 = arith.subf %165, %166 : vector<8x32xf32>
    %168 = arith.mulf %167, %167 : vector<8x32xf32>
    %cst_39 = arith.constant dense<0.000000e+00> : vector<8x32xf32>
    %169 = tpu.matmul %168, %12, %cst_39 {dimension_numbers = #tpu.dot_dimension_numbers<[1], [0], [0], [1], [0, 0, 1, 1], [], []>} : vector<8x32xf32>, vector<32x32xf32>, vector<8x32xf32> -> vector<8x32xf32>
    %cst_40 = arith.constant 9.99999974E-6 : f32
    %170 = vector.broadcast %cst_40 : f32 to vector<8x32xf32>
    %171 = arith.addf %169, %170 : vector<8x32xf32>
    %172 = math.rsqrt %171 : vector<8x32xf32>
    %173 = arith.mulf %167, %172 : vector<8x32xf32>
    %174 = vector.broadcast %3 : vector<1x32xf32> to vector<8x32xf32>
    %175 = arith.mulf %173, %174 : vector<8x32xf32>
    %176 = vector.broadcast %4 : vector<1x32xf32> to vector<8x32xf32>
    %177 = arith.addf %175, %176 : vector<8x32xf32>
    %cst_41 = arith.constant dense<0.000000e+00> : vector<8x128xf32>
    %178 = tpu.matmul %177, %10, %cst_41 {dimension_numbers = #tpu.dot_dimension_numbers<[1], [0], [0], [1], [0, 0, 1, 1], [], []>} : vector<8x32xf32>, vector<32x128xf32>, vector<8x128xf32> -> vector<8x128xf32>
    %179 = vector.broadcast %7 : vector<1x128xf32> to vector<8x128xf32>
    %180 = arith.addf %178, %179 : vector<8x128xf32>
    %181 = vector.extract_strided_slice %180 {offsets = [0, 0], sizes = [8, 64], strides = [1, 1]} : vector<8x128xf32> to vector<8x64xf32>
    %182 = vector.extract_strided_slice %180 {offsets = [0, 64], sizes = [8, 64], strides = [1, 1]} : vector<8x128xf32> to vector<8x64xf32>
    %cst_42 = arith.constant 5.000000e-01 : f32
    %183 = vector.broadcast %cst_42 : f32 to vector<8x64xf32>
    %184 = arith.mulf %183, %182 : vector<8x64xf32>
    %cst_43 = arith.constant 0.707106769 : f32
    %185 = vector.broadcast %cst_43 : f32 to vector<8x64xf32>
    %186 = arith.mulf %182, %185 : vector<8x64xf32>
    %187 = math.erf %186 : vector<8x64xf32>
    %cst_44 = arith.constant 1.000000e+00 : f32
    %188 = vector.broadcast %cst_44 : f32 to vector<8x64xf32>
    %189 = arith.addf %188, %187 : vector<8x64xf32>
    %190 = arith.mulf %184, %189 : vector<8x64xf32>
    %191 = arith.addf %181, %190 : vector<8x64xf32>
    %cst_45 = arith.constant dense<0.000000e+00> : vector<8x32xf32>
    %192 = tpu.matmul %191, %14, %cst_45 {dimension_numbers = #tpu.dot_dimension_numbers<[1], [0], [0], [1], [0, 0, 1, 1], [], []>} : vector<8x64xf32>, vector<64x32xf32>, vector<8x32xf32> -> vector<8x32xf32>
    %193 = vector.broadcast %5 : vector<1x32xf32> to vector<8x32xf32>
    %194 = arith.addf %192, %193 : vector<8x32xf32>
    %195 = arith.addf %194, %111 : vector<8x32xf32>
    %196 = vector.extract_strided_slice %25 {offsets = [0, 64], sizes = [8, 32], strides = [1, 1]} : vector<8x128xf32> to vector<8x32xf32>
    %cst_46 = arith.constant dense<0.000000e+00> : vector<8xf32>
    %197 = vector.multi_reduction <add>, %196, %cst_46 [1] : vector<8x32xf32> to vector<8xf32>
    %198 = vector.shape_cast %197 : vector<8xf32> to vector<8x1xf32>
    %cst_47 = arith.constant 3.200000e+01 : f32
    %199 = vector.broadcast %cst_47 : f32 to vector<8x1xf32>
    %200 = arith.divf %198, %199 : vector<8x1xf32>
    %201 = vector.broadcast %200 : vector<8x1xf32> to vector<8x32xf32>
    %202 = arith.subf %196, %201 : vector<8x32xf32>
    %203 = arith.mulf %202, %202 : vector<8x32xf32>
    %cst_48 = arith.constant dense<0.000000e+00> : vector<8xf32>
    %204 = vector.multi_reduction <add>, %203, %cst_48 [1] : vector<8x32xf32> to vector<8xf32>
    %205 = vector.shape_cast %204 : vector<8xf32> to vector<8x1xf32>
    %cst_49 = arith.constant 3.200000e+01 : f32
    %206 = vector.broadcast %cst_49 : f32 to vector<8x1xf32>
    %207 = arith.divf %205, %206 : vector<8x1xf32>
    %cst_50 = arith.constant 9.99999974E-6 : f32
    %208 = vector.broadcast %cst_50 : f32 to vector<8x1xf32>
    %209 = arith.addf %207, %208 : vector<8x1xf32>
    %210 = math.rsqrt %209 : vector<8x1xf32>
    %211 = vector.broadcast %210 : vector<8x1xf32> to vector<8x32xf32>
    %212 = arith.mulf %202, %211 : vector<8x32xf32>
    %213 = vector.broadcast %1 : vector<1x32xf32> to vector<8x32xf32>
    %214 = arith.mulf %212, %213 : vector<8x32xf32>
    %215 = vector.broadcast %2 : vector<1x32xf32> to vector<8x32xf32>
    %216 = arith.addf %214, %215 : vector<8x32xf32>
    %cst_51 = arith.constant dense<0.000000e+00> : vector<8x128xf32>
    %217 = tpu.matmul %216, %8, %cst_51 {dimension_numbers = #tpu.dot_dimension_numbers<[1], [0], [0], [1], [0, 0, 1, 1], [], []>} : vector<8x32xf32>, vector<32x128xf32>, vector<8x128xf32> -> vector<8x128xf32>
    %cst_52 = arith.constant dense<0.000000e+00> : vector<8x128xf32>
    %218 = tpu.matmul %165, %9, %cst_52 {dimension_numbers = #tpu.dot_dimension_numbers<[1], [0], [0], [1], [0, 0, 1, 1], [], []>} : vector<8x32xf32>, vector<32x128xf32>, vector<8x128xf32> -> vector<8x128xf32>
    %219 = arith.addf %217, %218 : vector<8x128xf32>
    %220 = vector.broadcast %6 : vector<1x128xf32> to vector<8x128xf32>
    %221 = arith.addf %219, %220 : vector<8x128xf32>
    %222 = vector.extract_strided_slice %221 {offsets = [0, 0], sizes = [8, 32], strides = [1, 1]} : vector<8x128xf32> to vector<8x32xf32>
    %223 = vector.extract_strided_slice %221 {offsets = [0, 32], sizes = [8, 32], strides = [1, 1]} : vector<8x128xf32> to vector<8x32xf32>
    %224 = vector.extract_strided_slice %221 {offsets = [0, 64], sizes = [8, 32], strides = [1, 1]} : vector<8x128xf32> to vector<8x32xf32>
    %225 = vector.extract_strided_slice %221 {offsets = [0, 96], sizes = [8, 32], strides = [1, 1]} : vector<8x128xf32> to vector<8x32xf32>
    %226 = arith.addf %223, %142 : vector<8x32xf32>
    %227 = arith.maximumf %226, %222 : vector<8x32xf32>
    %228 = arith.subf %222, %227 : vector<8x32xf32>
    %229 = math.exp %228 : vector<8x32xf32>
    %230 = arith.subf %223, %227 : vector<8x32xf32>
    %231 = arith.addf %230, %142 : vector<8x32xf32>
    %232 = math.exp %231 : vector<8x32xf32>
    %233 = math.tanh %224 : vector<8x32xf32>
    %234 = arith.negf %225 : vector<8x32xf32>
    %235 = math.exp %234 : vector<8x32xf32>
    %cst_53 = arith.constant 1.000000e+00 : f32
    %236 = vector.broadcast %cst_53 : f32 to vector<8x32xf32>
    %237 = arith.addf %236, %235 : vector<8x32xf32>
    %238 = arith.divf %236, %237 : vector<8x32xf32>
    %239 = arith.mulf %232, %156 : vector<8x32xf32>
    %240 = arith.mulf %229, %233 : vector<8x32xf32>
    %241 = arith.addf %239, %240 : vector<8x32xf32>
    %242 = arith.mulf %232, %158 : vector<8x32xf32>
    %243 = arith.addf %242, %229 : vector<8x32xf32>
    %244 = tpu.reciprocal %243 {approx = true} : vector<8x32xf32> -> vector<8x32xf32>
    %245 = arith.mulf %243, %244 : vector<8x32xf32>
    %cst_54 = arith.constant 2.000000e+00 : f32
    %246 = vector.broadcast %cst_54 : f32 to vector<8x32xf32>
    %247 = arith.subf %246, %245 : vector<8x32xf32>
    %248 = arith.mulf %244, %247 : vector<8x32xf32>
    %249 = arith.mulf %241, %248 : vector<8x32xf32>
    %250 = arith.mulf %238, %249 : vector<8x32xf32>
    %cst_55 = arith.constant dense<0.000000e+00> : vector<8x32xf32>
    %251 = tpu.matmul %250, %12, %cst_55 {dimension_numbers = #tpu.dot_dimension_numbers<[1], [0], [0], [1], [0, 0, 1, 1], [], []>} : vector<8x32xf32>, vector<32x32xf32>, vector<8x32xf32> -> vector<8x32xf32>
    %252 = arith.subf %250, %251 : vector<8x32xf32>
    %253 = arith.mulf %252, %252 : vector<8x32xf32>
    %cst_56 = arith.constant dense<0.000000e+00> : vector<8x32xf32>
    %254 = tpu.matmul %253, %12, %cst_56 {dimension_numbers = #tpu.dot_dimension_numbers<[1], [0], [0], [1], [0, 0, 1, 1], [], []>} : vector<8x32xf32>, vector<32x32xf32>, vector<8x32xf32> -> vector<8x32xf32>
    %cst_57 = arith.constant 9.99999974E-6 : f32
    %255 = vector.broadcast %cst_57 : f32 to vector<8x32xf32>
    %256 = arith.addf %254, %255 : vector<8x32xf32>
    %257 = math.rsqrt %256 : vector<8x32xf32>
    %258 = arith.mulf %252, %257 : vector<8x32xf32>
    %259 = vector.broadcast %3 : vector<1x32xf32> to vector<8x32xf32>
    %260 = arith.mulf %258, %259 : vector<8x32xf32>
    %261 = vector.broadcast %4 : vector<1x32xf32> to vector<8x32xf32>
    %262 = arith.addf %260, %261 : vector<8x32xf32>
    %cst_58 = arith.constant dense<0.000000e+00> : vector<8x128xf32>
    %263 = tpu.matmul %262, %10, %cst_58 {dimension_numbers = #tpu.dot_dimension_numbers<[1], [0], [0], [1], [0, 0, 1, 1], [], []>} : vector<8x32xf32>, vector<32x128xf32>, vector<8x128xf32> -> vector<8x128xf32>
    %264 = vector.broadcast %7 : vector<1x128xf32> to vector<8x128xf32>
    %265 = arith.addf %263, %264 : vector<8x128xf32>
    %266 = vector.extract_strided_slice %265 {offsets = [0, 0], sizes = [8, 64], strides = [1, 1]} : vector<8x128xf32> to vector<8x64xf32>
    %267 = vector.extract_strided_slice %265 {offsets = [0, 64], sizes = [8, 64], strides = [1, 1]} : vector<8x128xf32> to vector<8x64xf32>
    %cst_59 = arith.constant 5.000000e-01 : f32
    %268 = vector.broadcast %cst_59 : f32 to vector<8x64xf32>
    %269 = arith.mulf %268, %267 : vector<8x64xf32>
    %cst_60 = arith.constant 0.707106769 : f32
    %270 = vector.broadcast %cst_60 : f32 to vector<8x64xf32>
    %271 = arith.mulf %267, %270 : vector<8x64xf32>
    %272 = math.erf %271 : vector<8x64xf32>
    %cst_61 = arith.constant 1.000000e+00 : f32
    %273 = vector.broadcast %cst_61 : f32 to vector<8x64xf32>
    %274 = arith.addf %273, %272 : vector<8x64xf32>
    %275 = arith.mulf %269, %274 : vector<8x64xf32>
    %276 = arith.addf %266, %275 : vector<8x64xf32>
    %cst_62 = arith.constant dense<0.000000e+00> : vector<8x32xf32>
    %277 = tpu.matmul %276, %14, %cst_62 {dimension_numbers = #tpu.dot_dimension_numbers<[1], [0], [0], [1], [0, 0, 1, 1], [], []>} : vector<8x64xf32>, vector<64x32xf32>, vector<8x32xf32> -> vector<8x32xf32>
    %278 = vector.broadcast %5 : vector<1x32xf32> to vector<8x32xf32>
    %279 = arith.addf %277, %278 : vector<8x32xf32>
    %280 = arith.addf %279, %196 : vector<8x32xf32>
    %281 = vector.extract_strided_slice %25 {offsets = [0, 96], sizes = [8, 32], strides = [1, 1]} : vector<8x128xf32> to vector<8x32xf32>
    %cst_63 = arith.constant dense<0.000000e+00> : vector<8xf32>
    %282 = vector.multi_reduction <add>, %281, %cst_63 [1] : vector<8x32xf32> to vector<8xf32>
    %283 = vector.shape_cast %282 : vector<8xf32> to vector<8x1xf32>
    %cst_64 = arith.constant 3.200000e+01 : f32
    %284 = vector.broadcast %cst_64 : f32 to vector<8x1xf32>
    %285 = arith.divf %283, %284 : vector<8x1xf32>
    %286 = vector.broadcast %285 : vector<8x1xf32> to vector<8x32xf32>
    %287 = arith.subf %281, %286 : vector<8x32xf32>
    %288 = arith.mulf %287, %287 : vector<8x32xf32>
    %cst_65 = arith.constant dense<0.000000e+00> : vector<8xf32>
    %289 = vector.multi_reduction <add>, %288, %cst_65 [1] : vector<8x32xf32> to vector<8xf32>
    %290 = vector.shape_cast %289 : vector<8xf32> to vector<8x1xf32>
    %cst_66 = arith.constant 3.200000e+01 : f32
    %291 = vector.broadcast %cst_66 : f32 to vector<8x1xf32>
    %292 = arith.divf %290, %291 : vector<8x1xf32>
    %cst_67 = arith.constant 9.99999974E-6 : f32
    %293 = vector.broadcast %cst_67 : f32 to vector<8x1xf32>
    %294 = arith.addf %292, %293 : vector<8x1xf32>
    %295 = math.rsqrt %294 : vector<8x1xf32>
    %296 = vector.broadcast %295 : vector<8x1xf32> to vector<8x32xf32>
    %297 = arith.mulf %287, %296 : vector<8x32xf32>
    %298 = vector.broadcast %1 : vector<1x32xf32> to vector<8x32xf32>
    %299 = arith.mulf %297, %298 : vector<8x32xf32>
    %300 = vector.broadcast %2 : vector<1x32xf32> to vector<8x32xf32>
    %301 = arith.addf %299, %300 : vector<8x32xf32>
    %cst_68 = arith.constant dense<0.000000e+00> : vector<8x128xf32>
    %302 = tpu.matmul %301, %8, %cst_68 {dimension_numbers = #tpu.dot_dimension_numbers<[1], [0], [0], [1], [0, 0, 1, 1], [], []>} : vector<8x32xf32>, vector<32x128xf32>, vector<8x128xf32> -> vector<8x128xf32>
    %cst_69 = arith.constant dense<0.000000e+00> : vector<8x128xf32>
    %303 = tpu.matmul %250, %9, %cst_69 {dimension_numbers = #tpu.dot_dimension_numbers<[1], [0], [0], [1], [0, 0, 1, 1], [], []>} : vector<8x32xf32>, vector<32x128xf32>, vector<8x128xf32> -> vector<8x128xf32>
    %304 = arith.addf %302, %303 : vector<8x128xf32>
    %305 = vector.broadcast %6 : vector<1x128xf32> to vector<8x128xf32>
    %306 = arith.addf %304, %305 : vector<8x128xf32>
    %307 = vector.extract_strided_slice %306 {offsets = [0, 0], sizes = [8, 32], strides = [1, 1]} : vector<8x128xf32> to vector<8x32xf32>
    %308 = vector.extract_strided_slice %306 {offsets = [0, 32], sizes = [8, 32], strides = [1, 1]} : vector<8x128xf32> to vector<8x32xf32>
    %309 = vector.extract_strided_slice %306 {offsets = [0, 64], sizes = [8, 32], strides = [1, 1]} : vector<8x128xf32> to vector<8x32xf32>
    %310 = vector.extract_strided_slice %306 {offsets = [0, 96], sizes = [8, 32], strides = [1, 1]} : vector<8x128xf32> to vector<8x32xf32>
    %311 = arith.addf %308, %227 : vector<8x32xf32>
    %312 = arith.maximumf %311, %307 : vector<8x32xf32>
    %313 = arith.subf %307, %312 : vector<8x32xf32>
    %314 = math.exp %313 : vector<8x32xf32>
    %315 = arith.subf %308, %312 : vector<8x32xf32>
    %316 = arith.addf %315, %227 : vector<8x32xf32>
    %317 = math.exp %316 : vector<8x32xf32>
    %318 = math.tanh %309 : vector<8x32xf32>
    %319 = arith.negf %310 : vector<8x32xf32>
    %320 = math.exp %319 : vector<8x32xf32>
    %cst_70 = arith.constant 1.000000e+00 : f32
    %321 = vector.broadcast %cst_70 : f32 to vector<8x32xf32>
    %322 = arith.addf %321, %320 : vector<8x32xf32>
    %323 = arith.divf %321, %322 : vector<8x32xf32>
    %324 = arith.mulf %317, %241 : vector<8x32xf32>
    %325 = arith.mulf %314, %318 : vector<8x32xf32>
    %326 = arith.addf %324, %325 : vector<8x32xf32>
    %327 = arith.mulf %317, %243 : vector<8x32xf32>
    %328 = arith.addf %327, %314 : vector<8x32xf32>
    %329 = tpu.reciprocal %328 {approx = true} : vector<8x32xf32> -> vector<8x32xf32>
    %330 = arith.mulf %328, %329 : vector<8x32xf32>
    %cst_71 = arith.constant 2.000000e+00 : f32
    %331 = vector.broadcast %cst_71 : f32 to vector<8x32xf32>
    %332 = arith.subf %331, %330 : vector<8x32xf32>
    %333 = arith.mulf %329, %332 : vector<8x32xf32>
    %334 = arith.mulf %326, %333 : vector<8x32xf32>
    %335 = arith.mulf %323, %334 : vector<8x32xf32>
    %cst_72 = arith.constant dense<0.000000e+00> : vector<8x32xf32>
    %336 = tpu.matmul %335, %12, %cst_72 {dimension_numbers = #tpu.dot_dimension_numbers<[1], [0], [0], [1], [0, 0, 1, 1], [], []>} : vector<8x32xf32>, vector<32x32xf32>, vector<8x32xf32> -> vector<8x32xf32>
    %337 = arith.subf %335, %336 : vector<8x32xf32>
    %338 = arith.mulf %337, %337 : vector<8x32xf32>
    %cst_73 = arith.constant dense<0.000000e+00> : vector<8x32xf32>
    %339 = tpu.matmul %338, %12, %cst_73 {dimension_numbers = #tpu.dot_dimension_numbers<[1], [0], [0], [1], [0, 0, 1, 1], [], []>} : vector<8x32xf32>, vector<32x32xf32>, vector<8x32xf32> -> vector<8x32xf32>
    %cst_74 = arith.constant 9.99999974E-6 : f32
    %340 = vector.broadcast %cst_74 : f32 to vector<8x32xf32>
    %341 = arith.addf %339, %340 : vector<8x32xf32>
    %342 = math.rsqrt %341 : vector<8x32xf32>
    %343 = arith.mulf %337, %342 : vector<8x32xf32>
    %344 = vector.broadcast %3 : vector<1x32xf32> to vector<8x32xf32>
    %345 = arith.mulf %343, %344 : vector<8x32xf32>
    %346 = vector.broadcast %4 : vector<1x32xf32> to vector<8x32xf32>
    %347 = arith.addf %345, %346 : vector<8x32xf32>
    %cst_75 = arith.constant dense<0.000000e+00> : vector<8x128xf32>
    %348 = tpu.matmul %347, %10, %cst_75 {dimension_numbers = #tpu.dot_dimension_numbers<[1], [0], [0], [1], [0, 0, 1, 1], [], []>} : vector<8x32xf32>, vector<32x128xf32>, vector<8x128xf32> -> vector<8x128xf32>
    %349 = vector.broadcast %7 : vector<1x128xf32> to vector<8x128xf32>
    %350 = arith.addf %348, %349 : vector<8x128xf32>
    %351 = vector.extract_strided_slice %350 {offsets = [0, 0], sizes = [8, 64], strides = [1, 1]} : vector<8x128xf32> to vector<8x64xf32>
    %352 = vector.extract_strided_slice %350 {offsets = [0, 64], sizes = [8, 64], strides = [1, 1]} : vector<8x128xf32> to vector<8x64xf32>
    %cst_76 = arith.constant 5.000000e-01 : f32
    %353 = vector.broadcast %cst_76 : f32 to vector<8x64xf32>
    %354 = arith.mulf %353, %352 : vector<8x64xf32>
    %cst_77 = arith.constant 0.707106769 : f32
    %355 = vector.broadcast %cst_77 : f32 to vector<8x64xf32>
    %356 = arith.mulf %352, %355 : vector<8x64xf32>
    %357 = math.erf %356 : vector<8x64xf32>
    %cst_78 = arith.constant 1.000000e+00 : f32
    %358 = vector.broadcast %cst_78 : f32 to vector<8x64xf32>
    %359 = arith.addf %358, %357 : vector<8x64xf32>
    %360 = arith.mulf %354, %359 : vector<8x64xf32>
    %361 = arith.addf %351, %360 : vector<8x64xf32>
    %cst_79 = arith.constant dense<0.000000e+00> : vector<8x32xf32>
    %362 = tpu.matmul %361, %14, %cst_79 {dimension_numbers = #tpu.dot_dimension_numbers<[1], [0], [0], [1], [0, 0, 1, 1], [], []>} : vector<8x64xf32>, vector<64x32xf32>, vector<8x32xf32> -> vector<8x32xf32>
    %363 = vector.broadcast %5 : vector<1x32xf32> to vector<8x32xf32>
    %364 = arith.addf %362, %363 : vector<8x32xf32>
    %365 = arith.addf %364, %281 : vector<8x32xf32>
    %366 = tpu.concatenate %110, %195, %280, %365 in 1 : vector<8x32xf32>, vector<8x32xf32>, vector<8x32xf32>, vector<8x32xf32> -> vector<8x128xf32>
    %367 = arith.index_cast %c0_i32_10 : i32 to index
    %c0_80 = arith.constant 0 : index
    %c0_81 = arith.constant 0 : index
    %368 = vector.load %arg6[%367, %c0_80, %c0_81] : memref<2x8x128xf32, #tpu.memory_space<vmem>>, vector<1x8x128xf32>
    %369 = vector.shape_cast %368 : vector<1x8x128xf32> to vector<8x128xf32>
    %370 = vector.shape_cast %366 : vector<8x128xf32> to vector<1x8x128xf32>
    tpu.vector_store %arg6[%367, %c0_80, %c0_81], %370 {strides = array<i32>} : memref<2x8x128xf32, #tpu.memory_space<vmem>>, vector<1x8x128xf32>,
    %c1_i32 = arith.constant 1 : i32
    %371 = arith.index_cast %c1_i32 : i32 to index
    %c0_82 = arith.constant 0 : index
    %c0_83 = arith.constant 0 : index
    %372 = vector.load %arg2[%371, %c0_82, %c0_83] : memref<2x8x128xf32, #tpu.memory_space<vmem>>, vector<1x8x128xf32>
    %373 = vector.shape_cast %372 : vector<1x8x128xf32> to vector<8x128xf32>
    %374 = vector.extract_strided_slice %373 {offsets = [0, 0], sizes = [8, 32], strides = [1, 1]} : vector<8x128xf32> to vector<8x32xf32>
    %cst_84 = arith.constant dense<0.000000e+00> : vector<8xf32>
    %375 = vector.multi_reduction <add>, %374, %cst_84 [1] : vector<8x32xf32> to vector<8xf32>
    %376 = vector.shape_cast %375 : vector<8xf32> to vector<8x1xf32>
    %cst_85 = arith.constant 3.200000e+01 : f32
    %377 = vector.broadcast %cst_85 : f32 to vector<8x1xf32>
    %378 = arith.divf %376, %377 : vector<8x1xf32>
    %379 = vector.broadcast %378 : vector<8x1xf32> to vector<8x32xf32>
    %380 = arith.subf %374, %379 : vector<8x32xf32>
    %381 = arith.mulf %380, %380 : vector<8x32xf32>
    %cst_86 = arith.constant dense<0.000000e+00> : vector<8xf32>
    %382 = vector.multi_reduction <add>, %381, %cst_86 [1] : vector<8x32xf32> to vector<8xf32>
    %383 = vector.shape_cast %382 : vector<8xf32> to vector<8x1xf32>
    %cst_87 = arith.constant 3.200000e+01 : f32
    %384 = vector.broadcast %cst_87 : f32 to vector<8x1xf32>
    %385 = arith.divf %383, %384 : vector<8x1xf32>
    %cst_88 = arith.constant 9.99999974E-6 : f32
    %386 = vector.broadcast %cst_88 : f32 to vector<8x1xf32>
    %387 = arith.addf %385, %386 : vector<8x1xf32>
    %388 = math.rsqrt %387 : vector<8x1xf32>
    %389 = vector.broadcast %388 : vector<8x1xf32> to vector<8x32xf32>
    %390 = arith.mulf %380, %389 : vector<8x32xf32>
    %391 = vector.broadcast %1 : vector<1x32xf32> to vector<8x32xf32>
    %392 = arith.mulf %390, %391 : vector<8x32xf32>
    %393 = vector.broadcast %2 : vector<1x32xf32> to vector<8x32xf32>
    %394 = arith.addf %392, %393 : vector<8x32xf32>
    %cst_89 = arith.constant dense<0.000000e+00> : vector<8x128xf32>
    %395 = tpu.matmul %394, %8, %cst_89 {dimension_numbers = #tpu.dot_dimension_numbers<[1], [0], [0], [1], [0, 0, 1, 1], [], []>} : vector<8x32xf32>, vector<32x128xf32>, vector<8x128xf32> -> vector<8x128xf32>
    %cst_90 = arith.constant dense<0.000000e+00> : vector<8x128xf32>
    %396 = tpu.matmul %335, %9, %cst_90 {dimension_numbers = #tpu.dot_dimension_numbers<[1], [0], [0], [1], [0, 0, 1, 1], [], []>} : vector<8x32xf32>, vector<32x128xf32>, vector<8x128xf32> -> vector<8x128xf32>
    %397 = arith.addf %395, %396 : vector<8x128xf32>
    %398 = vector.broadcast %6 : vector<1x128xf32> to vector<8x128xf32>
    %399 = arith.addf %397, %398 : vector<8x128xf32>
    %400 = vector.extract_strided_slice %399 {offsets = [0, 0], sizes = [8, 32], strides = [1, 1]} : vector<8x128xf32> to vector<8x32xf32>
    %401 = vector.extract_strided_slice %399 {offsets = [0, 32], sizes = [8, 32], strides = [1, 1]} : vector<8x128xf32> to vector<8x32xf32>
    %402 = vector.extract_strided_slice %399 {offsets = [0, 64], sizes = [8, 32], strides = [1, 1]} : vector<8x128xf32> to vector<8x32xf32>
    %403 = vector.extract_strided_slice %399 {offsets = [0, 96], sizes = [8, 32], strides = [1, 1]} : vector<8x128xf32> to vector<8x32xf32>
    %404 = arith.addf %401, %312 : vector<8x32xf32>
    %405 = arith.maximumf %404, %400 : vector<8x32xf32>
    %406 = arith.subf %400, %405 : vector<8x32xf32>
    %407 = math.exp %406 : vector<8x32xf32>
    %408 = arith.subf %401, %405 : vector<8x32xf32>
    %409 = arith.addf %408, %312 : vector<8x32xf32>
    %410 = math.exp %409 : vector<8x32xf32>
    %411 = math.tanh %402 : vector<8x32xf32>
    %412 = arith.negf %403 : vector<8x32xf32>
    %413 = math.exp %412 : vector<8x32xf32>
    %cst_91 = arith.constant 1.000000e+00 : f32
    %414 = vector.broadcast %cst_91 : f32 to vector<8x32xf32>
    %415 = arith.addf %414, %413 : vector<8x32xf32>
    %416 = arith.divf %414, %415 : vector<8x32xf32>
    %417 = arith.mulf %410, %326 : vector<8x32xf32>
    %418 = arith.mulf %407, %411 : vector<8x32xf32>
    %419 = arith.addf %417, %418 : vector<8x32xf32>
    %420 = arith.mulf %410, %328 : vector<8x32xf32>
    %421 = arith.addf %420, %407 : vector<8x32xf32>
    %422 = tpu.reciprocal %421 {approx = true} : vector<8x32xf32> -> vector<8x32xf32>
    %423 = arith.mulf %421, %422 : vector<8x32xf32>
    %cst_92 = arith.constant 2.000000e+00 : f32
    %424 = vector.broadcast %cst_92 : f32 to vector<8x32xf32>
    %425 = arith.subf %424, %423 : vector<8x32xf32>
    %426 = arith.mulf %422, %425 : vector<8x32xf32>
    %427 = arith.mulf %419, %426 : vector<8x32xf32>
    %428 = arith.mulf %416, %427 : vector<8x32xf32>
    %cst_93 = arith.constant dense<0.000000e+00> : vector<8x32xf32>
    %429 = tpu.matmul %428, %12, %cst_93 {dimension_numbers = #tpu.dot_dimension_numbers<[1], [0], [0], [1], [0, 0, 1, 1], [], []>} : vector<8x32xf32>, vector<32x32xf32>, vector<8x32xf32> -> vector<8x32xf32>
    %430 = arith.subf %428, %429 : vector<8x32xf32>
    %431 = arith.mulf %430, %430 : vector<8x32xf32>
    %cst_94 = arith.constant dense<0.000000e+00> : vector<8x32xf32>
    %432 = tpu.matmul %431, %12, %cst_94 {dimension_numbers = #tpu.dot_dimension_numbers<[1], [0], [0], [1], [0, 0, 1, 1], [], []>} : vector<8x32xf32>, vector<32x32xf32>, vector<8x32xf32> -> vector<8x32xf32>
    %cst_95 = arith.constant 9.99999974E-6 : f32
    %433 = vector.broadcast %cst_95 : f32 to vector<8x32xf32>
    %434 = arith.addf %432, %433 : vector<8x32xf32>
    %435 = math.rsqrt %434 : vector<8x32xf32>
    %436 = arith.mulf %430, %435 : vector<8x32xf32>
    %437 = vector.broadcast %3 : vector<1x32xf32> to vector<8x32xf32>
    %438 = arith.mulf %436, %437 : vector<8x32xf32>
    %439 = vector.broadcast %4 : vector<1x32xf32> to vector<8x32xf32>
    %440 = arith.addf %438, %439 : vector<8x32xf32>
    %cst_96 = arith.constant dense<0.000000e+00> : vector<8x128xf32>
    %441 = tpu.matmul %440, %10, %cst_96 {dimension_numbers = #tpu.dot_dimension_numbers<[1], [0], [0], [1], [0, 0, 1, 1], [], []>} : vector<8x32xf32>, vector<32x128xf32>, vector<8x128xf32> -> vector<8x128xf32>
    %442 = vector.broadcast %7 : vector<1x128xf32> to vector<8x128xf32>
    %443 = arith.addf %441, %442 : vector<8x128xf32>
    %444 = vector.extract_strided_slice %443 {offsets = [0, 0], sizes = [8, 64], strides = [1, 1]} : vector<8x128xf32> to vector<8x64xf32>
    %445 = vector.extract_strided_slice %443 {offsets = [0, 64], sizes = [8, 64], strides = [1, 1]} : vector<8x128xf32> to vector<8x64xf32>
    %cst_97 = arith.constant 5.000000e-01 : f32
    %446 = vector.broadcast %cst_97 : f32 to vector<8x64xf32>
    %447 = arith.mulf %446, %445 : vector<8x64xf32>
    %cst_98 = arith.constant 0.707106769 : f32
    %448 = vector.broadcast %cst_98 : f32 to vector<8x64xf32>
    %449 = arith.mulf %445, %448 : vector<8x64xf32>
    %450 = math.erf %449 : vector<8x64xf32>
    %cst_99 = arith.constant 1.000000e+00 : f32
    %451 = vector.broadcast %cst_99 : f32 to vector<8x64xf32>
    %452 = arith.addf %451, %450 : vector<8x64xf32>
    %453 = arith.mulf %447, %452 : vector<8x64xf32>
    %454 = arith.addf %444, %453 : vector<8x64xf32>
    %cst_100 = arith.constant dense<0.000000e+00> : vector<8x32xf32>
    %455 = tpu.matmul %454, %14, %cst_100 {dimension_numbers = #tpu.dot_dimension_numbers<[1], [0], [0], [1], [0, 0, 1, 1], [], []>} : vector<8x64xf32>, vector<64x32xf32>, vector<8x32xf32> -> vector<8x32xf32>
    %456 = vector.broadcast %5 : vector<1x32xf32> to vector<8x32xf32>
    %457 = arith.addf %455, %456 : vector<8x32xf32>
    %458 = arith.addf %457, %374 : vector<8x32xf32>
    %459 = vector.extract_strided_slice %373 {offsets = [0, 32], sizes = [8, 32], strides = [1, 1]} : vector<8x128xf32> to vector<8x32xf32>
    %cst_101 = arith.constant dense<0.000000e+00> : vector<8xf32>
    %460 = vector.multi_reduction <add>, %459, %cst_101 [1] : vector<8x32xf32> to vector<8xf32>
    %461 = vector.shape_cast %460 : vector<8xf32> to vector<8x1xf32>
    %cst_102 = arith.constant 3.200000e+01 : f32
    %462 = vector.broadcast %cst_102 : f32 to vector<8x1xf32>
    %463 = arith.divf %461, %462 : vector<8x1xf32>
    %464 = vector.broadcast %463 : vector<8x1xf32> to vector<8x32xf32>
    %465 = arith.subf %459, %464 : vector<8x32xf32>
    %466 = arith.mulf %465, %465 : vector<8x32xf32>
    %cst_103 = arith.constant dense<0.000000e+00> : vector<8xf32>
    %467 = vector.multi_reduction <add>, %466, %cst_103 [1] : vector<8x32xf32> to vector<8xf32>
    %468 = vector.shape_cast %467 : vector<8xf32> to vector<8x1xf32>
    %cst_104 = arith.constant 3.200000e+01 : f32
    %469 = vector.broadcast %cst_104 : f32 to vector<8x1xf32>
    %470 = arith.divf %468, %469 : vector<8x1xf32>
    %cst_105 = arith.constant 9.99999974E-6 : f32
    %471 = vector.broadcast %cst_105 : f32 to vector<8x1xf32>
    %472 = arith.addf %470, %471 : vector<8x1xf32>
    %473 = math.rsqrt %472 : vector<8x1xf32>
    %474 = vector.broadcast %473 : vector<8x1xf32> to vector<8x32xf32>
    %475 = arith.mulf %465, %474 : vector<8x32xf32>
    %476 = vector.broadcast %1 : vector<1x32xf32> to vector<8x32xf32>
    %477 = arith.mulf %475, %476 : vector<8x32xf32>
    %478 = vector.broadcast %2 : vector<1x32xf32> to vector<8x32xf32>
    %479 = arith.addf %477, %478 : vector<8x32xf32>
    %cst_106 = arith.constant dense<0.000000e+00> : vector<8x128xf32>
    %480 = tpu.matmul %479, %8, %cst_106 {dimension_numbers = #tpu.dot_dimension_numbers<[1], [0], [0], [1], [0, 0, 1, 1], [], []>} : vector<8x32xf32>, vector<32x128xf32>, vector<8x128xf32> -> vector<8x128xf32>
    %cst_107 = arith.constant dense<0.000000e+00> : vector<8x128xf32>
    %481 = tpu.matmul %428, %9, %cst_107 {dimension_numbers = #tpu.dot_dimension_numbers<[1], [0], [0], [1], [0, 0, 1, 1], [], []>} : vector<8x32xf32>, vector<32x128xf32>, vector<8x128xf32> -> vector<8x128xf32>
    %482 = arith.addf %480, %481 : vector<8x128xf32>
    %483 = vector.broadcast %6 : vector<1x128xf32> to vector<8x128xf32>
    %484 = arith.addf %482, %483 : vector<8x128xf32>
    %485 = vector.extract_strided_slice %484 {offsets = [0, 0], sizes = [8, 32], strides = [1, 1]} : vector<8x128xf32> to vector<8x32xf32>
    %486 = vector.extract_strided_slice %484 {offsets = [0, 32], sizes = [8, 32], strides = [1, 1]} : vector<8x128xf32> to vector<8x32xf32>
    %487 = vector.extract_strided_slice %484 {offsets = [0, 64], sizes = [8, 32], strides = [1, 1]} : vector<8x128xf32> to vector<8x32xf32>
    %488 = vector.extract_strided_slice %484 {offsets = [0, 96], sizes = [8, 32], strides = [1, 1]} : vector<8x128xf32> to vector<8x32xf32>
    %489 = arith.addf %486, %405 : vector<8x32xf32>
    %490 = arith.maximumf %489, %485 : vector<8x32xf32>
    %491 = arith.subf %485, %490 : vector<8x32xf32>
    %492 = math.exp %491 : vector<8x32xf32>
    %493 = arith.subf %486, %490 : vector<8x32xf32>
    %494 = arith.addf %493, %405 : vector<8x32xf32>
    %495 = math.exp %494 : vector<8x32xf32>
    %496 = math.tanh %487 : vector<8x32xf32>
    %497 = arith.negf %488 : vector<8x32xf32>
    %498 = math.exp %497 : vector<8x32xf32>
    %cst_108 = arith.constant 1.000000e+00 : f32
    %499 = vector.broadcast %cst_108 : f32 to vector<8x32xf32>
    %500 = arith.addf %499, %498 : vector<8x32xf32>
    %501 = arith.divf %499, %500 : vector<8x32xf32>
    %502 = arith.mulf %495, %419 : vector<8x32xf32>
    %503 = arith.mulf %492, %496 : vector<8x32xf32>
    %504 = arith.addf %502, %503 : vector<8x32xf32>
    %505 = arith.mulf %495, %421 : vector<8x32xf32>
    %506 = arith.addf %505, %492 : vector<8x32xf32>
    %507 = tpu.reciprocal %506 {approx = true} : vector<8x32xf32> -> vector<8x32xf32>
    %508 = arith.mulf %506, %507 : vector<8x32xf32>
    %cst_109 = arith.constant 2.000000e+00 : f32
    %509 = vector.broadcast %cst_109 : f32 to vector<8x32xf32>
    %510 = arith.subf %509, %508 : vector<8x32xf32>
    %511 = arith.mulf %507, %510 : vector<8x32xf32>
    %512 = arith.mulf %504, %511 : vector<8x32xf32>
    %513 = arith.mulf %501, %512 : vector<8x32xf32>
    %cst_110 = arith.constant dense<0.000000e+00> : vector<8x32xf32>
    %514 = tpu.matmul %513, %12, %cst_110 {dimension_numbers = #tpu.dot_dimension_numbers<[1], [0], [0], [1], [0, 0, 1, 1], [], []>} : vector<8x32xf32>, vector<32x32xf32>, vector<8x32xf32> -> vector<8x32xf32>
    %515 = arith.subf %513, %514 : vector<8x32xf32>
    %516 = arith.mulf %515, %515 : vector<8x32xf32>
    %cst_111 = arith.constant dense<0.000000e+00> : vector<8x32xf32>
    %517 = tpu.matmul %516, %12, %cst_111 {dimension_numbers = #tpu.dot_dimension_numbers<[1], [0], [0], [1], [0, 0, 1, 1], [], []>} : vector<8x32xf32>, vector<32x32xf32>, vector<8x32xf32> -> vector<8x32xf32>
    %cst_112 = arith.constant 9.99999974E-6 : f32
    %518 = vector.broadcast %cst_112 : f32 to vector<8x32xf32>
    %519 = arith.addf %517, %518 : vector<8x32xf32>
    %520 = math.rsqrt %519 : vector<8x32xf32>
    %521 = arith.mulf %515, %520 : vector<8x32xf32>
    %522 = vector.broadcast %3 : vector<1x32xf32> to vector<8x32xf32>
    %523 = arith.mulf %521, %522 : vector<8x32xf32>
    %524 = vector.broadcast %4 : vector<1x32xf32> to vector<8x32xf32>
    %525 = arith.addf %523, %524 : vector<8x32xf32>
    %cst_113 = arith.constant dense<0.000000e+00> : vector<8x128xf32>
    %526 = tpu.matmul %525, %10, %cst_113 {dimension_numbers = #tpu.dot_dimension_numbers<[1], [0], [0], [1], [0, 0, 1, 1], [], []>} : vector<8x32xf32>, vector<32x128xf32>, vector<8x128xf32> -> vector<8x128xf32>
    %527 = vector.broadcast %7 : vector<1x128xf32> to vector<8x128xf32>
    %528 = arith.addf %526, %527 : vector<8x128xf32>
    %529 = vector.extract_strided_slice %528 {offsets = [0, 0], sizes = [8, 64], strides = [1, 1]} : vector<8x128xf32> to vector<8x64xf32>
    %530 = vector.extract_strided_slice %528 {offsets = [0, 64], sizes = [8, 64], strides = [1, 1]} : vector<8x128xf32> to vector<8x64xf32>
    %cst_114 = arith.constant 5.000000e-01 : f32
    %531 = vector.broadcast %cst_114 : f32 to vector<8x64xf32>
    %532 = arith.mulf %531, %530 : vector<8x64xf32>
    %cst_115 = arith.constant 0.707106769 : f32
    %533 = vector.broadcast %cst_115 : f32 to vector<8x64xf32>
    %534 = arith.mulf %530, %533 : vector<8x64xf32>
    %535 = math.erf %534 : vector<8x64xf32>
    %cst_116 = arith.constant 1.000000e+00 : f32
    %536 = vector.broadcast %cst_116 : f32 to vector<8x64xf32>
    %537 = arith.addf %536, %535 : vector<8x64xf32>
    %538 = arith.mulf %532, %537 : vector<8x64xf32>
    %539 = arith.addf %529, %538 : vector<8x64xf32>
    %cst_117 = arith.constant dense<0.000000e+00> : vector<8x32xf32>
    %540 = tpu.matmul %539, %14, %cst_117 {dimension_numbers = #tpu.dot_dimension_numbers<[1], [0], [0], [1], [0, 0, 1, 1], [], []>} : vector<8x64xf32>, vector<64x32xf32>, vector<8x32xf32> -> vector<8x32xf32>
    %541 = vector.broadcast %5 : vector<1x32xf32> to vector<8x32xf32>
    %542 = arith.addf %540, %541 : vector<8x32xf32>
    %543 = arith.addf %542, %459 : vector<8x32xf32>
    %544 = vector.extract_strided_slice %373 {offsets = [0, 64], sizes = [8, 32], strides = [1, 1]} : vector<8x128xf32> to vector<8x32xf32>
    %cst_118 = arith.constant dense<0.000000e+00> : vector<8xf32>
    %545 = vector.multi_reduction <add>, %544, %cst_118 [1] : vector<8x32xf32> to vector<8xf32>
    %546 = vector.shape_cast %545 : vector<8xf32> to vector<8x1xf32>
    %cst_119 = arith.constant 3.200000e+01 : f32
    %547 = vector.broadcast %cst_119 : f32 to vector<8x1xf32>
    %548 = arith.divf %546, %547 : vector<8x1xf32>
    %549 = vector.broadcast %548 : vector<8x1xf32> to vector<8x32xf32>
    %550 = arith.subf %544, %549 : vector<8x32xf32>
    %551 = arith.mulf %550, %550 : vector<8x32xf32>
    %cst_120 = arith.constant dense<0.000000e+00> : vector<8xf32>
    %552 = vector.multi_reduction <add>, %551, %cst_120 [1] : vector<8x32xf32> to vector<8xf32>
    %553 = vector.shape_cast %552 : vector<8xf32> to vector<8x1xf32>
    %cst_121 = arith.constant 3.200000e+01 : f32
    %554 = vector.broadcast %cst_121 : f32 to vector<8x1xf32>
    %555 = arith.divf %553, %554 : vector<8x1xf32>
    %cst_122 = arith.constant 9.99999974E-6 : f32
    %556 = vector.broadcast %cst_122 : f32 to vector<8x1xf32>
    %557 = arith.addf %555, %556 : vector<8x1xf32>
    %558 = math.rsqrt %557 : vector<8x1xf32>
    %559 = vector.broadcast %558 : vector<8x1xf32> to vector<8x32xf32>
    %560 = arith.mulf %550, %559 : vector<8x32xf32>
    %561 = vector.broadcast %1 : vector<1x32xf32> to vector<8x32xf32>
    %562 = arith.mulf %560, %561 : vector<8x32xf32>
    %563 = vector.broadcast %2 : vector<1x32xf32> to vector<8x32xf32>
    %564 = arith.addf %562, %563 : vector<8x32xf32>
    %cst_123 = arith.constant dense<0.000000e+00> : vector<8x128xf32>
    %565 = tpu.matmul %564, %8, %cst_123 {dimension_numbers = #tpu.dot_dimension_numbers<[1], [0], [0], [1], [0, 0, 1, 1], [], []>} : vector<8x32xf32>, vector<32x128xf32>, vector<8x128xf32> -> vector<8x128xf32>
    %cst_124 = arith.constant dense<0.000000e+00> : vector<8x128xf32>
    %566 = tpu.matmul %513, %9, %cst_124 {dimension_numbers = #tpu.dot_dimension_numbers<[1], [0], [0], [1], [0, 0, 1, 1], [], []>} : vector<8x32xf32>, vector<32x128xf32>, vector<8x128xf32> -> vector<8x128xf32>
    %567 = arith.addf %565, %566 : vector<8x128xf32>
    %568 = vector.broadcast %6 : vector<1x128xf32> to vector<8x128xf32>
    %569 = arith.addf %567, %568 : vector<8x128xf32>
    %570 = vector.extract_strided_slice %569 {offsets = [0, 0], sizes = [8, 32], strides = [1, 1]} : vector<8x128xf32> to vector<8x32xf32>
    %571 = vector.extract_strided_slice %569 {offsets = [0, 32], sizes = [8, 32], strides = [1, 1]} : vector<8x128xf32> to vector<8x32xf32>
    %572 = vector.extract_strided_slice %569 {offsets = [0, 64], sizes = [8, 32], strides = [1, 1]} : vector<8x128xf32> to vector<8x32xf32>
    %573 = vector.extract_strided_slice %569 {offsets = [0, 96], sizes = [8, 32], strides = [1, 1]} : vector<8x128xf32> to vector<8x32xf32>
    %574 = arith.addf %571, %490 : vector<8x32xf32>
    %575 = arith.maximumf %574, %570 : vector<8x32xf32>
    %576 = arith.subf %570, %575 : vector<8x32xf32>
    %577 = math.exp %576 : vector<8x32xf32>
    %578 = arith.subf %571, %575 : vector<8x32xf32>
    %579 = arith.addf %578, %490 : vector<8x32xf32>
    %580 = math.exp %579 : vector<8x32xf32>
    %581 = math.tanh %572 : vector<8x32xf32>
    %582 = arith.negf %573 : vector<8x32xf32>
    %583 = math.exp %582 : vector<8x32xf32>
    %cst_125 = arith.constant 1.000000e+00 : f32
    %584 = vector.broadcast %cst_125 : f32 to vector<8x32xf32>
    %585 = arith.addf %584, %583 : vector<8x32xf32>
    %586 = arith.divf %584, %585 : vector<8x32xf32>
    %587 = arith.mulf %580, %504 : vector<8x32xf32>
    %588 = arith.mulf %577, %581 : vector<8x32xf32>
    %589 = arith.addf %587, %588 : vector<8x32xf32>
    %590 = arith.mulf %580, %506 : vector<8x32xf32>
    %591 = arith.addf %590, %577 : vector<8x32xf32>
    %592 = tpu.reciprocal %591 {approx = true} : vector<8x32xf32> -> vector<8x32xf32>
    %593 = arith.mulf %591, %592 : vector<8x32xf32>
    %cst_126 = arith.constant 2.000000e+00 : f32
    %594 = vector.broadcast %cst_126 : f32 to vector<8x32xf32>
    %595 = arith.subf %594, %593 : vector<8x32xf32>
    %596 = arith.mulf %592, %595 : vector<8x32xf32>
    %597 = arith.mulf %589, %596 : vector<8x32xf32>
    %598 = arith.mulf %586, %597 : vector<8x32xf32>
    %cst_127 = arith.constant dense<0.000000e+00> : vector<8x32xf32>
    %599 = tpu.matmul %598, %12, %cst_127 {dimension_numbers = #tpu.dot_dimension_numbers<[1], [0], [0], [1], [0, 0, 1, 1], [], []>} : vector<8x32xf32>, vector<32x32xf32>, vector<8x32xf32> -> vector<8x32xf32>
    %600 = arith.subf %598, %599 : vector<8x32xf32>
    %601 = arith.mulf %600, %600 : vector<8x32xf32>
    %cst_128 = arith.constant dense<0.000000e+00> : vector<8x32xf32>
    %602 = tpu.matmul %601, %12, %cst_128 {dimension_numbers = #tpu.dot_dimension_numbers<[1], [0], [0], [1], [0, 0, 1, 1], [], []>} : vector<8x32xf32>, vector<32x32xf32>, vector<8x32xf32> -> vector<8x32xf32>
    %cst_129 = arith.constant 9.99999974E-6 : f32
    %603 = vector.broadcast %cst_129 : f32 to vector<8x32xf32>
    %604 = arith.addf %602, %603 : vector<8x32xf32>
    %605 = math.rsqrt %604 : vector<8x32xf32>
    %606 = arith.mulf %600, %605 : vector<8x32xf32>
    %607 = vector.broadcast %3 : vector<1x32xf32> to vector<8x32xf32>
    %608 = arith.mulf %606, %607 : vector<8x32xf32>
    %609 = vector.broadcast %4 : vector<1x32xf32> to vector<8x32xf32>
    %610 = arith.addf %608, %609 : vector<8x32xf32>
    %cst_130 = arith.constant dense<0.000000e+00> : vector<8x128xf32>
    %611 = tpu.matmul %610, %10, %cst_130 {dimension_numbers = #tpu.dot_dimension_numbers<[1], [0], [0], [1], [0, 0, 1, 1], [], []>} : vector<8x32xf32>, vector<32x128xf32>, vector<8x128xf32> -> vector<8x128xf32>
    %612 = vector.broadcast %7 : vector<1x128xf32> to vector<8x128xf32>
    %613 = arith.addf %611, %612 : vector<8x128xf32>
    %614 = vector.extract_strided_slice %613 {offsets = [0, 0], sizes = [8, 64], strides = [1, 1]} : vector<8x128xf32> to vector<8x64xf32>
    %615 = vector.extract_strided_slice %613 {offsets = [0, 64], sizes = [8, 64], strides = [1, 1]} : vector<8x128xf32> to vector<8x64xf32>
    %cst_131 = arith.constant 5.000000e-01 : f32
    %616 = vector.broadcast %cst_131 : f32 to vector<8x64xf32>
    %617 = arith.mulf %616, %615 : vector<8x64xf32>
    %cst_132 = arith.constant 0.707106769 : f32
    %618 = vector.broadcast %cst_132 : f32 to vector<8x64xf32>
    %619 = arith.mulf %615, %618 : vector<8x64xf32>
    %620 = math.erf %619 : vector<8x64xf32>
    %cst_133 = arith.constant 1.000000e+00 : f32
    %621 = vector.broadcast %cst_133 : f32 to vector<8x64xf32>
    %622 = arith.addf %621, %620 : vector<8x64xf32>
    %623 = arith.mulf %617, %622 : vector<8x64xf32>
    %624 = arith.addf %614, %623 : vector<8x64xf32>
    %cst_134 = arith.constant dense<0.000000e+00> : vector<8x32xf32>
    %625 = tpu.matmul %624, %14, %cst_134 {dimension_numbers = #tpu.dot_dimension_numbers<[1], [0], [0], [1], [0, 0, 1, 1], [], []>} : vector<8x64xf32>, vector<64x32xf32>, vector<8x32xf32> -> vector<8x32xf32>
    %626 = vector.broadcast %5 : vector<1x32xf32> to vector<8x32xf32>
    %627 = arith.addf %625, %626 : vector<8x32xf32>
    %628 = arith.addf %627, %544 : vector<8x32xf32>
    %629 = vector.extract_strided_slice %373 {offsets = [0, 96], sizes = [8, 32], strides = [1, 1]} : vector<8x128xf32> to vector<8x32xf32>
    %cst_135 = arith.constant dense<0.000000e+00> : vector<8xf32>
    %630 = vector.multi_reduction <add>, %629, %cst_135 [1] : vector<8x32xf32> to vector<8xf32>
    %631 = vector.shape_cast %630 : vector<8xf32> to vector<8x1xf32>
    %cst_136 = arith.constant 3.200000e+01 : f32
    %632 = vector.broadcast %cst_136 : f32 to vector<8x1xf32>
    %633 = arith.divf %631, %632 : vector<8x1xf32>
    %634 = vector.broadcast %633 : vector<8x1xf32> to vector<8x32xf32>
    %635 = arith.subf %629, %634 : vector<8x32xf32>
    %636 = arith.mulf %635, %635 : vector<8x32xf32>
    %cst_137 = arith.constant dense<0.000000e+00> : vector<8xf32>
    %637 = vector.multi_reduction <add>, %636, %cst_137 [1] : vector<8x32xf32> to vector<8xf32>
    %638 = vector.shape_cast %637 : vector<8xf32> to vector<8x1xf32>
    %cst_138 = arith.constant 3.200000e+01 : f32
    %639 = vector.broadcast %cst_138 : f32 to vector<8x1xf32>
    %640 = arith.divf %638, %639 : vector<8x1xf32>
    %cst_139 = arith.constant 9.99999974E-6 : f32
    %641 = vector.broadcast %cst_139 : f32 to vector<8x1xf32>
    %642 = arith.addf %640, %641 : vector<8x1xf32>
    %643 = math.rsqrt %642 : vector<8x1xf32>
    %644 = vector.broadcast %643 : vector<8x1xf32> to vector<8x32xf32>
    %645 = arith.mulf %635, %644 : vector<8x32xf32>
    %646 = vector.broadcast %1 : vector<1x32xf32> to vector<8x32xf32>
    %647 = arith.mulf %645, %646 : vector<8x32xf32>
    %648 = vector.broadcast %2 : vector<1x32xf32> to vector<8x32xf32>
    %649 = arith.addf %647, %648 : vector<8x32xf32>
    %cst_140 = arith.constant dense<0.000000e+00> : vector<8x128xf32>
    %650 = tpu.matmul %649, %8, %cst_140 {dimension_numbers = #tpu.dot_dimension_numbers<[1], [0], [0], [1], [0, 0, 1, 1], [], []>} : vector<8x32xf32>, vector<32x128xf32>, vector<8x128xf32> -> vector<8x128xf32>
    %cst_141 = arith.constant dense<0.000000e+00> : vector<8x128xf32>
    %651 = tpu.matmul %598, %9, %cst_141 {dimension_numbers = #tpu.dot_dimension_numbers<[1], [0], [0], [1], [0, 0, 1, 1], [], []>} : vector<8x32xf32>, vector<32x128xf32>, vector<8x128xf32> -> vector<8x128xf32>
    %652 = arith.addf %650, %651 : vector<8x128xf32>
    %653 = vector.broadcast %6 : vector<1x128xf32> to vector<8x128xf32>
    %654 = arith.addf %652, %653 : vector<8x128xf32>
    %655 = vector.extract_strided_slice %654 {offsets = [0, 0], sizes = [8, 32], strides = [1, 1]} : vector<8x128xf32> to vector<8x32xf32>
    %656 = vector.extract_strided_slice %654 {offsets = [0, 32], sizes = [8, 32], strides = [1, 1]} : vector<8x128xf32> to vector<8x32xf32>
    %657 = vector.extract_strided_slice %654 {offsets = [0, 64], sizes = [8, 32], strides = [1, 1]} : vector<8x128xf32> to vector<8x32xf32>
    %658 = vector.extract_strided_slice %654 {offsets = [0, 96], sizes = [8, 32], strides = [1, 1]} : vector<8x128xf32> to vector<8x32xf32>
    %659 = arith.addf %656, %575 : vector<8x32xf32>
    %660 = arith.maximumf %659, %655 : vector<8x32xf32>
    %661 = arith.subf %655, %660 : vector<8x32xf32>
    %662 = math.exp %661 : vector<8x32xf32>
    %663 = arith.subf %656, %660 : vector<8x32xf32>
    %664 = arith.addf %663, %575 : vector<8x32xf32>
    %665 = math.exp %664 : vector<8x32xf32>
    %666 = math.tanh %657 : vector<8x32xf32>
    %667 = arith.negf %658 : vector<8x32xf32>
    %668 = math.exp %667 : vector<8x32xf32>
    %cst_142 = arith.constant 1.000000e+00 : f32
    %669 = vector.broadcast %cst_142 : f32 to vector<8x32xf32>
    %670 = arith.addf %669, %668 : vector<8x32xf32>
    %671 = arith.divf %669, %670 : vector<8x32xf32>
    %672 = arith.mulf %665, %589 : vector<8x32xf32>
    %673 = arith.mulf %662, %666 : vector<8x32xf32>
    %674 = arith.addf %672, %673 : vector<8x32xf32>
    %675 = arith.mulf %665, %591 : vector<8x32xf32>
    %676 = arith.addf %675, %662 : vector<8x32xf32>
    %677 = tpu.reciprocal %676 {approx = true} : vector<8x32xf32> -> vector<8x32xf32>
    %678 = arith.mulf %676, %677 : vector<8x32xf32>
    %cst_143 = arith.constant 2.000000e+00 : f32
    %679 = vector.broadcast %cst_143 : f32 to vector<8x32xf32>
    %680 = arith.subf %679, %678 : vector<8x32xf32>
    %681 = arith.mulf %677, %680 : vector<8x32xf32>
    %682 = arith.mulf %674, %681 : vector<8x32xf32>
    %683 = arith.mulf %671, %682 : vector<8x32xf32>
    %cst_144 = arith.constant dense<0.000000e+00> : vector<8x32xf32>
    %684 = tpu.matmul %683, %12, %cst_144 {dimension_numbers = #tpu.dot_dimension_numbers<[1], [0], [0], [1], [0, 0, 1, 1], [], []>} : vector<8x32xf32>, vector<32x32xf32>, vector<8x32xf32> -> vector<8x32xf32>
    %685 = arith.subf %683, %684 : vector<8x32xf32>
    %686 = arith.mulf %685, %685 : vector<8x32xf32>
    %cst_145 = arith.constant dense<0.000000e+00> : vector<8x32xf32>
    %687 = tpu.matmul %686, %12, %cst_145 {dimension_numbers = #tpu.dot_dimension_numbers<[1], [0], [0], [1], [0, 0, 1, 1], [], []>} : vector<8x32xf32>, vector<32x32xf32>, vector<8x32xf32> -> vector<8x32xf32>
    %cst_146 = arith.constant 9.99999974E-6 : f32
    %688 = vector.broadcast %cst_146 : f32 to vector<8x32xf32>
    %689 = arith.addf %687, %688 : vector<8x32xf32>
    %690 = math.rsqrt %689 : vector<8x32xf32>
    %691 = arith.mulf %685, %690 : vector<8x32xf32>
    %692 = vector.broadcast %3 : vector<1x32xf32> to vector<8x32xf32>
    %693 = arith.mulf %691, %692 : vector<8x32xf32>
    %694 = vector.broadcast %4 : vector<1x32xf32> to vector<8x32xf32>
    %695 = arith.addf %693, %694 : vector<8x32xf32>
    %cst_147 = arith.constant dense<0.000000e+00> : vector<8x128xf32>
    %696 = tpu.matmul %695, %10, %cst_147 {dimension_numbers = #tpu.dot_dimension_numbers<[1], [0], [0], [1], [0, 0, 1, 1], [], []>} : vector<8x32xf32>, vector<32x128xf32>, vector<8x128xf32> -> vector<8x128xf32>
    %697 = vector.broadcast %7 : vector<1x128xf32> to vector<8x128xf32>
    %698 = arith.addf %696, %697 : vector<8x128xf32>
    %699 = vector.extract_strided_slice %698 {offsets = [0, 0], sizes = [8, 64], strides = [1, 1]} : vector<8x128xf32> to vector<8x64xf32>
    %700 = vector.extract_strided_slice %698 {offsets = [0, 64], sizes = [8, 64], strides = [1, 1]} : vector<8x128xf32> to vector<8x64xf32>
    %cst_148 = arith.constant 5.000000e-01 : f32
    %701 = vector.broadcast %cst_148 : f32 to vector<8x64xf32>
    %702 = arith.mulf %701, %700 : vector<8x64xf32>
    %cst_149 = arith.constant 0.707106769 : f32
    %703 = vector.broadcast %cst_149 : f32 to vector<8x64xf32>
    %704 = arith.mulf %700, %703 : vector<8x64xf32>
    %705 = math.erf %704 : vector<8x64xf32>
    %cst_150 = arith.constant 1.000000e+00 : f32
    %706 = vector.broadcast %cst_150 : f32 to vector<8x64xf32>
    %707 = arith.addf %706, %705 : vector<8x64xf32>
    %708 = arith.mulf %702, %707 : vector<8x64xf32>
    %709 = arith.addf %699, %708 : vector<8x64xf32>
    %cst_151 = arith.constant dense<0.000000e+00> : vector<8x32xf32>
    %710 = tpu.matmul %709, %14, %cst_151 {dimension_numbers = #tpu.dot_dimension_numbers<[1], [0], [0], [1], [0, 0, 1, 1], [], []>} : vector<8x64xf32>, vector<64x32xf32>, vector<8x32xf32> -> vector<8x32xf32>
    %711 = vector.broadcast %5 : vector<1x32xf32> to vector<8x32xf32>
    %712 = arith.addf %710, %711 : vector<8x32xf32>
    %713 = arith.addf %712, %629 : vector<8x32xf32>
    %714 = tpu.concatenate %458, %543, %628, %713 in 1 : vector<8x32xf32>, vector<8x32xf32>, vector<8x32xf32>, vector<8x32xf32> -> vector<8x128xf32>
    %715 = arith.index_cast %c1_i32 : i32 to index
    %c0_152 = arith.constant 0 : index
    %c0_153 = arith.constant 0 : index
    %716 = vector.load %arg6[%715, %c0_152, %c0_153] : memref<2x8x128xf32, #tpu.memory_space<vmem>>, vector<1x8x128xf32>
    %717 = vector.shape_cast %716 : vector<1x8x128xf32> to vector<8x128xf32>
    %718 = vector.shape_cast %714 : vector<8x128xf32> to vector<1x8x128xf32>
    tpu.vector_store %arg6[%715, %c0_152, %c0_153], %718 {strides = array<i32>} : memref<2x8x128xf32, #tpu.memory_space<vmem>>, vector<1x8x128xf32>,
    %c2_i32 = arith.constant 2 : i32
    %719 = tpu.concatenate %674, %676, %683, %660 in 1 : vector<8x32xf32>, vector<8x32xf32>, vector<8x32xf32>, vector<8x32xf32> -> vector<8x128xf32>
    %c0_154 = arith.constant 0 : index
    %c0_155 = arith.constant 0 : index
    %720 = vector.load %arg8[%c0_154, %c0_155] : memref<8x128xf32, #tpu.memory_space<vmem>>, vector<8x128xf32>
    tpu.vector_store %arg8[%c0_154, %c0_155], %719 {strides = array<i32>} : memref<8x128xf32, #tpu.memory_space<vmem>>, vector<8x128xf32>,
    %c1_i32_156 = arith.constant 1 : i32
    %721 = arith.cmpi eq, %arg1, %c1_i32_156 : i32
    %722 = arith.extui %721 : i1 to i32
    %c0_i32_157 = arith.constant 0 : i32
    %723 = arith.cmpi ne, %722, %c0_i32_157 : i32
    scf.if %723 {
      %c0_158 = arith.constant 0 : index
      %c0_159 = arith.constant 0 : index
      %724 = vector.load %arg8[%c0_158, %c0_159] : memref<8x128xf32, #tpu.memory_space<vmem>>, vector<8x128xf32>
      %c0_160 = arith.constant 0 : index
      %c0_161 = arith.constant 0 : index
      %725 = vector.load %arg7[%c0_160, %c0_161] : memref<8x128xf32, #tpu.memory_space<vmem>>, vector<8x128xf32>
      tpu.vector_store %arg7[%c0_160, %c0_161], %724 {strides = array<i32>} : memref<8x128xf32, #tpu.memory_space<vmem>>, vector<8x128xf32>,
    } else {
    }
    return
  }
  func.func @transform_0(%arg0: i32, %arg1: i32) -> (i32, i32, i32) {
    %c0_i32 = arith.constant 0 : i32
    %c0_i32_0 = arith.constant 0 : i32
    return %arg1, %arg0, %c0_i32 : i32, i32, i32
  }
  func.func @transform_1(%arg0: i32, %arg1: i32) -> (i32, i32) {
    %c0_i32 = arith.constant 0 : i32
    %c0_i32_0 = arith.constant 0 : i32
    return %arg0, %c0_i32 : i32, i32
  }
  func.func @transform_2(%arg0: i32, %arg1: i32) -> (i32, i32) {
    %c0_i32 = arith.constant 0 : i32
    %c0_i32_0 = arith.constant 0 : i32
    %c0_i32_1 = arith.constant 0 : i32
    return %c0_i32, %c0_i32_0 : i32, i32
  }
  func.func @transform_3(%arg0: i32, %arg1: i32) -> (i32, i32) {
    %c0_i32 = arith.constant 0 : i32
    %c0_i32_0 = arith.constant 0 : i32
    %c0_i32_1 = arith.constant 0 : i32
    return %c0_i32, %c0_i32_0 : i32, i32
  }
  func.func @transform_4(%arg0: i32, %arg1: i32) -> (i32, i32, i32) {
    %c0_i32 = arith.constant 0 : i32
    %c0_i32_0 = arith.constant 0 : i32
    return %arg1, %arg0, %c0_i32 : i32, i32, i32
  }
  func.func @transform_5(%arg0: i32, %arg1: i32) -> (i32, i32) {
    %c0_i32 = arith.constant 0 : i32
    %c0_i32_0 = arith.constant 0 : i32
    return %arg0, %c0_i32 : i32, i32
  }
}

</mosaic_0001>

<llo_original>
// kernel: tpu_custom_call.1
$region0: #{tpu_custom_call.1}
  #allocation0 [shape = 'u32[]', space=smem, size = 0x4, offset = 0x4, fixed_abs, tag = 'smem constant byte address 0x4 - core index']
  #allocation1 [shape = 'u32[144,128]{1,0:T(1,128)}', space=vmem, size = 0x12000, scoped, tag = 'internal scratch']
  #allocation2 [shape = 'f32[8,128]{1,0:T(8,128)}', space=vmem, size = 0x1000, scoped, tag = 'scratch operand']
  %s0 = inlined_call_operand.hbm [shape: f32[4,16,128], index: 0, kind: input, shape index: {}]
  %s1 = inlined_call_operand.hbm [shape: f32[16,128], index: 1, kind: input, shape index: {}]
  %s2 = inlined_call_operand.hbm [shape: f32[8,128], index: 2, kind: input, shape index: {}]
  %s3 = inlined_call_operand.hbm [shape: f32[192,128], index: 3, kind: input, shape index: {}]
  %s4 = inlined_call_operand.hbm [shape: f32[4,16,128], index: 4, kind: output, shape index: {0}]
  %s5 = inlined_call_operand.hbm [shape: f32[16,128], index: 5, kind: output, shape index: {1}]
  %6 = xla_tuple %s4, %s5
  %s7 = sld [smem:[#allocation0]]
  $region81: #{tpu_custom_call.1} parent=0
    _
  %s9 = ssub.s32 1, %s7
  %s10 = scalar_select 0, %s9, %s7
  $region1: #{tpu_custom_call.1} parent=0
    #allocation3 [shape = 'u8[16384]{0}', space=vmem, size = 0x4000, scoped, tag = 'input window, operand 0']
    #allocation4 [shape = 's32[2]{0}', space=sflag, size = 0x8, scoped, tag = 'scoped memory for tpu_custom_call.1']
    #allocation5 [shape = 's32[2]{0}', space=sflag, size = 0x8, scoped, tag = 'scoped memory for tpu_custom_call.1']
    #allocation6 [shape = 'u8[8192]{0}', space=vmem, size = 0x2000, scoped, tag = 'input window, operand 1']
    #allocation7 [shape = 's32[2]{0}', space=sflag, size = 0x8, scoped, tag = 'scoped memory for tpu_custom_call.1']
    #allocation8 [shape = 'u8[4096]{0}', space=vmem, size = 0x1000, scoped, tag = 'input window, operand 2, single buffered']
    #allocation9 [shape = 'u8[98304]{0}', space=vmem, size = 0x18000, scoped, tag = 'input window, operand 3, single buffered']
    #allocation10 [shape = 's32[1]{0}', space=sflag, size = 0x4, scoped, tag = 'scoped memory for tpu_custom_call.1']
    #allocation11 [shape = 'u8[16384]{0}', space=vmem, size = 0x4000, scoped, tag = 'output window, operand 0']
    #allocation12 [shape = 'u8[8192]{0}', space=vmem, size = 0x2000, scoped, tag = 'output window, operand 1']
    #allocation13 [shape = 's32[2]{0}', space=sflag, size = 0x8, scoped, tag = 'scoped memory for tpu_custom_call.1']
    %11 = vsyncpa [#allocation4], 0
    %s12 = scalar_lea.sflag [#allocation4], 1
    %13 = vsyncpa %s12, 0
    %14 = vsyncpa [#allocation7], 0
    %s15 = scalar_lea.sflag [#allocation7], 1
    %16 = vsyncpa %s15, 0
    %17 = vsyncpa [#allocation10], 0
    %18 = vsyncpa [#allocation5], 0
    %s19 = scalar_lea.sflag [#allocation5], 1
    %20 = vsyncpa %s19, 0
    %21 = vsyncpa [#allocation13], 0
    %s22 = scalar_lea.sflag [#allocation13], 1
    %23 = vsyncpa %s22, 0
    loop: start=0, step=1, limit=6
    $region2: #{tpu_custom_call.1} parent=1 // loop_pre_header
      _
    $region3: #{tpu_custom_call.1} parent=1 // loop_header
      %s25 = sphi 0, %s29
      %p26 = scmp.ge.s32.totalorder %s25, 6
      %s32 = sphi 0, %s44
      %s33 = sphi 0, %s40
      %s34 = sphi 0, %s32
      %s35 = sphi 0, %s33
      %s36 = sphi 0, %s34
      %s37 = sphi 0, %s35
      %s49 = sphi 0, %s51
      %s52 = sphi 0, %s49
      %s53 = sphi 0, %s52
      %s69 = sphi 0, %s53
      %s75 = sphi 0, %s77
      %s78 = sphi 0, %s75
      %s79 = sphi 0, %s78
      %s95 = sphi 0, %s79
      %s99 = sphi 0, %s99
      %s101 = sphi 0, %s99
      %s102 = sphi 0, %s101
      %s116 = sphi 0, %s102
      %s120 = sphi 0, %s120
      %s122 = sphi 0, %s120
      %s123 = sphi 0, %s122
      %s137 = sphi 0, %s123
      %s145 = sphi 0, %s147
      %s148 = sphi 0, %s145
      %s149 = sphi 0, %s148
      %s165 = sphi 0, %s149
      %s171 = sphi 0, %s173
      %s174 = sphi 0, %s171
      %s175 = sphi 0, %s174
      %s191 = sphi 0, %s175
    $region4: #{tpu_custom_call.1} parent=1 // loop_header_branch
      %28 = sbr.rel (%p26) target = $region8
    $region5: #{tpu_custom_call.1} parent=1 // loop_body
      %s30 = ssub.s32 %s25, 1
      %s31 = ssub.s32 %s25, 2
      %s38 = sadd.s32 1, %s33
      %p39 = scmp.ge.s32.totalorder %s38, 2
      %s40 = scalar_select %p39, 0, %s38
      %s41 = sadd.s32 1, %s32
      %s42 = scalar_select %p39, %s41, %s32
      %p43 = scmp.ge.s32.totalorder %s42, 2
      %s44 = scalar_select %p43, 0, %s42
      %s45 = ssub.s32 %s33, %s40
      %s46 = ssub.s32 %s32, %s44
      %s47 = sor.u32 %s45, %s46
      %p48 = scmp.eq.s32.totalorder %s47, 0
      %s50 = sadd.s32 %s49, 1
      %s51 = scalar_select %p48, %s49, %s50
      %p54 = pneg %p48
      %p55 = scmp.eq.s32.totalorder %s25, 3
      %p56 = por %p54, %p55
      %p57 = scmp.ne.s32.totalorder %s49, %s52
      %p58 = scmp.eq.s32.totalorder %s25, 0
      %p59 = por %p57, %p58
      %p60 = scmp.ne.s32.totalorder %s49, %s52
      %p61 = scmp.eq.s32.totalorder %s30, 3
      %p62 = por %p60, %p61
      %p63 = scmp.ne.s32.totalorder %s52, %s53
      %p64 = scmp.eq.s32.totalorder %s30, 0
      %p65 = por %p63, %p64
      %p66 = scmp.ne.s32.totalorder %s52, %s53
      %p67 = scmp.eq.s32.totalorder %s31, 3
      %p68 = por %p66, %p67
      %p70 = scmp.ne.s32.totalorder %s53, %s69
      %p71 = scmp.eq.s32.totalorder %s31, 0
      %p72 = por %p70, %p71
      %s73 = ssub.s32 %s32, %s44
      %p74 = scmp.eq.s32.totalorder %s73, 0
      %s76 = sadd.s32 %s75, 1
      %s77 = scalar_select %p74, %s75, %s76
      %p80 = pneg %p74
      %p81 = scmp.eq.s32.totalorder %s25, 3
      %p82 = por %p80, %p81
      %p83 = scmp.ne.s32.totalorder %s75, %s78
      %p84 = scmp.eq.s32.totalorder %s25, 0
      %p85 = por %p83, %p84
      %p86 = scmp.ne.s32.totalorder %s75, %s78
      %p87 = scmp.eq.s32.totalorder %s30, 3
      %p88 = por %p86, %p87
      %p89 = scmp.ne.s32.totalorder %s78, %s79
      %p90 = scmp.eq.s32.totalorder %s30, 0
      %p91 = por %p89, %p90
      %p92 = scmp.ne.s32.totalorder %s78, %s79
      %p93 = scmp.eq.s32.totalorder %s31, 3
      %p94 = por %p92, %p93
      %p96 = scmp.ne.s32.totalorder %s79, %s95
      %p97 = scmp.eq.s32.totalorder %s31, 0
      %p98 = por %p96, %p97
      %s100 = sadd.s32 %s99, 1
      %p103 = scmp.eq.s32.totalorder %s25, 3
      %p104 = scmp.ne.s32.totalorder %s99, %s101
      %p105 = scmp.eq.s32.totalorder %s25, 0
      %p106 = por %p104, %p105
      %p107 = scmp.ne.s32.totalorder %s99, %s101
      %p108 = scmp.eq.s32.totalorder %s30, 3
      %p109 = por %p107, %p108
      %p110 = scmp.ne.s32.totalorder %s101, %s102
      %p111 = scmp.eq.s32.totalorder %s30, 0
      %p112 = por %p110, %p111
      %p113 = scmp.ne.s32.totalorder %s101, %s102
      %p114 = scmp.eq.s32.totalorder %s31, 3
      %p115 = por %p113, %p114
      %p117 = scmp.ne.s32.totalorder %s102, %s116
      %p118 = scmp.eq.s32.totalorder %s31, 0
      %p119 = por %p117, %p118
      %s121 = sadd.s32 %s120, 1
      %p124 = scmp.eq.s32.totalorder %s25, 3
      %p125 = scmp.ne.s32.totalorder %s120, %s122
      %p126 = scmp.eq.s32.totalorder %s25, 0
      %p127 = por %p125, %p126
      %p128 = scmp.ne.s32.totalorder %s120, %s122
      %p129 = scmp.eq.s32.totalorder %s30, 3
      %p130 = por %p128, %p129
      %p131 = scmp.ne.s32.totalorder %s122, %s123
      %p132 = scmp.eq.s32.totalorder %s30, 0
      %p133 = por %p131, %p132
      %p134 = scmp.ne.s32.totalorder %s122, %s123
      %p135 = scmp.eq.s32.totalorder %s31, 3
      %p136 = por %p134, %p135
      %p138 = scmp.ne.s32.totalorder %s123, %s137
      %p139 = scmp.eq.s32.totalorder %s31, 0
      %p140 = por %p138, %p139
      %s141 = ssub.s32 %s33, %s40
      %s142 = ssub.s32 %s32, %s44
      %s143 = sor.u32 %s141, %s142
      %p144 = scmp.eq.s32.totalorder %s143, 0
      %s146 = sadd.s32 %s145, 1
      %s147 = scalar_select %p144, %s145, %s146
      %p150 = pneg %p144
      %p151 = scmp.eq.s32.totalorder %s25, 3
      %p152 = por %p150, %p151
      %p153 = scmp.ne.s32.totalorder %s145, %s148
      %p154 = scmp.eq.s32.totalorder %s25, 0
      %p155 = por %p153, %p154
      %p156 = scmp.ne.s32.totalorder %s145, %s148
      %p157 = scmp.eq.s32.totalorder %s30, 3
      %p158 = por %p156, %p157
      %p159 = scmp.ne.s32.totalorder %s148, %s149
      %p160 = scmp.eq.s32.totalorder %s30, 0
      %p161 = por %p159, %p160
      %p162 = scmp.ne.s32.totalorder %s148, %s149
      %p163 = scmp.eq.s32.totalorder %s31, 3
      %p164 = por %p162, %p163
      %p166 = scmp.ne.s32.totalorder %s149, %s165
      %p167 = scmp.eq.s32.totalorder %s31, 0
      %p168 = por %p166, %p167
      %s169 = ssub.s32 %s32, %s44
      %p170 = scmp.eq.s32.totalorder %s169, 0
      %s172 = sadd.s32 %s171, 1
      %s173 = scalar_select %p170, %s171, %s172
      %p176 = pneg %p170
      %p177 = scmp.eq.s32.totalorder %s25, 3
      %p178 = por %p176, %p177
      %p179 = scmp.ne.s32.totalorder %s171, %s174
      %p180 = scmp.eq.s32.totalorder %s25, 0
      %p181 = por %p179, %p180
      %p182 = scmp.ne.s32.totalorder %s171, %s174
      %p183 = scmp.eq.s32.totalorder %s30, 3
      %p184 = por %p182, %p183
      %p185 = scmp.ne.s32.totalorder %s174, %s175
      %p186 = scmp.eq.s32.totalorder %s30, 0
      %p187 = por %p185, %p186
      %p188 = scmp.ne.s32.totalorder %s174, %s175
      %p189 = scmp.eq.s32.totalorder %s31, 3
      %p190 = por %p188, %p189
      %p192 = scmp.ne.s32.totalorder %s175, %s191
      %p193 = scmp.eq.s32.totalorder %s31, 0
      %p194 = por %p192, %p193
      %p195 = scmp.le.s32.totalorder 1, %s25
      %p196 = scmp.lt.s32.totalorder %s25, 5
      %p197 = pnand %p195, %p196
      %p198 = pneg %p197
      // Predicated region
      $region9: #{tpu_custom_call.1} parent=5 // pred_check
        _
      $region10: #{tpu_custom_call.1} parent=5 // pred_check_branch
        %200 = sbr.rel (%p197) target = $region12
      $region11: #{tpu_custom_call.1} parent=5 // pred_region
        %s201 = ssub.s32 %s25, 1
        // Predicated region
        $region13: #{tpu_custom_call.1} parent=11 // pred_check
          %p202 = pneg %p112
        $region14: #{tpu_custom_call.1} parent=11 // pred_check_branch
          %204 = sbr.rel (%p202) target = $region16
        $region15: #{tpu_custom_call.1} parent=11 // pred_region
          %s206 = ssub.s32 128, 128
          %207 = vsyncadd [#allocation7], %s206
          %s209 = sshll.u32 [#allocation8], 4
          %s210 = int_to_ptr.vmem [resolvable:$true] %s209
          %212 = dma.hbm_to_vmem [thread:$0]  %s2, 128, %s210, [#allocation7]
        $region16: #{tpu_custom_call.1} parent=11 // pred_fallthru
          _
        // Predicated region
        $region17: #{tpu_custom_call.1} parent=11 // pred_check
          %p213 = pneg %p133
        $region18: #{tpu_custom_call.1} parent=11 // pred_check_branch
          %215 = sbr.rel (%p213) target = $region20
        $region19: #{tpu_custom_call.1} parent=11 // pred_region
          %s217 = ssub.s32 3072, 3072
          %218 = vsyncadd [#allocation10], %s217
          %s219 = sshll.u32 [#allocation9], 4
          %s220 = int_to_ptr.vmem [resolvable:$true] %s219
          %225 = dma.hbm_to_vmem [thread:$0]  %s3, 3072, %s220, [#allocation10], 128, 128, 8
        $region20: #{tpu_custom_call.1} parent=11 // pred_fallthru
          _
      $region12: #{tpu_custom_call.1} parent=5 // pred_fallthru
        _
      %p226 = scmp.lt.s32.totalorder %s25, 4
      // Predicated region
      $region21: #{tpu_custom_call.1} parent=5 // pred_check
        %p227 = pneg %p226
      $region22: #{tpu_custom_call.1} parent=5 // pred_check_branch
        %229 = sbr.rel (%p227) target = $region24
      $region23: #{tpu_custom_call.1} parent=5 // pred_region
        // Predicated region
        $region25: #{tpu_custom_call.1} parent=23 // pred_check
          %p230 = pneg %p59
        $region26: #{tpu_custom_call.1} parent=23 // pred_check_branch
          %232 = sbr.rel (%p230) target = $region28
        $region27: #{tpu_custom_call.1} parent=23 // pred_region
          %s233 = sand.u32 %s49, 1
          %s234 = scalar_lea.sflag [#allocation4], %s233
          %s235 = sand.u32 %s49, 1
          %s236 = smul.addr %s235, 16
          %s237 = scalar_lea.vmem [#allocation3], %s236
          %s238 = smul.u32 2, %s33
          %s240 = ssub.s32 256, 256
          %241 = vsyncadd %s234, %s240
          %s242 = smul.addr %s238, 2
          %s243 = sadd.s32 %s32, %s242
          %s244 = smul.addr %s243, 128
          %s245 = scalar_lea.hbm %s0, %s244
          %s246 = sshll.u32 %s237, 4
          %s247 = int_to_ptr.vmem [resolvable:$true] %s246
          %252 = dma.hbm_to_vmem [thread:$0]  %s245, 256, %s247, %s234, 256, 128, 8
        $region28: #{tpu_custom_call.1} parent=23 // pred_fallthru
          _
        // Predicated region
        $region29: #{tpu_custom_call.1} parent=23 // pred_check
          %p253 = pneg %p85
        $region30: #{tpu_custom_call.1} parent=23 // pred_check_branch
          %255 = sbr.rel (%p253) target = $region32
        $region31: #{tpu_custom_call.1} parent=23 // pred_region
          %s256 = sand.u32 %s25, 1
          %s257 = scalar_lea.sflag [#allocation7], %s256
          %s258 = sand.u32 %s75, 1
          %s259 = smul.addr %s258, 8
          %s260 = scalar_lea.vmem [#allocation6], %s259
          %s262 = ssub.s32 128, 128
          %263 = vsyncadd %s257, %s262
          %s264 = smul.addr %s32, 128
          %s265 = scalar_lea.hbm %s1, %s264
          %s267 = sshll.u32 %s260, 4
          %s268 = int_to_ptr.vmem [resolvable:$true] %s267
          %270 = dma.hbm_to_vmem [thread:$0]  %s265, 128, %s268, %s257
        $region32: #{tpu_custom_call.1} parent=23 // pred_fallthru
          _
      $region24: #{tpu_custom_call.1} parent=5 // pred_fallthru
        _
      %p271 = scmp.le.s32.totalorder 1, %s25
      %p272 = scmp.lt.s32.totalorder %s25, 5
      %p273 = pnand %p271, %p272
      %p274 = pneg %p273
      // Predicated region
      $region33: #{tpu_custom_call.1} parent=5 // pred_check
        _
      $region34: #{tpu_custom_call.1} parent=5 // pred_check_branch
        %276 = sbr.rel (%p273) target = $region36
      $region35: #{tpu_custom_call.1} parent=5 // pred_region
        %s277 = ssub.s32 %s25, 1
        %s278 = sand.u32 %s52, 1
        %s279 = scalar_lea.sflag [#allocation4], %s278
        %s280 = sand.u32 %s52, 1
        %s281 = smul.addr %s280, 16
        %s282 = scalar_lea.vmem [#allocation3], %s281
        // Predicated region
        $region37: #{tpu_custom_call.1} parent=35 // pred_check
          %p283 = pneg %p65
        $region38: #{tpu_custom_call.1} parent=35 // pred_check_branch
          %285 = sbr.rel (%p283) target = $region40
        $region39: #{tpu_custom_call.1} parent=35 // pred_region
          %286 = dma.done %s279, 256
        $region40: #{tpu_custom_call.1} parent=35 // pred_fallthru
          _
        %s287 = sand.u32 %s30, 1
        %s288 = scalar_lea.sflag [#allocation7], %s287
        %s289 = sand.u32 %s78, 1
        %s290 = smul.addr %s289, 8
        %s291 = scalar_lea.vmem [#allocation6], %s290
        // Predicated region
        $region41: #{tpu_custom_call.1} parent=35 // pred_check
          %p292 = pneg %p91
        $region42: #{tpu_custom_call.1} parent=35 // pred_check_branch
          %294 = sbr.rel (%p292) target = $region44
        $region43: #{tpu_custom_call.1} parent=35 // pred_region
          %295 = dma.done %s288, 128
        $region44: #{tpu_custom_call.1} parent=35 // pred_fallthru
          _
        // Predicated region
        $region45: #{tpu_custom_call.1} parent=35 // pred_check
          %p296 = pneg %p112
        $region46: #{tpu_custom_call.1} parent=35 // pred_check_branch
          %298 = sbr.rel (%p296) target = $region48
        $region47: #{tpu_custom_call.1} parent=35 // pred_region
          %299 = dma.done [#allocation7], 128
        $region48: #{tpu_custom_call.1} parent=35 // pred_fallthru
          _
        // Predicated region
        $region49: #{tpu_custom_call.1} parent=35 // pred_check
          %p300 = pneg %p133
        $region50: #{tpu_custom_call.1} parent=35 // pred_check_branch
          %302 = sbr.rel (%p300) target = $region52
        $region51: #{tpu_custom_call.1} parent=35 // pred_region
          %303 = dma.done [#allocation10], 3072
        $region52: #{tpu_custom_call.1} parent=35 // pred_fallthru
          _
        %s304 = sand.u32 %s52, 1
        %s305 = scalar_lea.sflag [#allocation4], %s304
        %s306 = sand.u32 %s52, 1
        %s307 = smul.addr %s306, 16
        %s308 = scalar_lea.vmem [#allocation3], %s307
        %p309 = pneg %p65
        %p310 = pneg %p62
        %s311 = sand.u32 %s30, 1
        %s312 = scalar_lea.sflag [#allocation7], %s311
        %s313 = sand.u32 %s78, 1
        %s314 = smul.addr %s313, 8
        %s315 = scalar_lea.vmem [#allocation6], %s314
        %p316 = pneg %p91
        %p317 = pneg %p88
        %p318 = pneg %p112
        %p319 = pneg %p109
        %p320 = pneg %p133
        %p321 = pneg %p130
        %p322 = pneg %p161
        %p323 = pneg %p158
        %s324 = sand.u32 %s148, 1
        %s325 = scalar_lea.sflag [#allocation5], %s324
        %s326 = sand.u32 %s148, 1
        %s327 = smul.addr %s326, 16
        %s328 = scalar_lea.vmem [#allocation11], %s327
        %p329 = pneg %p187
        %p330 = pneg %p184
        %s331 = sand.u32 %s174, 1
        %s332 = scalar_lea.sflag [#allocation13], %s331
        %s333 = sand.u32 %s174, 1
        %s334 = smul.addr %s333, 8
        %s335 = scalar_lea.vmem [#allocation12], %s334
        %s336 = smul.u32 2, %s35
        %s337 = smul.u32 2, %s35
        %v338 = vld [vmem:[#allocation8] sm:$0xff]
        %v339 = vld [vmem:[#allocation9] sm:$0xff]
        %v340 = vld [vmem:[#allocation9 + $0x8] sm:$0xff]
        %v341 = vld [vmem:[#allocation9 + $0x10] sm:$0xff]
        %v342 = vld [vmem:[#allocation9 + $0x18] sm:$0xff]
        %v343 = vld [vmem:[#allocation9 + $0x20] sm:$0xff]
        %v344 = vld [vmem:[#allocation9 + $0x28] sm:$0xff]
        %v345 = vld [vmem:[#allocation9 + $0x30] sm:$0xff]
        %v346 = vld [vmem:[#allocation9 + $0x38] sm:$0xff]
        %v347 = vld [vmem:[#allocation9 + $0x40] sm:$0xff]
        %v348 = vld [vmem:[#allocation9 + $0x48] sm:$0xff]
        %v349 = vld [vmem:[#allocation9 + $0x50] sm:$0xff]
        %v350 = vld [vmem:[#allocation9 + $0x58] sm:$0xff]
        %v351 = vld [vmem:[#allocation9 + $0x60] sm:$0xff]
        %v352 = vld [vmem:[#allocation9 + $0x68] sm:$0xff]
        %v353 = vld [vmem:[#allocation9 + $0x70] sm:$0xff]
        %v354 = vld [vmem:[#allocation9 + $0x78] sm:$0xff]
        %v355 = vld [vmem:[#allocation9 + $0x80] sm:$0xff]
        %v356 = vld [vmem:[#allocation9 + $0x88] sm:$0xff]
        %v357 = vld [vmem:[#allocation9 + $0x90] sm:$0xff]
        %v358 = vld [vmem:[#allocation9 + $0x98] sm:$0xff]
        %v359 = vld [vmem:[#allocation9 + $0xa0] sm:$0xff]
        %v360 = vld [vmem:[#allocation9 + $0xa8] sm:$0xff]
        %v361 = vld [vmem:[#allocation9 + $0xb0] sm:$0xff]
        %v362 = vld [vmem:[#allocation9 + $0xb8] sm:$0xff]
        %p363 = scmp.eq.s32.totalorder %s35, 0
        // Predicated region
        $region53: #{tpu_custom_call.1} parent=35 // pred_check
          %p364 = pneg %p363
        $region54: #{tpu_custom_call.1} parent=35 // pred_check_branch
          %366 = sbr.rel (%p364) target = $region56
        $region55: #{tpu_custom_call.1} parent=35 // pred_region
          %v367 = vld [vmem:[%s291] sm:$0xff]
          %368 = vst [vmem:[#allocation2] sm:$0xff] %v367
        $region56: #{tpu_custom_call.1} parent=35 // pred_fallthru
          _
        %v369 = vld [vmem:[#allocation2] sm:$0xff]
        %v370 = vld [vmem:[%s282] sm:$0xff]
        %vm371 = vcmask 261120
        %v372 = vsel %vm371, %v370, 0.0
        %373 = vadd.xlane.f32.xlu0 %v372
        %v374 = vpop.xlane.xlu0 %373
        %v375 = vrcp.pop 32.0
        %v376 = vmul.f32 %v374, %v375
        %v377 = vsub.f32 %v370, %v376
        %v378 = vmul.f32 %v377, %v377
        %v379 = vsel %vm371, %v378, 0.0
        %380 = vadd.xlane.f32.xlu0 %v379
        %v381 = vpop.xlane.xlu0 %380
        %v382 = vmul.f32 %v381, %v375
        %v383 = vadd.f32 %v382, 1e-05
        %v384 = vrsqrt.pop %v383
        %v385 = vmul.f32 %v377, %v384
        %v386 = vlaneseq
        %v387 = vshrl.u32 %v386, 7
        %v388 = vsub.s32 0, %v387
        %v389 = vrot.slane %v338, %v388
        %v390 = vmul.f32 %v385, %v389
        %v391 = vlaneseq
        %v392 = vshrl.u32 %v391, 7
        %v393 = vsub.s32 1, %v392
        %v394 = vrot.slane %v338, %v393
        %v395 = vadd.f32 %v390, %v394
        %397 = vrot.lane.b32.xlu0 %v369, 64
        %v398 = vpop.permute.xlu0 %397
        %v399 = vsel %vm371, %v398, 0
        %401 = vmatprep.subr.mxu0 0.0
        %402 = vmatpush1.msra.mxu0 %v343
        %403 = vmatprep.subr.mxu0 0.0
        %404 = vmatpush1.msra.mxu0 %v344
        %405 = vmatprep.subr.mxu0 0.0
        %406 = vmatpush1.msra.mxu0 %v345
        %407 = vmatprep.subr.mxu0 0.0
        %408 = vmatpush1.msra.mxu0 %v346
        %409 = vmatprep.subr.mxu0 0.0
        %410 = vmatpush1.msra.mxu0 0.0
        %411 = vmatprep.subr.mxu0 0.0
        %412 = vmatpush1.msra.mxu0 0.0
        %413 = vmatprep.subr.mxu0 0.0
        %414 = vmatpush1.msra.mxu0 0.0
        %415 = vmatprep.subr.mxu0 0.0
        %416 = vmatpush1.msra.mxu0 0.0
        %417 = vmatprep.subr.mxu0 0.0
        %418 = vmatpush1.msra.mxu0 0.0
        %419 = vmatprep.subr.mxu0 0.0
        %420 = vmatpush1.msra.mxu0 0.0
        %421 = vmatprep.subr.mxu0 0.0
        %422 = vmatpush1.msra.mxu0 0.0
        %423 = vmatprep.subr.mxu0 0.0
        %424 = vmatpush1.msra.mxu0 0.0
        %425 = vmatprep.subr.mxu0 0.0
        %426 = vmatpush1.msra.mxu0 0.0
        %427 = vmatprep.subr.mxu0 0.0
        %428 = vmatpush1.msra.mxu0 0.0
        %429 = vmatprep.subr.mxu0 0.0
        %430 = vmatpush1.msra.mxu0 0.0
        %431 = vmatprep.subr.mxu0 0.0
        %432 = vmatpush1.msra.mxu0 0.0
        %433 = vmatprep.subr.mxu0 0.0
        %434 = vmatpush1.msra.mxu0 0.0
        %435 = vmatprep.subr.mxu0 0.0
        %436 = vmatpush1.msra.mxu0 0.0
        %437 = vmatprep.subr.mxu0 0.0
        %438 = vmatpush1.msra.mxu0 0.0
        %439 = vmatprep.subr.mxu0 0.0
        %440 = vmatpush1.msra.mxu0 0.0
        %441 = vmatprep.subr.mxu0 0.0
        %442 = vmatpush1.msra.mxu0 0.0
        %443 = vmatprep.subr.mxu0 0.0
        %444 = vmatpush1.msra.mxu0 0.0
        %445 = vmatprep.subr.mxu0 0.0
        %446 = vmatpush1.msra.mxu0 0.0
        %447 = vmatprep.subr.mxu0 0.0
        %448 = vmatpush1.msra.mxu0 0.0
        %449 = vmatprep.subr.mxu0 0.0
        %450 = vmatpush1.msra.mxu0 0.0
        %451 = vmatprep.subr.mxu0 0.0
        %452 = vmatpush1.msra.mxu0 0.0
        %453 = vmatprep.subr.mxu0 0.0
        %454 = vmatpush1.msra.mxu0 0.0
        %455 = vmatprep.subr.mxu0 0.0
        %456 = vmatpush1.msra.mxu0 0.0
        %457 = vmatprep.subr.mxu0 0.0
        %458 = vmatpush1.msra.mxu0 0.0
        %459 = vmatprep.subr.mxu0 0.0
        %460 = vmatpush1.msra.mxu0 0.0
        %461 = vmatprep.subr.mxu0 0.0
        %462 = vmatpush1.msra.mxu0 0.0
        %463 = vmatprep.subr.mxu0 0.0
        %464 = vmatpush1.msra.mxu0 0.0
        %465 = vmatprep.mubr.f32.mxu0 0.0
        %466 = vmatmul.mubr.f32.gmra.mrb[0].mxu0 %v399
        %v467 = vpop.f32.mrb[0].mxu0
        %v468 = vadd.f32 0.0, %v467
        %v469 = vpop.f32.mrb[0].mxu0
        %470 = vdwg.mxu0
        %v472 = vsel %vm371, %v395, 0
        %474 = vmatprep.subr.mxu0 0.0
        %475 = vmatpush1.msra.mxu0 %v339
        %476 = vmatprep.subr.mxu0 0.0
        %477 = vmatpush1.msra.mxu0 %v340
        %478 = vmatprep.subr.mxu0 0.0
        %479 = vmatpush1.msra.mxu0 %v341
        %480 = vmatprep.subr.mxu0 0.0
        %481 = vmatpush1.msra.mxu0 %v342
        %482 = vmatprep.subr.mxu0 0.0
        %483 = vmatpush1.msra.mxu0 0.0
        %484 = vmatprep.subr.mxu0 0.0
        %485 = vmatpush1.msra.mxu0 0.0
        %486 = vmatprep.subr.mxu0 0.0
        %487 = vmatpush1.msra.mxu0 0.0
        %488 = vmatprep.subr.mxu0 0.0
        %489 = vmatpush1.msra.mxu0 0.0
        %490 = vmatprep.subr.mxu0 0.0
        %491 = vmatpush1.msra.mxu0 0.0
        %492 = vmatprep.subr.mxu0 0.0
        %493 = vmatpush1.msra.mxu0 0.0
        %494 = vmatprep.subr.mxu0 0.0
        %495 = vmatpush1.msra.mxu0 0.0
        %496 = vmatprep.subr.mxu0 0.0
        %497 = vmatpush1.msra.mxu0 0.0
        %498 = vmatprep.subr.mxu0 0.0
        %499 = vmatpush1.msra.mxu0 0.0
        %500 = vmatprep.subr.mxu0 0.0
        %501 = vmatpush1.msra.mxu0 0.0
        %502 = vmatprep.subr.mxu0 0.0
        %503 = vmatpush1.msra.mxu0 0.0
        %504 = vmatprep.subr.mxu0 0.0
        %505 = vmatpush1.msra.mxu0 0.0
        %506 = vmatprep.subr.mxu0 0.0
        %507 = vmatpush1.msra.mxu0 0.0
        %508 = vmatprep.subr.mxu0 0.0
        %509 = vmatpush1.msra.mxu0 0.0
        %510 = vmatprep.subr.mxu0 0.0
        %511 = vmatpush1.msra.mxu0 0.0
        %512 = vmatprep.subr.mxu0 0.0
        %513 = vmatpush1.msra.mxu0 0.0
        %514 = vmatprep.subr.mxu0 0.0
        %515 = vmatpush1.msra.mxu0 0.0
        %516 = vmatprep.subr.mxu0 0.0
        %517 = vmatpush1.msra.mxu0 0.0
        %518 = vmatprep.subr.mxu0 0.0
        %519 = vmatpush1.msra.mxu0 0.0
        %520 = vmatprep.subr.mxu0 0.0
        %521 = vmatpush1.msra.mxu0 0.0
        %522 = vmatprep.subr.mxu0 0.0
        %523 = vmatpush1.msra.mxu0 0.0
        %524 = vmatprep.subr.mxu0 0.0
        %525 = vmatpush1.msra.mxu0 0.0
        %526 = vmatprep.subr.mxu0 0.0
        %527 = vmatpush1.msra.mxu0 0.0
        %528 = vmatprep.subr.mxu0 0.0
        %529 = vmatpush1.msra.mxu0 0.0
        %530 = vmatprep.subr.mxu0 0.0
        %531 = vmatpush1.msra.mxu0 0.0
        %532 = vmatprep.subr.mxu0 0.0
        %533 = vmatpush1.msra.mxu0 0.0
        %534 = vmatprep.subr.mxu0 0.0
        %535 = vmatpush1.msra.mxu0 0.0
        %536 = vmatprep.subr.mxu0 0.0
        %537 = vmatpush1.msra.mxu0 0.0
        %538 = vmatprep.mubr.f32.mxu0 0.0
        %539 = vmatmul.mubr.f32.gmra.mrb[0].mxu0 %v472
        %v540 = vpop.f32.mrb[0].mxu0
        %v541 = vadd.f32 %v468, %v540
        %v542 = vpop.f32.mrb[0].mxu0
        %543 = vdwg.mxu0
        %v544 = vlaneseq
        %v545 = vshrl.u32 %v544, 7
        %v546 = vsub.s32 5, %v545
        %v547 = vrot.slane %v338, %v546
        %v548 = vadd.f32 %v541, %v547
        %v550 = vadd.f32 %v548, %v398
        %552 = vrot.lane.b32.xlu0 %v548, 32
        %v553 = vpop.permute.xlu0 %552
        %v555 = vmax.f32 %v550, %v553
        %557 = vrot.lane.b32.xlu0 %v555, 96
        %v558 = vpop.permute.xlu0 %557
        %v560 = vsub.f32 %v548, %v558
        %v561 = vmul.f32 %v560, 1.442695
        %v562 = vpow.pop %v561
        %v563 = vsub.f32 %v548, %v555
        %v564 = vadd.f32 %v563, %v398
        %v565 = vmul.f32 %v564, 1.442695
        %v566 = vpow.pop %v565
        %v567 = vtanh.pop %v548
        %v568 = vxor.u32 %v548, 2147483648
        %v569 = vmul.f32 %v568, 1.442695
        %v570 = vpow.pop %v569
        %v571 = vadd.f32 %v570, 1.0
        %v572 = vrcp.pop %v571
        %v573 = vmul.f32 1.0, %v572
        %574 = vrot.lane.b32.xlu0 %v369, 32
        %v575 = vpop.permute.xlu0 %574
        %v577 = vmul.f32 %v566, %v575
        %579 = vrot.lane.b32.xlu0 %v567, 64
        %v580 = vpop.permute.xlu0 %579
        %v582 = vmul.f32 %v562, %v580
        %584 = vrot.lane.b32.xlu0 %v582, 32
        %v585 = vpop.permute.xlu0 %584
        %v587 = vadd.f32 %v577, %v585
        %v588 = vmul.f32 %v566, %v369
        %590 = vrot.lane.b32.xlu0 %v562, 32
        %v591 = vpop.permute.xlu0 %590
        %v593 = vadd.f32 %v588, %v591
        %v594 = vrcp.pop %v593
        %v595 = vmul.f32 %v593, %v594
        %v596 = vsub.f32 2.0, %v595
        %v597 = vmul.f32 %v594, %v596
        %v598 = vmul.f32 %v587, %v597
        %600 = vrot.lane.b32.xlu0 %v598, 64
        %v601 = vpop.permute.xlu0 %600
        %v603 = vmul.f32 %v573, %v601
        %605 = vrot.lane.b32.xlu0 %v603, 32
        %v606 = vpop.permute.xlu0 %605
        %v607 = vsel %vm371, %v606, 0
        %609 = vmatprep.subr.mxu0 0.0
        %610 = vmatpush1.msra.mxu0 %v351
        %611 = vmatprep.subr.mxu0 0.0
        %612 = vmatpush1.msra.mxu0 %v352
        %613 = vmatprep.subr.mxu0 0.0
        %614 = vmatpush1.msra.mxu0 %v353
        %615 = vmatprep.subr.mxu0 0.0
        %616 = vmatpush1.msra.mxu0 %v354
        %617 = vmatprep.subr.mxu0 0.0
        %618 = vmatpush1.msra.mxu0 0.0
        %619 = vmatprep.subr.mxu0 0.0
        %620 = vmatpush1.msra.mxu0 0.0
        %621 = vmatprep.subr.mxu0 0.0
        %622 = vmatpush1.msra.mxu0 0.0
        %623 = vmatprep.subr.mxu0 0.0
        %624 = vmatpush1.msra.mxu0 0.0
        %625 = vmatprep.subr.mxu0 0.0
        %626 = vmatpush1.msra.mxu0 0.0
        %627 = vmatprep.subr.mxu0 0.0
        %628 = vmatpush1.msra.mxu0 0.0
        %629 = vmatprep.subr.mxu0 0.0
        %630 = vmatpush1.msra.mxu0 0.0
        %631 = vmatprep.subr.mxu0 0.0
        %632 = vmatpush1.msra.mxu0 0.0
        %633 = vmatprep.subr.mxu0 0.0
        %634 = vmatpush1.msra.mxu0 0.0
        %635 = vmatprep.subr.mxu0 0.0
        %636 = vmatpush1.msra.mxu0 0.0
        %637 = vmatprep.subr.mxu0 0.0
        %638 = vmatpush1.msra.mxu0 0.0
        %639 = vmatprep.subr.mxu0 0.0
        %640 = vmatpush1.msra.mxu0 0.0
        %641 = vmatprep.subr.mxu0 0.0
        %642 = vmatpush1.msra.mxu0 0.0
        %643 = vmatprep.subr.mxu0 0.0
        %644 = vmatpush1.msra.mxu0 0.0
        %645 = vmatprep.subr.mxu0 0.0
        %646 = vmatpush1.msra.mxu0 0.0
        %647 = vmatprep.subr.mxu0 0.0
        %648 = vmatpush1.msra.mxu0 0.0
        %649 = vmatprep.subr.mxu0 0.0
        %650 = vmatpush1.msra.mxu0 0.0
        %651 = vmatprep.subr.mxu0 0.0
        %652 = vmatpush1.msra.mxu0 0.0
        %653 = vmatprep.subr.mxu0 0.0
        %654 = vmatpush1.msra.mxu0 0.0
        %655 = vmatprep.subr.mxu0 0.0
        %656 = vmatpush1.msra.mxu0 0.0
        %657 = vmatprep.subr.mxu0 0.0
        %658 = vmatpush1.msra.mxu0 0.0
        %659 = vmatprep.subr.mxu0 0.0
        %660 = vmatpush1.msra.mxu0 0.0
        %661 = vmatprep.subr.mxu0 0.0
        %662 = vmatpush1.msra.mxu0 0.0
        %663 = vmatprep.subr.mxu0 0.0
        %664 = vmatpush1.msra.mxu0 0.0
        %665 = vmatprep.subr.mxu0 0.0
        %666 = vmatpush1.msra.mxu0 0.0
        %667 = vmatprep.subr.mxu0 0.0
        %668 = vmatpush1.msra.mxu0 0.0
        %669 = vmatprep.subr.mxu0 0.0
        %670 = vmatpush1.msra.mxu0 0.0
        %671 = vmatprep.subr.mxu0 0.0
        %672 = vmatpush1.msra.mxu0 0.0
        %673 = vmatprep.mubr.f32.mxu0 0.0
        %674 = vmatmul.mubr.f32.gmra.mrb[0].mxu0 %v607
        %v675 = vpop.f32.mrb[0].mxu0
        %v676 = vadd.f32 0.0, %v675
        %v677 = vpop.f32.mrb[0].mxu0
        %678 = vdwg.mxu0
        %680 = vrot.lane.b32.xlu0 %v676, 96
        %v681 = vpop.permute.xlu0 %680
        %v683 = vsub.f32 %v603, %v681
        %v684 = vmul.f32 %v683, %v683
        %686 = vrot.lane.b32.xlu0 %v684, 32
        %v687 = vpop.permute.xlu0 %686
        %v688 = vsel %vm371, %v687, 0
        %690 = vmatprep.subr.mxu0 0.0
        %691 = vmatpush1.msra.mxu0 %v351
        %692 = vmatprep.subr.mxu0 0.0
        %693 = vmatpush1.msra.mxu0 %v352
        %694 = vmatprep.subr.mxu0 0.0
        %695 = vmatpush1.msra.mxu0 %v353
        %696 = vmatprep.subr.mxu0 0.0
        %697 = vmatpush1.msra.mxu0 %v354
        %698 = vmatprep.subr.mxu0 0.0
        %699 = vmatpush1.msra.mxu0 0.0
        %700 = vmatprep.subr.mxu0 0.0
        %701 = vmatpush1.msra.mxu0 0.0
        %702 = vmatprep.subr.mxu0 0.0
        %703 = vmatpush1.msra.mxu0 0.0
        %704 = vmatprep.subr.mxu0 0.0
        %705 = vmatpush1.msra.mxu0 0.0
        %706 = vmatprep.subr.mxu0 0.0
        %707 = vmatpush1.msra.mxu0 0.0
        %708 = vmatprep.subr.mxu0 0.0
        %709 = vmatpush1.msra.mxu0 0.0
        %710 = vmatprep.subr.mxu0 0.0
        %711 = vmatpush1.msra.mxu0 0.0
        %712 = vmatprep.subr.mxu0 0.0
        %713 = vmatpush1.msra.mxu0 0.0
        %714 = vmatprep.subr.mxu0 0.0
        %715 = vmatpush1.msra.mxu0 0.0
        %716 = vmatprep.subr.mxu0 0.0
        %717 = vmatpush1.msra.mxu0 0.0
        %718 = vmatprep.subr.mxu0 0.0
        %719 = vmatpush1.msra.mxu0 0.0
        %720 = vmatprep.subr.mxu0 0.0
        %721 = vmatpush1.msra.mxu0 0.0
        %722 = vmatprep.subr.mxu0 0.0
        %723 = vmatpush1.msra.mxu0 0.0
        %724 = vmatprep.subr.mxu0 0.0
        %725 = vmatpush1.msra.mxu0 0.0
        %726 = vmatprep.subr.mxu0 0.0
        %727 = vmatpush1.msra.mxu0 0.0
        %728 = vmatprep.subr.mxu0 0.0
        %729 = vmatpush1.msra.mxu0 0.0
        %730 = vmatprep.subr.mxu0 0.0
        %731 = vmatpush1.msra.mxu0 0.0
        %732 = vmatprep.subr.mxu0 0.0
        %733 = vmatpush1.msra.mxu0 0.0
        %734 = vmatprep.subr.mxu0 0.0
        %735 = vmatpush1.msra.mxu0 0.0
        %736 = vmatprep.subr.mxu0 0.0
        %737 = vmatpush1.msra.mxu0 0.0
        %738 = vmatprep.subr.mxu0 0.0
        %739 = vmatpush1.msra.mxu0 0.0
        %740 = vmatprep.subr.mxu0 0.0
        %741 = vmatpush1.msra.mxu0 0.0
        %742 = vmatprep.subr.mxu0 0.0
        %743 = vmatpush1.msra.mxu0 0.0
        %744 = vmatprep.subr.mxu0 0.0
        %745 = vmatpush1.msra.mxu0 0.0
        %746 = vmatprep.subr.mxu0 0.0
        %747 = vmatpush1.msra.mxu0 0.0
        %748 = vmatprep.subr.mxu0 0.0
        %749 = vmatpush1.msra.mxu0 0.0
        %750 = vmatprep.subr.mxu0 0.0
        %751 = vmatpush1.msra.mxu0 0.0
        %752 = vmatprep.subr.mxu0 0.0
        %753 = vmatpush1.msra.mxu0 0.0
        %754 = vmatprep.mubr.f32.mxu0 0.0
        %755 = vmatmul.mubr.f32.gmra.mrb[0].mxu0 %v688
        %v756 = vpop.f32.mrb[0].mxu0
        %v757 = vadd.f32 1e-05, %v756
        %v758 = vpop.f32.mrb[0].mxu0
        %759 = vdwg.mxu0
        %v760 = vrsqrt.pop %v757
        %762 = vrot.lane.b32.xlu0 %v760, 96
        %v763 = vpop.permute.xlu0 %762
        %v765 = vmul.f32 %v683, %v763
        %v766 = vlaneseq
        %v767 = vshrl.u32 %v766, 7
        %v768 = vsub.s32 2, %v767
        %v769 = vrot.slane %v338, %v768
        %771 = vrot.lane.b32.xlu0 %v769, 96
        %v772 = vpop.permute.xlu0 %771
        %v774 = vmul.f32 %v765, %v772
        %v775 = vlaneseq
        %v776 = vshrl.u32 %v775, 7
        %v777 = vsub.s32 3, %v776
        %v778 = vrot.slane %v338, %v777
        %780 = vrot.lane.b32.xlu0 %v778, 96
        %v781 = vpop.permute.xlu0 %780
        %v783 = vadd.f32 %v774, %v781
        %v784 = vlaneseq
        %v785 = vshrl.u32 %v784, 7
        %v786 = vsub.s32 6, %v785
        %v787 = vrot.slane %v338, %v786
        %789 = vrot.lane.b32.xlu0 %v783, 32
        %v790 = vpop.permute.xlu0 %789
        %v791 = vsel %vm371, %v790, 0
        %793 = vmatprep.subr.mxu0 0.0
        %794 = vmatpush1.msra.mxu0 %v347
        %795 = vmatprep.subr.mxu0 0.0
        %796 = vmatpush1.msra.mxu0 %v348
        %797 = vmatprep.subr.mxu0 0.0
        %798 = vmatpush1.msra.mxu0 %v349
        %799 = vmatprep.subr.mxu0 0.0
        %800 = vmatpush1.msra.mxu0 %v350
        %801 = vmatprep.subr.mxu0 0.0
        %802 = vmatpush1.msra.mxu0 0.0
        %803 = vmatprep.subr.mxu0 0.0
        %804 = vmatpush1.msra.mxu0 0.0
        %805 = vmatprep.subr.mxu0 0.0
        %806 = vmatpush1.msra.mxu0 0.0
        %807 = vmatprep.subr.mxu0 0.0
        %808 = vmatpush1.msra.mxu0 0.0
        %809 = vmatprep.subr.mxu0 0.0
        %810 = vmatpush1.msra.mxu0 0.0
        %811 = vmatprep.subr.mxu0 0.0
        %812 = vmatpush1.msra.mxu0 0.0
        %813 = vmatprep.subr.mxu0 0.0
        %814 = vmatpush1.msra.mxu0 0.0
        %815 = vmatprep.subr.mxu0 0.0
        %816 = vmatpush1.msra.mxu0 0.0
        %817 = vmatprep.subr.mxu0 0.0
        %818 = vmatpush1.msra.mxu0 0.0
        %819 = vmatprep.subr.mxu0 0.0
        %820 = vmatpush1.msra.mxu0 0.0
        %821 = vmatprep.subr.mxu0 0.0
        %822 = vmatpush1.msra.mxu0 0.0
        %823 = vmatprep.subr.mxu0 0.0
        %824 = vmatpush1.msra.mxu0 0.0
        %825 = vmatprep.subr.mxu0 0.0
        %826 = vmatpush1.msra.mxu0 0.0
        %827 = vmatprep.subr.mxu0 0.0
        %828 = vmatpush1.msra.mxu0 0.0
        %829 = vmatprep.subr.mxu0 0.0
        %830 = vmatpush1.msra.mxu0 0.0
        %831 = vmatprep.subr.mxu0 0.0
        %832 = vmatpush1.msra.mxu0 0.0
        %833 = vmatprep.subr.mxu0 0.0
        %834 = vmatpush1.msra.mxu0 0.0
        %835 = vmatprep.subr.mxu0 0.0
        %836 = vmatpush1.msra.mxu0 0.0
        %837 = vmatprep.subr.mxu0 0.0
        %838 = vmatpush1.msra.mxu0 0.0
        %839 = vmatprep.subr.mxu0 0.0
        %840 = vmatpush1.msra.mxu0 0.0
        %841 = vmatprep.subr.mxu0 0.0
        %842 = vmatpush1.msra.mxu0 0.0
        %843 = vmatprep.subr.mxu0 0.0
        %844 = vmatpush1.msra.mxu0 0.0
        %845 = vmatprep.subr.mxu0 0.0
        %846 = vmatpush1.msra.mxu0 0.0
        %847 = vmatprep.subr.mxu0 0.0
        %848 = vmatpush1.msra.mxu0 0.0
        %849 = vmatprep.subr.mxu0 0.0
        %850 = vmatpush1.msra.mxu0 0.0
        %851 = vmatprep.subr.mxu0 0.0
        %852 = vmatpush1.msra.mxu0 0.0
        %853 = vmatprep.subr.mxu0 0.0
        %854 = vmatpush1.msra.mxu0 0.0
        %855 = vmatprep.subr.mxu0 0.0
        %856 = vmatpush1.msra.mxu0 0.0
        %857 = vmatprep.mubr.f32.mxu0 0.0
        %858 = vmatmul.mubr.f32.gmra.mrb[0].mxu0 %v791
        %v859 = vpop.f32.mrb[0].mxu0
        %v860 = vadd.f32 %v787, %v859
        %v861 = vpop.f32.mrb[0].mxu0
        %862 = vdwg.mxu0
        %v863 = vmul.f32 %v860, 0.5
        %v864 = vmul.f32 %v860, 0.70710677
        %v865 = verf.f32.pop %v864
        %v866 = vadd.f32 %v865, 1.0
        %v867 = vmul.f32 %v863, %v866
        %869 = vrot.lane.b32.xlu0 %v867, 64
        %v870 = vpop.permute.xlu0 %869
        %v872 = vadd.f32 %v860, %v870
        %v873 = vlaneseq
        %v874 = vshrl.u32 %v873, 7
        %v875 = vsub.s32 4, %v874
        %v876 = vrot.slane %v338, %v875
        %vm877 = vcmask 523264
        %v879 = vsel %vm877, %v872, 0
        %881 = vmatprep.subr.mxu0 0.0
        %882 = vmatpush1.msra.mxu0 %v355
        %883 = vmatprep.subr.mxu0 0.0
        %884 = vmatpush1.msra.mxu0 %v356
        %885 = vmatprep.subr.mxu0 0.0
        %886 = vmatpush1.msra.mxu0 %v357
        %887 = vmatprep.subr.mxu0 0.0
        %888 = vmatpush1.msra.mxu0 %v358
        %889 = vmatprep.subr.mxu0 0.0
        %890 = vmatpush1.msra.mxu0 %v359
        %891 = vmatprep.subr.mxu0 0.0
        %892 = vmatpush1.msra.mxu0 %v360
        %893 = vmatprep.subr.mxu0 0.0
        %894 = vmatpush1.msra.mxu0 %v361
        %895 = vmatprep.subr.mxu0 0.0
        %896 = vmatpush1.msra.mxu0 %v362
        %897 = vmatprep.subr.mxu0 0.0
        %898 = vmatpush1.msra.mxu0 0.0
        %899 = vmatprep.subr.mxu0 0.0
        %900 = vmatpush1.msra.mxu0 0.0
        %901 = vmatprep.subr.mxu0 0.0
        %902 = vmatpush1.msra.mxu0 0.0
        %903 = vmatprep.subr.mxu0 0.0
        %904 = vmatpush1.msra.mxu0 0.0
        %905 = vmatprep.subr.mxu0 0.0
        %906 = vmatpush1.msra.mxu0 0.0
        %907 = vmatprep.subr.mxu0 0.0
        %908 = vmatpush1.msra.mxu0 0.0
        %909 = vmatprep.subr.mxu0 0.0
        %910 = vmatpush1.msra.mxu0 0.0
        %911 = vmatprep.subr.mxu0 0.0
        %912 = vmatpush1.msra.mxu0 0.0
        %913 = vmatprep.subr.mxu0 0.0
        %914 = vmatpush1.msra.mxu0 0.0
        %915 = vmatprep.subr.mxu0 0.0
        %916 = vmatpush1.msra.mxu0 0.0
        %917 = vmatprep.subr.mxu0 0.0
        %918 = vmatpush1.msra.mxu0 0.0
        %919 = vmatprep.subr.mxu0 0.0
        %920 = vmatpush1.msra.mxu0 0.0
        %921 = vmatprep.subr.mxu0 0.0
        %922 = vmatpush1.msra.mxu0 0.0
        %923 = vmatprep.subr.mxu0 0.0
        %924 = vmatpush1.msra.mxu0 0.0
        %925 = vmatprep.subr.mxu0 0.0
        %926 = vmatpush1.msra.mxu0 0.0
        %927 = vmatprep.subr.mxu0 0.0
        %928 = vmatpush1.msra.mxu0 0.0
        %929 = vmatprep.subr.mxu0 0.0
        %930 = vmatpush1.msra.mxu0 0.0
        %931 = vmatprep.subr.mxu0 0.0
        %932 = vmatpush1.msra.mxu0 0.0
        %933 = vmatprep.subr.mxu0 0.0
        %934 = vmatpush1.msra.mxu0 0.0
        %935 = vmatprep.subr.mxu0 0.0
        %936 = vmatpush1.msra.mxu0 0.0
        %937 = vmatprep.subr.mxu0 0.0
        %938 = vmatpush1.msra.mxu0 0.0
        %939 = vmatprep.subr.mxu0 0.0
        %940 = vmatpush1.msra.mxu0 0.0
        %941 = vmatprep.subr.mxu0 0.0
        %942 = vmatpush1.msra.mxu0 0.0
        %943 = vmatprep.subr.mxu0 0.0
        %944 = vmatpush1.msra.mxu0 0.0
        %945 = vmatprep.mubr.f32.mxu0 0.0
        %946 = vmatmul.mubr.f32.gmra.mrb[0].mxu0 %v879
        %v947 = vpop.f32.mrb[0].mxu0
        %v948 = vadd.f32 %v876, %v947
        %v949 = vpop.f32.mrb[0].mxu0
        %950 = vdwg.mxu0
        %v951 = vadd.f32 %v948, %v370
        %953 = vrot.lane.b32.xlu0 %v370, 96
        %v954 = vpop.permute.xlu0 %953
        %v956 = vsel %vm371, %v954, 0.0
        %957 = vadd.xlane.f32.xlu0 %v956
        %v958 = vpop.xlane.xlu0 %957
        %v959 = vmul.f32 %v958, %v375
        %v960 = vsub.f32 %v370, %v959
        %v961 = vmul.f32 %v960, %v960
        %963 = vrot.lane.b32.xlu0 %v961, 96
        %v964 = vpop.permute.xlu0 %963
        %v966 = vsel %vm371, %v964, 0.0
        %967 = vadd.xlane.f32.xlu0 %v966
        %v968 = vpop.xlane.xlu0 %967
        %v969 = vmul.f32 %v968, %v375
        %v970 = vadd.f32 %v969, 1e-05
        %v971 = vrsqrt.pop %v970
        %v972 = vmul.f32 %v960, %v971
        %974 = vrot.lane.b32.xlu0 %v389, 32
        %v975 = vpop.permute.xlu0 %974
        %v977 = vmul.f32 %v972, %v975
        %979 = vrot.lane.b32.xlu0 %v394, 32
        %v980 = vpop.permute.xlu0 %979
        %v982 = vadd.f32 %v977, %v980
        %983 = vmatprep.subr.mxu0 0.0
        %984 = vmatpush1.msra.mxu0 %v343
        %985 = vmatprep.subr.mxu0 0.0
        %986 = vmatpush1.msra.mxu0 %v344
        %987 = vmatprep.subr.mxu0 0.0
        %988 = vmatpush1.msra.mxu0 %v345
        %989 = vmatprep.subr.mxu0 0.0
        %990 = vmatpush1.msra.mxu0 %v346
        %991 = vmatprep.subr.mxu0 0.0
        %992 = vmatpush1.msra.mxu0 0.0
        %993 = vmatprep.subr.mxu0 0.0
        %994 = vmatpush1.msra.mxu0 0.0
        %995 = vmatprep.subr.mxu0 0.0
        %996 = vmatpush1.msra.mxu0 0.0
        %997 = vmatprep.subr.mxu0 0.0
        %998 = vmatpush1.msra.mxu0 0.0
        %999 = vmatprep.subr.mxu0 0.0
        %1000 = vmatpush1.msra.mxu0 0.0
        %1001 = vmatprep.subr.mxu0 0.0
        %1002 = vmatpush1.msra.mxu0 0.0
        %1003 = vmatprep.subr.mxu0 0.0
        %1004 = vmatpush1.msra.mxu0 0.0
        %1005 = vmatprep.subr.mxu0 0.0
        %1006 = vmatpush1.msra.mxu0 0.0
        %1007 = vmatprep.subr.mxu0 0.0
        %1008 = vmatpush1.msra.mxu0 0.0
        %1009 = vmatprep.subr.mxu0 0.0
        %1010 = vmatpush1.msra.mxu0 0.0
        %1011 = vmatprep.subr.mxu0 0.0
        %1012 = vmatpush1.msra.mxu0 0.0
        %1013 = vmatprep.subr.mxu0 0.0
        %1014 = vmatpush1.msra.mxu0 0.0
        %1015 = vmatprep.subr.mxu0 0.0
        %1016 = vmatpush1.msra.mxu0 0.0
        %1017 = vmatprep.subr.mxu0 0.0
        %1018 = vmatpush1.msra.mxu0 0.0
        %1019 = vmatprep.subr.mxu0 0.0
        %1020 = vmatpush1.msra.mxu0 0.0
        %1021 = vmatprep.subr.mxu0 0.0
        %1022 = vmatpush1.msra.mxu0 0.0
        %1023 = vmatprep.subr.mxu0 0.0
        %1024 = vmatpush1.msra.mxu0 0.0
        %1025 = vmatprep.subr.mxu0 0.0
        %1026 = vmatpush1.msra.mxu0 0.0
        %1027 = vmatprep.subr.mxu0 0.0
        %1028 = vmatpush1.msra.mxu0 0.0
        %1029 = vmatprep.subr.mxu0 0.0
        %1030 = vmatpush1.msra.mxu0 0.0
        %1031 = vmatprep.subr.mxu0 0.0
        %1032 = vmatpush1.msra.mxu0 0.0
        %1033 = vmatprep.subr.mxu0 0.0
        %1034 = vmatpush1.msra.mxu0 0.0
        %1035 = vmatprep.subr.mxu0 0.0
        %1036 = vmatpush1.msra.mxu0 0.0
        %1037 = vmatprep.subr.mxu0 0.0
        %1038 = vmatpush1.msra.mxu0 0.0
        %1039 = vmatprep.subr.mxu0 0.0
        %1040 = vmatpush1.msra.mxu0 0.0
        %1041 = vmatprep.subr.mxu0 0.0
        %1042 = vmatpush1.msra.mxu0 0.0
        %1043 = vmatprep.subr.mxu0 0.0
        %1044 = vmatpush1.msra.mxu0 0.0
        %1045 = vmatprep.subr.mxu0 0.0
        %1046 = vmatpush1.msra.mxu0 0.0
        %1047 = vmatprep.mubr.f32.mxu0 0.0
        %1048 = vmatmul.mubr.f32.gmra.mrb[0].mxu0 %v607
        %v1049 = vpop.f32.mrb[0].mxu0
        %v1050 = vadd.f32 0.0, %v1049
        %v1051 = vpop.f32.mrb[0].mxu0
        %1052 = vdwg.mxu0
        %1054 = vrot.lane.b32.xlu0 %v982, 96
        %v1055 = vpop.permute.xlu0 %1054
        %v1056 = vsel %vm371, %v1055, 0
        %1058 = vmatprep.subr.mxu0 0.0
        %1059 = vmatpush1.msra.mxu0 %v339
        %1060 = vmatprep.subr.mxu0 0.0
        %1061 = vmatpush1.msra.mxu0 %v340
        %1062 = vmatprep.subr.mxu0 0.0
        %1063 = vmatpush1.msra.mxu0 %v341
        %1064 = vmatprep.subr.mxu0 0.0
        %1065 = vmatpush1.msra.mxu0 %v342
        %1066 = vmatprep.subr.mxu0 0.0
        %1067 = vmatpush1.msra.mxu0 0.0
        %1068 = vmatprep.subr.mxu0 0.0
        %1069 = vmatpush1.msra.mxu0 0.0
        %1070 = vmatprep.subr.mxu0 0.0
        %1071 = vmatpush1.msra.mxu0 0.0
        %1072 = vmatprep.subr.mxu0 0.0
        %1073 = vmatpush1.msra.mxu0 0.0
        %1074 = vmatprep.subr.mxu0 0.0
        %1075 = vmatpush1.msra.mxu0 0.0
        %1076 = vmatprep.subr.mxu0 0.0
        %1077 = vmatpush1.msra.mxu0 0.0
        %1078 = vmatprep.subr.mxu0 0.0
        %1079 = vmatpush1.msra.mxu0 0.0
        %1080 = vmatprep.subr.mxu0 0.0
        %1081 = vmatpush1.msra.mxu0 0.0
        %1082 = vmatprep.subr.mxu0 0.0
        %1083 = vmatpush1.msra.mxu0 0.0
        %1084 = vmatprep.subr.mxu0 0.0
        %1085 = vmatpush1.msra.mxu0 0.0
        %1086 = vmatprep.subr.mxu0 0.0
        %1087 = vmatpush1.msra.mxu0 0.0
        %1088 = vmatprep.subr.mxu0 0.0
        %1089 = vmatpush1.msra.mxu0 0.0
        %1090 = vmatprep.subr.mxu0 0.0
        %1091 = vmatpush1.msra.mxu0 0.0
        %1092 = vmatprep.subr.mxu0 0.0
        %1093 = vmatpush1.msra.mxu0 0.0
        %1094 = vmatprep.subr.mxu0 0.0
        %1095 = vmatpush1.msra.mxu0 0.0
        %1096 = vmatprep.subr.mxu0 0.0
        %1097 = vmatpush1.msra.mxu0 0.0
        %1098 = vmatprep.subr.mxu0 0.0
        %1099 = vmatpush1.msra.mxu0 0.0
        %1100 = vmatprep.subr.mxu0 0.0
        %1101 = vmatpush1.msra.mxu0 0.0
        %1102 = vmatprep.subr.mxu0 0.0
        %1103 = vmatpush1.msra.mxu0 0.0
        %1104 = vmatprep.subr.mxu0 0.0
        %1105 = vmatpush1.msra.mxu0 0.0
        %1106 = vmatprep.subr.mxu0 0.0
        %1107 = vmatpush1.msra.mxu0 0.0
        %1108 = vmatprep.subr.mxu0 0.0
        %1109 = vmatpush1.msra.mxu0 0.0
        %1110 = vmatprep.subr.mxu0 0.0
        %1111 = vmatpush1.msra.mxu0 0.0
        %1112 = vmatprep.subr.mxu0 0.0
        %1113 = vmatpush1.msra.mxu0 0.0
        %1114 = vmatprep.subr.mxu0 0.0
        %1115 = vmatpush1.msra.mxu0 0.0
        %1116 = vmatprep.subr.mxu0 0.0
        %1117 = vmatpush1.msra.mxu0 0.0
        %1118 = vmatprep.subr.mxu0 0.0
        %1119 = vmatpush1.msra.mxu0 0.0
        %1120 = vmatprep.subr.mxu0 0.0
        %1121 = vmatpush1.msra.mxu0 0.0
        %1122 = vmatprep.mubr.f32.mxu0 0.0
        %1123 = vmatmul.mubr.f32.gmra.mrb[0].mxu0 %v1056
        %v1124 = vpop.f32.mrb[0].mxu0
        %v1125 = vadd.f32 %v1050, %v1124
        %v1126 = vpop.f32.mrb[0].mxu0
        %1127 = vdwg.mxu0
        %v1128 = vadd.f32 %v1125, %v547
        %v1129 = vadd.f32 %v1128, %v555
        %1131 = vrot.lane.b32.xlu0 %v1128, 32
        %v1132 = vpop.permute.xlu0 %1131
        %v1134 = vmax.f32 %v1129, %v1132
        %1136 = vrot.lane.b32.xlu0 %v1134, 96
        %v1137 = vpop.permute.xlu0 %1136
        %v1139 = vsub.f32 %v1128, %v1137
        %v1140 = vmul.f32 %v1139, 1.442695
        %v1141 = vpow.pop %v1140
        %v1142 = vsub.f32 %v1128, %v1134
        %v1143 = vadd.f32 %v1142, %v555
        %v1144 = vmul.f32 %v1143, 1.442695
        %v1145 = vpow.pop %v1144
        %v1146 = vtanh.pop %v1128
        %v1147 = vxor.u32 %v1128, 2147483648
        %v1148 = vmul.f32 %v1147, 1.442695
        %v1149 = vpow.pop %v1148
        %v1150 = vadd.f32 %v1149, 1.0
        %v1151 = vrcp.pop %v1150
        %v1152 = vmul.f32 1.0, %v1151
        %v1153 = vmul.f32 %v1145, %v587
        %1155 = vrot.lane.b32.xlu0 %v1146, 64
        %v1156 = vpop.permute.xlu0 %1155
        %v1158 = vmul.f32 %v1141, %v1156
        %1160 = vrot.lane.b32.xlu0 %v1158, 32
        %v1161 = vpop.permute.xlu0 %1160
        %v1163 = vadd.f32 %v1153, %v1161
        %v1164 = vmul.f32 %v1145, %v593
        %1166 = vrot.lane.b32.xlu0 %v1141, 32
        %v1167 = vpop.permute.xlu0 %1166
        %v1169 = vadd.f32 %v1164, %v1167
        %v1170 = vrcp.pop %v1169
        %v1171 = vmul.f32 %v1169, %v1170
        %v1172 = vsub.f32 2.0, %v1171
        %v1173 = vmul.f32 %v1170, %v1172
        %v1174 = vmul.f32 %v1163, %v1173
        %1176 = vrot.lane.b32.xlu0 %v1174, 64
        %v1177 = vpop.permute.xlu0 %1176
        %v1179 = vmul.f32 %v1152, %v1177
        %1181 = vrot.lane.b32.xlu0 %v1179, 32
        %v1182 = vpop.permute.xlu0 %1181
        %v1183 = vsel %vm371, %v1182, 0
        %1185 = vmatprep.subr.mxu0 0.0
        %1186 = vmatpush1.msra.mxu0 %v351
        %1187 = vmatprep.subr.mxu0 0.0
        %1188 = vmatpush1.msra.mxu0 %v352
        %1189 = vmatprep.subr.mxu0 0.0
        %1190 = vmatpush1.msra.mxu0 %v353
        %1191 = vmatprep.subr.mxu0 0.0
        %1192 = vmatpush1.msra.mxu0 %v354
        %1193 = vmatprep.subr.mxu0 0.0
        %1194 = vmatpush1.msra.mxu0 0.0
        %1195 = vmatprep.subr.mxu0 0.0
        %1196 = vmatpush1.msra.mxu0 0.0
        %1197 = vmatprep.subr.mxu0 0.0
        %1198 = vmatpush1.msra.mxu0 0.0
        %1199 = vmatprep.subr.mxu0 0.0
        %1200 = vmatpush1.msra.mxu0 0.0
        %1201 = vmatprep.subr.mxu0 0.0
        %1202 = vmatpush1.msra.mxu0 0.0
        %1203 = vmatprep.subr.mxu0 0.0
        %1204 = vmatpush1.msra.mxu0 0.0
        %1205 = vmatprep.subr.mxu0 0.0
        %1206 = vmatpush1.msra.mxu0 0.0
        %1207 = vmatprep.subr.mxu0 0.0
        %1208 = vmatpush1.msra.mxu0 0.0
        %1209 = vmatprep.subr.mxu0 0.0
        %1210 = vmatpush1.msra.mxu0 0.0
        %1211 = vmatprep.subr.mxu0 0.0
        %1212 = vmatpush1.msra.mxu0 0.0
        %1213 = vmatprep.subr.mxu0 0.0
        %1214 = vmatpush1.msra.mxu0 0.0
        %1215 = vmatprep.subr.mxu0 0.0
        %1216 = vmatpush1.msra.mxu0 0.0
        %1217 = vmatprep.subr.mxu0 0.0
        %1218 = vmatpush1.msra.mxu0 0.0
        %1219 = vmatprep.subr.mxu0 0.0
        %1220 = vmatpush1.msra.mxu0 0.0
        %1221 = vmatprep.subr.mxu0 0.0
        %1222 = vmatpush1.msra.mxu0 0.0
        %1223 = vmatprep.subr.mxu0 0.0
        %1224 = vmatpush1.msra.mxu0 0.0
        %1225 = vmatprep.subr.mxu0 0.0
        %1226 = vmatpush1.msra.mxu0 0.0
        %1227 = vmatprep.subr.mxu0 0.0
        %1228 = vmatpush1.msra.mxu0 0.0
        %1229 = vmatprep.subr.mxu0 0.0
        %1230 = vmatpush1.msra.mxu0 0.0
        %1231 = vmatprep.subr.mxu0 0.0
        %1232 = vmatpush1.msra.mxu0 0.0
        %1233 = vmatprep.subr.mxu0 0.0
        %1234 = vmatpush1.msra.mxu0 0.0
        %1235 = vmatprep.subr.mxu0 0.0
        %1236 = vmatpush1.msra.mxu0 0.0
        %1237 = vmatprep.subr.mxu0 0.0
        %1238 = vmatpush1.msra.mxu0 0.0
        %1239 = vmatprep.subr.mxu0 0.0
        %1240 = vmatpush1.msra.mxu0 0.0
        %1241 = vmatprep.subr.mxu0 0.0
        %1242 = vmatpush1.msra.mxu0 0.0
        %1243 = vmatprep.subr.mxu0 0.0
        %1244 = vmatpush1.msra.mxu0 0.0
        %1245 = vmatprep.subr.mxu0 0.0
        %1246 = vmatpush1.msra.mxu0 0.0
        %1247 = vmatprep.subr.mxu0 0.0
        %1248 = vmatpush1.msra.mxu0 0.0
        %1249 = vmatprep.mubr.f32.mxu0 0.0
        %1250 = vmatmul.mubr.f32.gmra.mrb[0].mxu0 %v1183
        %v1251 = vpop.f32.mrb[0].mxu0
        %v1252 = vadd.f32 0.0, %v1251
        %v1253 = vpop.f32.mrb[0].mxu0
        %1254 = vdwg.mxu0
        %1256 = vrot.lane.b32.xlu0 %v1252, 96
        %v1257 = vpop.permute.xlu0 %1256
        %v1259 = vsub.f32 %v1179, %v1257
        %v1260 = vmul.f32 %v1259, %v1259
        %1262 = vrot.lane.b32.xlu0 %v1260, 32
        %v1263 = vpop.permute.xlu0 %1262
        %v1264 = vsel %vm371, %v1263, 0
        %1266 = vmatprep.subr.mxu0 0.0
        %1267 = vmatpush1.msra.mxu0 %v351
        %1268 = vmatprep.subr.mxu0 0.0
        %1269 = vmatpush1.msra.mxu0 %v352
        %1270 = vmatprep.subr.mxu0 0.0
        %1271 = vmatpush1.msra.mxu0 %v353
        %1272 = vmatprep.subr.mxu0 0.0
        %1273 = vmatpush1.msra.mxu0 %v354
        %1274 = vmatprep.subr.mxu0 0.0
        %1275 = vmatpush1.msra.mxu0 0.0
        %1276 = vmatprep.subr.mxu0 0.0
        %1277 = vmatpush1.msra.mxu0 0.0
        %1278 = vmatprep.subr.mxu0 0.0
        %1279 = vmatpush1.msra.mxu0 0.0
        %1280 = vmatprep.subr.mxu0 0.0
        %1281 = vmatpush1.msra.mxu0 0.0
        %1282 = vmatprep.subr.mxu0 0.0
        %1283 = vmatpush1.msra.mxu0 0.0
        %1284 = vmatprep.subr.mxu0 0.0
        %1285 = vmatpush1.msra.mxu0 0.0
        %1286 = vmatprep.subr.mxu0 0.0
        %1287 = vmatpush1.msra.mxu0 0.0
        %1288 = vmatprep.subr.mxu0 0.0
        %1289 = vmatpush1.msra.mxu0 0.0
        %1290 = vmatprep.subr.mxu0 0.0
        %1291 = vmatpush1.msra.mxu0 0.0
        %1292 = vmatprep.subr.mxu0 0.0
        %1293 = vmatpush1.msra.mxu0 0.0
        %1294 = vmatprep.subr.mxu0 0.0
        %1295 = vmatpush1.msra.mxu0 0.0
        %1296 = vmatprep.subr.mxu0 0.0
        %1297 = vmatpush1.msra.mxu0 0.0
        %1298 = vmatprep.subr.mxu0 0.0
        %1299 = vmatpush1.msra.mxu0 0.0
        %1300 = vmatprep.subr.mxu0 0.0
        %1301 = vmatpush1.msra.mxu0 0.0
        %1302 = vmatprep.subr.mxu0 0.0
        %1303 = vmatpush1.msra.mxu0 0.0
        %1304 = vmatprep.subr.mxu0 0.0
        %1305 = vmatpush1.msra.mxu0 0.0
        %1306 = vmatprep.subr.mxu0 0.0
        %1307 = vmatpush1.msra.mxu0 0.0
        %1308 = vmatprep.subr.mxu0 0.0
        %1309 = vmatpush1.msra.mxu0 0.0
        %1310 = vmatprep.subr.mxu0 0.0
        %1311 = vmatpush1.msra.mxu0 0.0
        %1312 = vmatprep.subr.mxu0 0.0
        %1313 = vmatpush1.msra.mxu0 0.0
        %1314 = vmatprep.subr.mxu0 0.0
        %1315 = vmatpush1.msra.mxu0 0.0
        %1316 = vmatprep.subr.mxu0 0.0
        %1317 = vmatpush1.msra.mxu0 0.0
        %1318 = vmatprep.subr.mxu0 0.0
        %1319 = vmatpush1.msra.mxu0 0.0
        %1320 = vmatprep.subr.mxu0 0.0
        %1321 = vmatpush1.msra.mxu0 0.0
        %1322 = vmatprep.subr.mxu0 0.0
        %1323 = vmatpush1.msra.mxu0 0.0
        %1324 = vmatprep.subr.mxu0 0.0
        %1325 = vmatpush1.msra.mxu0 0.0
        %1326 = vmatprep.subr.mxu0 0.0
        %1327 = vmatpush1.msra.mxu0 0.0
        %1328 = vmatprep.subr.mxu0 0.0
        %1329 = vmatpush1.msra.mxu0 0.0
        %1330 = vmatprep.mubr.f32.mxu0 0.0
        %1331 = vmatmul.mubr.f32.gmra.mrb[0].mxu0 %v1264
        %v1332 = vpop.f32.mrb[0].mxu0
        %v1333 = vadd.f32 1e-05, %v1332
        %v1334 = vpop.f32.mrb[0].mxu0
        %1335 = vdwg.mxu0
        %v1336 = vrsqrt.pop %v1333
        %1338 = vrot.lane.b32.xlu0 %v1336, 96
        %v1339 = vpop.permute.xlu0 %1338
        %v1341 = vmul.f32 %v1259, %v1339
        %v1342 = vmul.f32 %v1341, %v772
        %v1343 = vadd.f32 %v1342, %v781
        %1345 = vrot.lane.b32.xlu0 %v1343, 32
        %v1346 = vpop.permute.xlu0 %1345
        %v1347 = vsel %vm371, %v1346, 0
        %1349 = vmatprep.subr.mxu0 0.0
        %1350 = vmatpush1.msra.mxu0 %v347
        %1351 = vmatprep.subr.mxu0 0.0
        %1352 = vmatpush1.msra.mxu0 %v348
        %1353 = vmatprep.subr.mxu0 0.0
        %1354 = vmatpush1.msra.mxu0 %v349
        %1355 = vmatprep.subr.mxu0 0.0
        %1356 = vmatpush1.msra.mxu0 %v350
        %1357 = vmatprep.subr.mxu0 0.0
        %1358 = vmatpush1.msra.mxu0 0.0
        %1359 = vmatprep.subr.mxu0 0.0
        %1360 = vmatpush1.msra.mxu0 0.0
        %1361 = vmatprep.subr.mxu0 0.0
        %1362 = vmatpush1.msra.mxu0 0.0
        %1363 = vmatprep.subr.mxu0 0.0
        %1364 = vmatpush1.msra.mxu0 0.0
        %1365 = vmatprep.subr.mxu0 0.0
        %1366 = vmatpush1.msra.mxu0 0.0
        %1367 = vmatprep.subr.mxu0 0.0
        %1368 = vmatpush1.msra.mxu0 0.0
        %1369 = vmatprep.subr.mxu0 0.0
        %1370 = vmatpush1.msra.mxu0 0.0
        %1371 = vmatprep.subr.mxu0 0.0
        %1372 = vmatpush1.msra.mxu0 0.0
        %1373 = vmatprep.subr.mxu0 0.0
        %1374 = vmatpush1.msra.mxu0 0.0
        %1375 = vmatprep.subr.mxu0 0.0
        %1376 = vmatpush1.msra.mxu0 0.0
        %1377 = vmatprep.subr.mxu0 0.0
        %1378 = vmatpush1.msra.mxu0 0.0
        %1379 = vmatprep.subr.mxu0 0.0
        %1380 = vmatpush1.msra.mxu0 0.0
        %1381 = vmatprep.subr.mxu0 0.0
        %1382 = vmatpush1.msra.mxu0 0.0
        %1383 = vmatprep.subr.mxu0 0.0
        %1384 = vmatpush1.msra.mxu0 0.0
        %1385 = vmatprep.subr.mxu0 0.0
        %1386 = vmatpush1.msra.mxu0 0.0
        %1387 = vmatprep.subr.mxu0 0.0
        %1388 = vmatpush1.msra.mxu0 0.0
        %1389 = vmatprep.subr.mxu0 0.0
        %1390 = vmatpush1.msra.mxu0 0.0
        %1391 = vmatprep.subr.mxu0 0.0
        %1392 = vmatpush1.msra.mxu0 0.0
        %1393 = vmatprep.subr.mxu0 0.0
        %1394 = vmatpush1.msra.mxu0 0.0
        %1395 = vmatprep.subr.mxu0 0.0
        %1396 = vmatpush1.msra.mxu0 0.0
        %1397 = vmatprep.subr.mxu0 0.0
        %1398 = vmatpush1.msra.mxu0 0.0
        %1399 = vmatprep.subr.mxu0 0.0
        %1400 = vmatpush1.msra.mxu0 0.0
        %1401 = vmatprep.subr.mxu0 0.0
        %1402 = vmatpush1.msra.mxu0 0.0
        %1403 = vmatprep.subr.mxu0 0.0
        %1404 = vmatpush1.msra.mxu0 0.0
        %1405 = vmatprep.subr.mxu0 0.0
        %1406 = vmatpush1.msra.mxu0 0.0
        %1407 = vmatprep.subr.mxu0 0.0
        %1408 = vmatpush1.msra.mxu0 0.0
        %1409 = vmatprep.subr.mxu0 0.0
        %1410 = vmatpush1.msra.mxu0 0.0
        %1411 = vmatprep.subr.mxu0 0.0
        %1412 = vmatpush1.msra.mxu0 0.0
        %1413 = vmatprep.mubr.f32.mxu0 0.0
        %1414 = vmatmul.mubr.f32.gmra.mrb[0].mxu0 %v1347
        %v1415 = vpop.f32.mrb[0].mxu0
        %v1416 = vadd.f32 %v787, %v1415
        %v1417 = vpop.f32.mrb[0].mxu0
        %1418 = vdwg.mxu0
        %v1419 = vmul.f32 %v1416, 0.5
        %v1420 = vmul.f32 %v1416, 0.70710677
        %v1421 = verf.f32.pop %v1420
        %v1422 = vadd.f32 %v1421, 1.0
        %v1423 = vmul.f32 %v1419, %v1422
        %1425 = vrot.lane.b32.xlu0 %v1423, 64
        %v1426 = vpop.permute.xlu0 %1425
        %v1428 = vadd.f32 %v1416, %v1426
        %v1430 = vsel %vm877, %v1428, 0
        %1432 = vmatprep.subr.mxu0 0.0
        %1433 = vmatpush1.msra.mxu0 %v355
        %1434 = vmatprep.subr.mxu0 0.0
        %1435 = vmatpush1.msra.mxu0 %v356
        %1436 = vmatprep.subr.mxu0 0.0
        %1437 = vmatpush1.msra.mxu0 %v357
        %1438 = vmatprep.subr.mxu0 0.0
        %1439 = vmatpush1.msra.mxu0 %v358
        %1440 = vmatprep.subr.mxu0 0.0
        %1441 = vmatpush1.msra.mxu0 %v359
        %1442 = vmatprep.subr.mxu0 0.0
        %1443 = vmatpush1.msra.mxu0 %v360
        %1444 = vmatprep.subr.mxu0 0.0
        %1445 = vmatpush1.msra.mxu0 %v361
        %1446 = vmatprep.subr.mxu0 0.0
        %1447 = vmatpush1.msra.mxu0 %v362
        %1448 = vmatprep.subr.mxu0 0.0
        %1449 = vmatpush1.msra.mxu0 0.0
        %1450 = vmatprep.subr.mxu0 0.0
        %1451 = vmatpush1.msra.mxu0 0.0
        %1452 = vmatprep.subr.mxu0 0.0
        %1453 = vmatpush1.msra.mxu0 0.0
        %1454 = vmatprep.subr.mxu0 0.0
        %1455 = vmatpush1.msra.mxu0 0.0
        %1456 = vmatprep.subr.mxu0 0.0
        %1457 = vmatpush1.msra.mxu0 0.0
        %1458 = vmatprep.subr.mxu0 0.0
        %1459 = vmatpush1.msra.mxu0 0.0
        %1460 = vmatprep.subr.mxu0 0.0
        %1461 = vmatpush1.msra.mxu0 0.0
        %1462 = vmatprep.subr.mxu0 0.0
        %1463 = vmatpush1.msra.mxu0 0.0
        %1464 = vmatprep.subr.mxu0 0.0
        %1465 = vmatpush1.msra.mxu0 0.0
        %1466 = vmatprep.subr.mxu0 0.0
        %1467 = vmatpush1.msra.mxu0 0.0
        %1468 = vmatprep.subr.mxu0 0.0
        %1469 = vmatpush1.msra.mxu0 0.0
        %1470 = vmatprep.subr.mxu0 0.0
        %1471 = vmatpush1.msra.mxu0 0.0
        %1472 = vmatprep.subr.mxu0 0.0
        %1473 = vmatpush1.msra.mxu0 0.0
        %1474 = vmatprep.subr.mxu0 0.0
        %1475 = vmatpush1.msra.mxu0 0.0
        %1476 = vmatprep.subr.mxu0 0.0
        %1477 = vmatpush1.msra.mxu0 0.0
        %1478 = vmatprep.subr.mxu0 0.0
        %1479 = vmatpush1.msra.mxu0 0.0
        %1480 = vmatprep.subr.mxu0 0.0
        %1481 = vmatpush1.msra.mxu0 0.0
        %1482 = vmatprep.subr.mxu0 0.0
        %1483 = vmatpush1.msra.mxu0 0.0
        %1484 = vmatprep.subr.mxu0 0.0
        %1485 = vmatpush1.msra.mxu0 0.0
        %1486 = vmatprep.subr.mxu0 0.0
        %1487 = vmatpush1.msra.mxu0 0.0
        %1488 = vmatprep.subr.mxu0 0.0
        %1489 = vmatpush1.msra.mxu0 0.0
        %1490 = vmatprep.subr.mxu0 0.0
        %1491 = vmatpush1.msra.mxu0 0.0
        %1492 = vmatprep.subr.mxu0 0.0
        %1493 = vmatpush1.msra.mxu0 0.0
        %1494 = vmatprep.subr.mxu0 0.0
        %1495 = vmatpush1.msra.mxu0 0.0
        %1496 = vmatprep.mubr.f32.mxu0 0.0
        %1497 = vmatmul.mubr.f32.gmra.mrb[0].mxu0 %v1430
        %v1498 = vpop.f32.mrb[0].mxu0
        %v1499 = vadd.f32 %v876, %v1498
        %v1500 = vpop.f32.mrb[0].mxu0
        %1501 = vdwg.mxu0
        %v1502 = vadd.f32 %v1499, %v954
        %1503 = vrot.lane.b32.xlu0 %v370, 64
        %v1504 = vpop.permute.xlu0 %1503
        %v1506 = vsel %vm371, %v1504, 0.0
        %1507 = vadd.xlane.f32.xlu0 %v1506
        %v1508 = vpop.xlane.xlu0 %1507
        %v1509 = vmul.f32 %v1508, %v375
        %v1510 = vsub.f32 %v370, %v1509
        %v1511 = vmul.f32 %v1510, %v1510
        %1513 = vrot.lane.b32.xlu0 %v1511, 64
        %v1514 = vpop.permute.xlu0 %1513
        %v1516 = vsel %vm371, %v1514, 0.0
        %1517 = vadd.xlane.f32.xlu0 %v1516
        %v1518 = vpop.xlane.xlu0 %1517
        %v1519 = vmul.f32 %v1518, %v375
        %v1520 = vadd.f32 %v1519, 1e-05
        %v1521 = vrsqrt.pop %v1520
        %v1522 = vmul.f32 %v1510, %v1521
        %1523 = vrot.lane.b32.xlu0 %v389, 64
        %v1524 = vpop.permute.xlu0 %1523
        %v1526 = vmul.f32 %v1522, %v1524
        %1527 = vrot.lane.b32.xlu0 %v394, 64
        %v1528 = vpop.permute.xlu0 %1527
        %v1530 = vadd.f32 %v1526, %v1528
        %1531 = vmatprep.subr.mxu0 0.0
        %1532 = vmatpush1.msra.mxu0 %v343
        %1533 = vmatprep.subr.mxu0 0.0
        %1534 = vmatpush1.msra.mxu0 %v344
        %1535 = vmatprep.subr.mxu0 0.0
        %1536 = vmatpush1.msra.mxu0 %v345
        %1537 = vmatprep.subr.mxu0 0.0
        %1538 = vmatpush1.msra.mxu0 %v346
        %1539 = vmatprep.subr.mxu0 0.0
        %1540 = vmatpush1.msra.mxu0 0.0
        %1541 = vmatprep.subr.mxu0 0.0
        %1542 = vmatpush1.msra.mxu0 0.0
        %1543 = vmatprep.subr.mxu0 0.0
        %1544 = vmatpush1.msra.mxu0 0.0
        %1545 = vmatprep.subr.mxu0 0.0
        %1546 = vmatpush1.msra.mxu0 0.0
        %1547 = vmatprep.subr.mxu0 0.0
        %1548 = vmatpush1.msra.mxu0 0.0
        %1549 = vmatprep.subr.mxu0 0.0
        %1550 = vmatpush1.msra.mxu0 0.0
        %1551 = vmatprep.subr.mxu0 0.0
        %1552 = vmatpush1.msra.mxu0 0.0
        %1553 = vmatprep.subr.mxu0 0.0
        %1554 = vmatpush1.msra.mxu0 0.0
        %1555 = vmatprep.subr.mxu0 0.0
        %1556 = vmatpush1.msra.mxu0 0.0
        %1557 = vmatprep.subr.mxu0 0.0
        %1558 = vmatpush1.msra.mxu0 0.0
        %1559 = vmatprep.subr.mxu0 0.0
        %1560 = vmatpush1.msra.mxu0 0.0
        %1561 = vmatprep.subr.mxu0 0.0
        %1562 = vmatpush1.msra.mxu0 0.0
        %1563 = vmatprep.subr.mxu0 0.0
        %1564 = vmatpush1.msra.mxu0 0.0
        %1565 = vmatprep.subr.mxu0 0.0
        %1566 = vmatpush1.msra.mxu0 0.0
        %1567 = vmatprep.subr.mxu0 0.0
        %1568 = vmatpush1.msra.mxu0 0.0
        %1569 = vmatprep.subr.mxu0 0.0
        %1570 = vmatpush1.msra.mxu0 0.0
        %1571 = vmatprep.subr.mxu0 0.0
        %1572 = vmatpush1.msra.mxu0 0.0
        %1573 = vmatprep.subr.mxu0 0.0
        %1574 = vmatpush1.msra.mxu0 0.0
        %1575 = vmatprep.subr.mxu0 0.0
        %1576 = vmatpush1.msra.mxu0 0.0
        %1577 = vmatprep.subr.mxu0 0.0
        %1578 = vmatpush1.msra.mxu0 0.0
        %1579 = vmatprep.subr.mxu0 0.0
        %1580 = vmatpush1.msra.mxu0 0.0
        %1581 = vmatprep.subr.mxu0 0.0
        %1582 = vmatpush1.msra.mxu0 0.0
        %1583 = vmatprep.subr.mxu0 0.0
        %1584 = vmatpush1.msra.mxu0 0.0
        %1585 = vmatprep.subr.mxu0 0.0
        %1586 = vmatpush1.msra.mxu0 0.0
        %1587 = vmatprep.subr.mxu0 0.0
        %1588 = vmatpush1.msra.mxu0 0.0
        %1589 = vmatprep.subr.mxu0 0.0
        %1590 = vmatpush1.msra.mxu0 0.0
        %1591 = vmatprep.subr.mxu0 0.0
        %1592 = vmatpush1.msra.mxu0 0.0
        %1593 = vmatprep.subr.mxu0 0.0
        %1594 = vmatpush1.msra.mxu0 0.0
        %1595 = vmatprep.mubr.f32.mxu0 0.0
        %1596 = vmatmul.mubr.f32.gmra.mrb[0].mxu0 %v1183
        %v1597 = vpop.f32.mrb[0].mxu0
        %v1598 = vadd.f32 0.0, %v1597
        %v1599 = vpop.f32.mrb[0].mxu0
        %1600 = vdwg.mxu0
        %1602 = vrot.lane.b32.xlu0 %v1530, 64
        %v1603 = vpop.permute.xlu0 %1602
        %v1604 = vsel %vm371, %v1603, 0
        %1606 = vmatprep.subr.mxu0 0.0
        %1607 = vmatpush1.msra.mxu0 %v339
        %1608 = vmatprep.subr.mxu0 0.0
        %1609 = vmatpush1.msra.mxu0 %v340
        %1610 = vmatprep.subr.mxu0 0.0
        %1611 = vmatpush1.msra.mxu0 %v341
        %1612 = vmatprep.subr.mxu0 0.0
        %1613 = vmatpush1.msra.mxu0 %v342
        %1614 = vmatprep.subr.mxu0 0.0
        %1615 = vmatpush1.msra.mxu0 0.0
        %1616 = vmatprep.subr.mxu0 0.0
        %1617 = vmatpush1.msra.mxu0 0.0
        %1618 = vmatprep.subr.mxu0 0.0
        %1619 = vmatpush1.msra.mxu0 0.0
        %1620 = vmatprep.subr.mxu0 0.0
        %1621 = vmatpush1.msra.mxu0 0.0
        %1622 = vmatprep.subr.mxu0 0.0
        %1623 = vmatpush1.msra.mxu0 0.0
        %1624 = vmatprep.subr.mxu0 0.0
        %1625 = vmatpush1.msra.mxu0 0.0
        %1626 = vmatprep.subr.mxu0 0.0
        %1627 = vmatpush1.msra.mxu0 0.0
        %1628 = vmatprep.subr.mxu0 0.0
        %1629 = vmatpush1.msra.mxu0 0.0
        %1630 = vmatprep.subr.mxu0 0.0
        %1631 = vmatpush1.msra.mxu0 0.0
        %1632 = vmatprep.subr.mxu0 0.0
        %1633 = vmatpush1.msra.mxu0 0.0
        %1634 = vmatprep.subr.mxu0 0.0
        %1635 = vmatpush1.msra.mxu0 0.0
        %1636 = vmatprep.subr.mxu0 0.0
        %1637 = vmatpush1.msra.mxu0 0.0
        %1638 = vmatprep.subr.mxu0 0.0
        %1639 = vmatpush1.msra.mxu0 0.0
        %1640 = vmatprep.subr.mxu0 0.0
        %1641 = vmatpush1.msra.mxu0 0.0
        %1642 = vmatprep.subr.mxu0 0.0
        %1643 = vmatpush1.msra.mxu0 0.0
        %1644 = vmatprep.subr.mxu0 0.0
        %1645 = vmatpush1.msra.mxu0 0.0
        %1646 = vmatprep.subr.mxu0 0.0
        %1647 = vmatpush1.msra.mxu0 0.0
        %1648 = vmatprep.subr.mxu0 0.0
        %1649 = vmatpush1.msra.mxu0 0.0
        %1650 = vmatprep.subr.mxu0 0.0
        %1651 = vmatpush1.msra.mxu0 0.0
        %1652 = vmatprep.subr.mxu0 0.0
        %1653 = vmatpush1.msra.mxu0 0.0
        %1654 = vmatprep.subr.mxu0 0.0
        %1655 = vmatpush1.msra.mxu0 0.0
        %1656 = vmatprep.subr.mxu0 0.0
        %1657 = vmatpush1.msra.mxu0 0.0
        %1658 = vmatprep.subr.mxu0 0.0
        %1659 = vmatpush1.msra.mxu0 0.0
        %1660 = vmatprep.subr.mxu0 0.0
        %1661 = vmatpush1.msra.mxu0 0.0
        %1662 = vmatprep.subr.mxu0 0.0
        %1663 = vmatpush1.msra.mxu0 0.0
        %1664 = vmatprep.subr.mxu0 0.0
        %1665 = vmatpush1.msra.mxu0 0.0
        %1666 = vmatprep.subr.mxu0 0.0
        %1667 = vmatpush1.msra.mxu0 0.0
        %1668 = vmatprep.subr.mxu0 0.0
        %1669 = vmatpush1.msra.mxu0 0.0
        %1670 = vmatprep.mubr.f32.mxu0 0.0
        %1671 = vmatmul.mubr.f32.gmra.mrb[0].mxu0 %v1604
        %v1672 = vpop.f32.mrb[0].mxu0
        %v1673 = vadd.f32 %v1598, %v1672
        %v1674 = vpop.f32.mrb[0].mxu0
        %1675 = vdwg.mxu0
        %v1676 = vadd.f32 %v1673, %v547
        %v1677 = vadd.f32 %v1676, %v1134
        %1679 = vrot.lane.b32.xlu0 %v1676, 32
        %v1680 = vpop.permute.xlu0 %1679
        %v1682 = vmax.f32 %v1677, %v1680
        %1684 = vrot.lane.b32.xlu0 %v1682, 96
        %v1685 = vpop.permute.xlu0 %1684
        %v1687 = vsub.f32 %v1676, %v1685
        %v1688 = vmul.f32 %v1687, 1.442695
        %v1689 = vpow.pop %v1688
        %v1690 = vsub.f32 %v1676, %v1682
        %v1691 = vadd.f32 %v1690, %v1134
        %v1692 = vmul.f32 %v1691, 1.442695
        %v1693 = vpow.pop %v1692
        %v1694 = vtanh.pop %v1676
        %v1695 = vxor.u32 %v1676, 2147483648
        %v1696 = vmul.f32 %v1695, 1.442695
        %v1697 = vpow.pop %v1696
        %v1698 = vadd.f32 %v1697, 1.0
        %v1699 = vrcp.pop %v1698
        %v1700 = vmul.f32 1.0, %v1699
        %v1701 = vmul.f32 %v1693, %v1163
        %1703 = vrot.lane.b32.xlu0 %v1694, 64
        %v1704 = vpop.permute.xlu0 %1703
        %v1706 = vmul.f32 %v1689, %v1704
        %1708 = vrot.lane.b32.xlu0 %v1706, 32
        %v1709 = vpop.permute.xlu0 %1708
        %v1711 = vadd.f32 %v1701, %v1709
        %v1712 = vmul.f32 %v1693, %v1169
        %1714 = vrot.lane.b32.xlu0 %v1689, 32
        %v1715 = vpop.permute.xlu0 %1714
        %v1717 = vadd.f32 %v1712, %v1715
        %v1718 = vrcp.pop %v1717
        %v1719 = vmul.f32 %v1717, %v1718
        %v1720 = vsub.f32 2.0, %v1719
        %v1721 = vmul.f32 %v1718, %v1720
        %v1722 = vmul.f32 %v1711, %v1721
        %1724 = vrot.lane.b32.xlu0 %v1722, 64
        %v1725 = vpop.permute.xlu0 %1724
        %v1727 = vmul.f32 %v1700, %v1725
        %1729 = vrot.lane.b32.xlu0 %v1727, 32
        %v1730 = vpop.permute.xlu0 %1729
        %v1731 = vsel %vm371, %v1730, 0
        %1733 = vmatprep.subr.mxu0 0.0
        %1734 = vmatpush1.msra.mxu0 %v351
        %1735 = vmatprep.subr.mxu0 0.0
        %1736 = vmatpush1.msra.mxu0 %v352
        %1737 = vmatprep.subr.mxu0 0.0
        %1738 = vmatpush1.msra.mxu0 %v353
        %1739 = vmatprep.subr.mxu0 0.0
        %1740 = vmatpush1.msra.mxu0 %v354
        %1741 = vmatprep.subr.mxu0 0.0
        %1742 = vmatpush1.msra.mxu0 0.0
        %1743 = vmatprep.subr.mxu0 0.0
        %1744 = vmatpush1.msra.mxu0 0.0
        %1745 = vmatprep.subr.mxu0 0.0
        %1746 = vmatpush1.msra.mxu0 0.0
        %1747 = vmatprep.subr.mxu0 0.0
        %1748 = vmatpush1.msra.mxu0 0.0
        %1749 = vmatprep.subr.mxu0 0.0
        %1750 = vmatpush1.msra.mxu0 0.0
        %1751 = vmatprep.subr.mxu0 0.0
        %1752 = vmatpush1.msra.mxu0 0.0
        %1753 = vmatprep.subr.mxu0 0.0
        %1754 = vmatpush1.msra.mxu0 0.0
        %1755 = vmatprep.subr.mxu0 0.0
        %1756 = vmatpush1.msra.mxu0 0.0
        %1757 = vmatprep.subr.mxu0 0.0
        %1758 = vmatpush1.msra.mxu0 0.0
        %1759 = vmatprep.subr.mxu0 0.0
        %1760 = vmatpush1.msra.mxu0 0.0
        %1761 = vmatprep.subr.mxu0 0.0
        %1762 = vmatpush1.msra.mxu0 0.0
        %1763 = vmatprep.subr.mxu0 0.0
        %1764 = vmatpush1.msra.mxu0 0.0
        %1765 = vmatprep.subr.mxu0 0.0
        %1766 = vmatpush1.msra.mxu0 0.0
        %1767 = vmatprep.subr.mxu0 0.0
        %1768 = vmatpush1.msra.mxu0 0.0
        %1769 = vmatprep.subr.mxu0 0.0
        %1770 = vmatpush1.msra.mxu0 0.0
        %1771 = vmatprep.subr.mxu0 0.0
        %1772 = vmatpush1.msra.mxu0 0.0
        %1773 = vmatprep.subr.mxu0 0.0
        %1774 = vmatpush1.msra.mxu0 0.0
        %1775 = vmatprep.subr.mxu0 0.0
        %1776 = vmatpush1.msra.mxu0 0.0
        %1777 = vmatprep.subr.mxu0 0.0
        %1778 = vmatpush1.msra.mxu0 0.0
        %1779 = vmatprep.subr.mxu0 0.0
        %1780 = vmatpush1.msra.mxu0 0.0
        %1781 = vmatprep.subr.mxu0 0.0
        %1782 = vmatpush1.msra.mxu0 0.0
        %1783 = vmatprep.subr.mxu0 0.0
        %1784 = vmatpush1.msra.mxu0 0.0
        %1785 = vmatprep.subr.mxu0 0.0
        %1786 = vmatpush1.msra.mxu0 0.0
        %1787 = vmatprep.subr.mxu0 0.0
        %1788 = vmatpush1.msra.mxu0 0.0
        %1789 = vmatprep.subr.mxu0 0.0
        %1790 = vmatpush1.msra.mxu0 0.0
        %1791 = vmatprep.subr.mxu0 0.0
        %1792 = vmatpush1.msra.mxu0 0.0
        %1793 = vmatprep.subr.mxu0 0.0
        %1794 = vmatpush1.msra.mxu0 0.0
        %1795 = vmatprep.subr.mxu0 0.0
        %1796 = vmatpush1.msra.mxu0 0.0
        %1797 = vmatprep.mubr.f32.mxu0 0.0
        %1798 = vmatmul.mubr.f32.gmra.mrb[0].mxu0 %v1731
        %v1799 = vpop.f32.mrb[0].mxu0
        %v1800 = vadd.f32 0.0, %v1799
        %v1801 = vpop.f32.mrb[0].mxu0
        %1802 = vdwg.mxu0
        %1804 = vrot.lane.b32.xlu0 %v1800, 96
        %v1805 = vpop.permute.xlu0 %1804
        %v1807 = vsub.f32 %v1727, %v1805
        %v1808 = vmul.f32 %v1807, %v1807
        %1810 = vrot.lane.b32.xlu0 %v1808, 32
        %v1811 = vpop.permute.xlu0 %1810
        %v1812 = vsel %vm371, %v1811, 0
        %1814 = vmatprep.subr.mxu0 0.0
        %1815 = vmatpush1.msra.mxu0 %v351
        %1816 = vmatprep.subr.mxu0 0.0
        %1817 = vmatpush1.msra.mxu0 %v352
        %1818 = vmatprep.subr.mxu0 0.0
        %1819 = vmatpush1.msra.mxu0 %v353
        %1820 = vmatprep.subr.mxu0 0.0
        %1821 = vmatpush1.msra.mxu0 %v354
        %1822 = vmatprep.subr.mxu0 0.0
        %1823 = vmatpush1.msra.mxu0 0.0
        %1824 = vmatprep.subr.mxu0 0.0
        %1825 = vmatpush1.msra.mxu0 0.0
        %1826 = vmatprep.subr.mxu0 0.0
        %1827 = vmatpush1.msra.mxu0 0.0
        %1828 = vmatprep.subr.mxu0 0.0
        %1829 = vmatpush1.msra.mxu0 0.0
        %1830 = vmatprep.subr.mxu0 0.0
        %1831 = vmatpush1.msra.mxu0 0.0
        %1832 = vmatprep.subr.mxu0 0.0
        %1833 = vmatpush1.msra.mxu0 0.0
        %1834 = vmatprep.subr.mxu0 0.0
        %1835 = vmatpush1.msra.mxu0 0.0
        %1836 = vmatprep.subr.mxu0 0.0
        %1837 = vmatpush1.msra.mxu0 0.0
        %1838 = vmatprep.subr.mxu0 0.0
        %1839 = vmatpush1.msra.mxu0 0.0
        %1840 = vmatprep.subr.mxu0 0.0
        %1841 = vmatpush1.msra.mxu0 0.0
        %1842 = vmatprep.subr.mxu0 0.0
        %1843 = vmatpush1.msra.mxu0 0.0
        %1844 = vmatprep.subr.mxu0 0.0
        %1845 = vmatpush1.msra.mxu0 0.0
        %1846 = vmatprep.subr.mxu0 0.0
        %1847 = vmatpush1.msra.mxu0 0.0
        %1848 = vmatprep.subr.mxu0 0.0
        %1849 = vmatpush1.msra.mxu0 0.0
        %1850 = vmatprep.subr.mxu0 0.0
        %1851 = vmatpush1.msra.mxu0 0.0
        %1852 = vmatprep.subr.mxu0 0.0
        %1853 = vmatpush1.msra.mxu0 0.0
        %1854 = vmatprep.subr.mxu0 0.0
        %1855 = vmatpush1.msra.mxu0 0.0
        %1856 = vmatprep.subr.mxu0 0.0
        %1857 = vmatpush1.msra.mxu0 0.0
        %1858 = vmatprep.subr.mxu0 0.0
        %1859 = vmatpush1.msra.mxu0 0.0
        %1860 = vmatprep.subr.mxu0 0.0
        %1861 = vmatpush1.msra.mxu0 0.0
        %1862 = vmatprep.subr.mxu0 0.0
        %1863 = vmatpush1.msra.mxu0 0.0
        %1864 = vmatprep.subr.mxu0 0.0
        %1865 = vmatpush1.msra.mxu0 0.0
        %1866 = vmatprep.subr.mxu0 0.0
        %1867 = vmatpush1.msra.mxu0 0.0
        %1868 = vmatprep.subr.mxu0 0.0
        %1869 = vmatpush1.msra.mxu0 0.0
        %1870 = vmatprep.subr.mxu0 0.0
        %1871 = vmatpush1.msra.mxu0 0.0
        %1872 = vmatprep.subr.mxu0 0.0
        %1873 = vmatpush1.msra.mxu0 0.0
        %1874 = vmatprep.subr.mxu0 0.0
        %1875 = vmatpush1.msra.mxu0 0.0
        %1876 = vmatprep.subr.mxu0 0.0
        %1877 = vmatpush1.msra.mxu0 0.0
        %1878 = vmatprep.mubr.f32.mxu0 0.0
        %1879 = vmatmul.mubr.f32.gmra.mrb[0].mxu0 %v1812
        %v1880 = vpop.f32.mrb[0].mxu0
        %v1881 = vadd.f32 1e-05, %v1880
        %v1882 = vpop.f32.mrb[0].mxu0
        %1883 = vdwg.mxu0
        %v1884 = vrsqrt.pop %v1881
        %1886 = vrot.lane.b32.xlu0 %v1884, 96
        %v1887 = vpop.permute.xlu0 %1886
        %v1889 = vmul.f32 %v1807, %v1887
        %v1890 = vmul.f32 %v1889, %v772
        %v1891 = vadd.f32 %v1890, %v781
        %1893 = vrot.lane.b32.xlu0 %v1891, 32
        %v1894 = vpop.permute.xlu0 %1893
        %v1895 = vsel %vm371, %v1894, 0
        %1897 = vmatprep.subr.mxu0 0.0
        %1898 = vmatpush1.msra.mxu0 %v347
        %1899 = vmatprep.subr.mxu0 0.0
        %1900 = vmatpush1.msra.mxu0 %v348
        %1901 = vmatprep.subr.mxu0 0.0
        %1902 = vmatpush1.msra.mxu0 %v349
        %1903 = vmatprep.subr.mxu0 0.0
        %1904 = vmatpush1.msra.mxu0 %v350
        %1905 = vmatprep.subr.mxu0 0.0
        %1906 = vmatpush1.msra.mxu0 0.0
        %1907 = vmatprep.subr.mxu0 0.0
        %1908 = vmatpush1.msra.mxu0 0.0
        %1909 = vmatprep.subr.mxu0 0.0
        %1910 = vmatpush1.msra.mxu0 0.0
        %1911 = vmatprep.subr.mxu0 0.0
        %1912 = vmatpush1.msra.mxu0 0.0
        %1913 = vmatprep.subr.mxu0 0.0
        %1914 = vmatpush1.msra.mxu0 0.0
        %1915 = vmatprep.subr.mxu0 0.0
        %1916 = vmatpush1.msra.mxu0 0.0
        %1917 = vmatprep.subr.mxu0 0.0
        %1918 = vmatpush1.msra.mxu0 0.0
        %1919 = vmatprep.subr.mxu0 0.0
        %1920 = vmatpush1.msra.mxu0 0.0
        %1921 = vmatprep.subr.mxu0 0.0
        %1922 = vmatpush1.msra.mxu0 0.0
        %1923 = vmatprep.subr.mxu0 0.0
        %1924 = vmatpush1.msra.mxu0 0.0
        %1925 = vmatprep.subr.mxu0 0.0
        %1926 = vmatpush1.msra.mxu0 0.0
        %1927 = vmatprep.subr.mxu0 0.0
        %1928 = vmatpush1.msra.mxu0 0.0
        %1929 = vmatprep.subr.mxu0 0.0
        %1930 = vmatpush1.msra.mxu0 0.0
        %1931 = vmatprep.subr.mxu0 0.0
        %1932 = vmatpush1.msra.mxu0 0.0
        %1933 = vmatprep.subr.mxu0 0.0
        %1934 = vmatpush1.msra.mxu0 0.0
        %1935 = vmatprep.subr.mxu0 0.0
        %1936 = vmatpush1.msra.mxu0 0.0
        %1937 = vmatprep.subr.mxu0 0.0
        %1938 = vmatpush1.msra.mxu0 0.0
        %1939 = vmatprep.subr.mxu0 0.0
        %1940 = vmatpush1.msra.mxu0 0.0
        %1941 = vmatprep.subr.mxu0 0.0
        %1942 = vmatpush1.msra.mxu0 0.0
        %1943 = vmatprep.subr.mxu0 0.0
        %1944 = vmatpush1.msra.mxu0 0.0
        %1945 = vmatprep.subr.mxu0 0.0
        %1946 = vmatpush1.msra.mxu0 0.0
        %1947 = vmatprep.subr.mxu0 0.0
        %1948 = vmatpush1.msra.mxu0 0.0
        %1949 = vmatprep.subr.mxu0 0.0
        %1950 = vmatpush1.msra.mxu0 0.0
        %1951 = vmatprep.subr.mxu0 0.0
        %1952 = vmatpush1.msra.mxu0 0.0
        %1953 = vmatprep.subr.mxu0 0.0
        %1954 = vmatpush1.msra.mxu0 0.0
        %1955 = vmatprep.subr.mxu0 0.0
        %1956 = vmatpush1.msra.mxu0 0.0
        %1957 = vmatprep.subr.mxu0 0.0
        %1958 = vmatpush1.msra.mxu0 0.0
        %1959 = vmatprep.subr.mxu0 0.0
        %1960 = vmatpush1.msra.mxu0 0.0
        %1961 = vmatprep.mubr.f32.mxu0 0.0
        %1962 = vmatmul.mubr.f32.gmra.mrb[0].mxu0 %v1895
        %v1963 = vpop.f32.mrb[0].mxu0
        %v1964 = vadd.f32 %v787, %v1963
        %v1965 = vpop.f32.mrb[0].mxu0
        %1966 = vdwg.mxu0
        %v1967 = vmul.f32 %v1964, 0.5
        %v1968 = vmul.f32 %v1964, 0.70710677
        %v1969 = verf.f32.pop %v1968
        %v1970 = vadd.f32 %v1969, 1.0
        %v1971 = vmul.f32 %v1967, %v1970
        %1973 = vrot.lane.b32.xlu0 %v1971, 64
        %v1974 = vpop.permute.xlu0 %1973
        %v1976 = vadd.f32 %v1964, %v1974
        %v1978 = vsel %vm877, %v1976, 0
        %1980 = vmatprep.subr.mxu0 0.0
        %1981 = vmatpush1.msra.mxu0 %v355
        %1982 = vmatprep.subr.mxu0 0.0
        %1983 = vmatpush1.msra.mxu0 %v356
        %1984 = vmatprep.subr.mxu0 0.0
        %1985 = vmatpush1.msra.mxu0 %v357
        %1986 = vmatprep.subr.mxu0 0.0
        %1987 = vmatpush1.msra.mxu0 %v358
        %1988 = vmatprep.subr.mxu0 0.0
        %1989 = vmatpush1.msra.mxu0 %v359
        %1990 = vmatprep.subr.mxu0 0.0
        %1991 = vmatpush1.msra.mxu0 %v360
        %1992 = vmatprep.subr.mxu0 0.0
        %1993 = vmatpush1.msra.mxu0 %v361
        %1994 = vmatprep.subr.mxu0 0.0
        %1995 = vmatpush1.msra.mxu0 %v362
        %1996 = vmatprep.subr.mxu0 0.0
        %1997 = vmatpush1.msra.mxu0 0.0
        %1998 = vmatprep.subr.mxu0 0.0
        %1999 = vmatpush1.msra.mxu0 0.0
        %2000 = vmatprep.subr.mxu0 0.0
        %2001 = vmatpush1.msra.mxu0 0.0
        %2002 = vmatprep.subr.mxu0 0.0
        %2003 = vmatpush1.msra.mxu0 0.0
        %2004 = vmatprep.subr.mxu0 0.0
        %2005 = vmatpush1.msra.mxu0 0.0
        %2006 = vmatprep.subr.mxu0 0.0
        %2007 = vmatpush1.msra.mxu0 0.0
        %2008 = vmatprep.subr.mxu0 0.0
        %2009 = vmatpush1.msra.mxu0 0.0
        %2010 = vmatprep.subr.mxu0 0.0
        %2011 = vmatpush1.msra.mxu0 0.0
        %2012 = vmatprep.subr.mxu0 0.0
        %2013 = vmatpush1.msra.mxu0 0.0
        %2014 = vmatprep.subr.mxu0 0.0
        %2015 = vmatpush1.msra.mxu0 0.0
        %2016 = vmatprep.subr.mxu0 0.0
        %2017 = vmatpush1.msra.mxu0 0.0
        %2018 = vmatprep.subr.mxu0 0.0
        %2019 = vmatpush1.msra.mxu0 0.0
        %2020 = vmatprep.subr.mxu0 0.0
        %2021 = vmatpush1.msra.mxu0 0.0
        %2022 = vmatprep.subr.mxu0 0.0
        %2023 = vmatpush1.msra.mxu0 0.0
        %2024 = vmatprep.subr.mxu0 0.0
        %2025 = vmatpush1.msra.mxu0 0.0
        %2026 = vmatprep.subr.mxu0 0.0
        %2027 = vmatpush1.msra.mxu0 0.0
        %2028 = vmatprep.subr.mxu0 0.0
        %2029 = vmatpush1.msra.mxu0 0.0
        %2030 = vmatprep.subr.mxu0 0.0
        %2031 = vmatpush1.msra.mxu0 0.0
        %2032 = vmatprep.subr.mxu0 0.0
        %2033 = vmatpush1.msra.mxu0 0.0
        %2034 = vmatprep.subr.mxu0 0.0
        %2035 = vmatpush1.msra.mxu0 0.0
        %2036 = vmatprep.subr.mxu0 0.0
        %2037 = vmatpush1.msra.mxu0 0.0
        %2038 = vmatprep.subr.mxu0 0.0
        %2039 = vmatpush1.msra.mxu0 0.0
        %2040 = vmatprep.subr.mxu0 0.0
        %2041 = vmatpush1.msra.mxu0 0.0
        %2042 = vmatprep.subr.mxu0 0.0
        %2043 = vmatpush1.msra.mxu0 0.0
        %2044 = vmatprep.mubr.f32.mxu0 0.0
        %2045 = vmatmul.mubr.f32.gmra.mrb[0].mxu0 %v1978
        %v2046 = vpop.f32.mrb[0].mxu0
        %v2047 = vadd.f32 %v876, %v2046
        %v2048 = vpop.f32.mrb[0].mxu0
        %2049 = vdwg.mxu0
        %v2050 = vadd.f32 %v2047, %v1504
        %2051 = vrot.lane.b32.xlu0 %v370, 32
        %v2052 = vpop.permute.xlu0 %2051
        %v2054 = vsel %vm371, %v2052, 0.0
        %2055 = vadd.xlane.f32.xlu0 %v2054
        %v2056 = vpop.xlane.xlu0 %2055
        %v2057 = vmul.f32 %v2056, %v375
        %v2058 = vsub.f32 %v370, %v2057
        %v2059 = vmul.f32 %v2058, %v2058
        %2061 = vrot.lane.b32.xlu0 %v2059, 32
        %v2062 = vpop.permute.xlu0 %2061
        %v2064 = vsel %vm371, %v2062, 0.0
        %2065 = vadd.xlane.f32.xlu0 %v2064
        %v2066 = vpop.xlane.xlu0 %2065
        %v2067 = vmul.f32 %v2066, %v375
        %v2068 = vadd.f32 %v2067, 1e-05
        %v2069 = vrsqrt.pop %v2068
        %v2070 = vmul.f32 %v2058, %v2069
        %2071 = vrot.lane.b32.xlu0 %v389, 96
        %v2072 = vpop.permute.xlu0 %2071
        %v2074 = vmul.f32 %v2070, %v2072
        %2075 = vrot.lane.b32.xlu0 %v394, 96
        %v2076 = vpop.permute.xlu0 %2075
        %v2078 = vadd.f32 %v2074, %v2076
        %2079 = vmatprep.subr.mxu0 0.0
        %2080 = vmatpush1.msra.mxu0 %v343
        %2081 = vmatprep.subr.mxu0 0.0
        %2082 = vmatpush1.msra.mxu0 %v344
        %2083 = vmatprep.subr.mxu0 0.0
        %2084 = vmatpush1.msra.mxu0 %v345
        %2085 = vmatprep.subr.mxu0 0.0
        %2086 = vmatpush1.msra.mxu0 %v346
        %2087 = vmatprep.subr.mxu0 0.0
        %2088 = vmatpush1.msra.mxu0 0.0
        %2089 = vmatprep.subr.mxu0 0.0
        %2090 = vmatpush1.msra.mxu0 0.0
        %2091 = vmatprep.subr.mxu0 0.0
        %2092 = vmatpush1.msra.mxu0 0.0
        %2093 = vmatprep.subr.mxu0 0.0
        %2094 = vmatpush1.msra.mxu0 0.0
        %2095 = vmatprep.subr.mxu0 0.0
        %2096 = vmatpush1.msra.mxu0 0.0
        %2097 = vmatprep.subr.mxu0 0.0
        %2098 = vmatpush1.msra.mxu0 0.0
        %2099 = vmatprep.subr.mxu0 0.0
        %2100 = vmatpush1.msra.mxu0 0.0
        %2101 = vmatprep.subr.mxu0 0.0
        %2102 = vmatpush1.msra.mxu0 0.0
        %2103 = vmatprep.subr.mxu0 0.0
        %2104 = vmatpush1.msra.mxu0 0.0
        %2105 = vmatprep.subr.mxu0 0.0
        %2106 = vmatpush1.msra.mxu0 0.0
        %2107 = vmatprep.subr.mxu0 0.0
        %2108 = vmatpush1.msra.mxu0 0.0
        %2109 = vmatprep.subr.mxu0 0.0
        %2110 = vmatpush1.msra.mxu0 0.0
        %2111 = vmatprep.subr.mxu0 0.0
        %2112 = vmatpush1.msra.mxu0 0.0
        %2113 = vmatprep.subr.mxu0 0.0
        %2114 = vmatpush1.msra.mxu0 0.0
        %2115 = vmatprep.subr.mxu0 0.0
        %2116 = vmatpush1.msra.mxu0 0.0
        %2117 = vmatprep.subr.mxu0 0.0
        %2118 = vmatpush1.msra.mxu0 0.0
        %2119 = vmatprep.subr.mxu0 0.0
        %2120 = vmatpush1.msra.mxu0 0.0
        %2121 = vmatprep.subr.mxu0 0.0
        %2122 = vmatpush1.msra.mxu0 0.0
        %2123 = vmatprep.subr.mxu0 0.0
        %2124 = vmatpush1.msra.mxu0 0.0
        %2125 = vmatprep.subr.mxu0 0.0
        %2126 = vmatpush1.msra.mxu0 0.0
        %2127 = vmatprep.subr.mxu0 0.0
        %2128 = vmatpush1.msra.mxu0 0.0
        %2129 = vmatprep.subr.mxu0 0.0
        %2130 = vmatpush1.msra.mxu0 0.0
        %2131 = vmatprep.subr.mxu0 0.0
        %2132 = vmatpush1.msra.mxu0 0.0
        %2133 = vmatprep.subr.mxu0 0.0
        %2134 = vmatpush1.msra.mxu0 0.0
        %2135 = vmatprep.subr.mxu0 0.0
        %2136 = vmatpush1.msra.mxu0 0.0
        %2137 = vmatprep.subr.mxu0 0.0
        %2138 = vmatpush1.msra.mxu0 0.0
        %2139 = vmatprep.subr.mxu0 0.0
        %2140 = vmatpush1.msra.mxu0 0.0
        %2141 = vmatprep.subr.mxu0 0.0
        %2142 = vmatpush1.msra.mxu0 0.0
        %2143 = vmatprep.mubr.f32.mxu0 0.0
        %2144 = vmatmul.mubr.f32.gmra.mrb[0].mxu0 %v1731
        %v2145 = vpop.f32.mrb[0].mxu0
        %v2146 = vadd.f32 0.0, %v2145
        %v2147 = vpop.f32.mrb[0].mxu0
        %2148 = vdwg.mxu0
        %2150 = vrot.lane.b32.xlu0 %v2078, 32
        %v2151 = vpop.permute.xlu0 %2150
        %v2152 = vsel %vm371, %v2151, 0
        %2154 = vmatprep.subr.mxu0 0.0
        %2155 = vmatpush1.msra.mxu0 %v339
        %2156 = vmatprep.subr.mxu0 0.0
        %2157 = vmatpush1.msra.mxu0 %v340
        %2158 = vmatprep.subr.mxu0 0.0
        %2159 = vmatpush1.msra.mxu0 %v341
        %2160 = vmatprep.subr.mxu0 0.0
        %2161 = vmatpush1.msra.mxu0 %v342
        %2162 = vmatprep.subr.mxu0 0.0
        %2163 = vmatpush1.msra.mxu0 0.0
        %2164 = vmatprep.subr.mxu0 0.0
        %2165 = vmatpush1.msra.mxu0 0.0
        %2166 = vmatprep.subr.mxu0 0.0
        %2167 = vmatpush1.msra.mxu0 0.0
        %2168 = vmatprep.subr.mxu0 0.0
        %2169 = vmatpush1.msra.mxu0 0.0
        %2170 = vmatprep.subr.mxu0 0.0
        %2171 = vmatpush1.msra.mxu0 0.0
        %2172 = vmatprep.subr.mxu0 0.0
        %2173 = vmatpush1.msra.mxu0 0.0
        %2174 = vmatprep.subr.mxu0 0.0
        %2175 = vmatpush1.msra.mxu0 0.0
        %2176 = vmatprep.subr.mxu0 0.0
        %2177 = vmatpush1.msra.mxu0 0.0
        %2178 = vmatprep.subr.mxu0 0.0
        %2179 = vmatpush1.msra.mxu0 0.0
        %2180 = vmatprep.subr.mxu0 0.0
        %2181 = vmatpush1.msra.mxu0 0.0
        %2182 = vmatprep.subr.mxu0 0.0
        %2183 = vmatpush1.msra.mxu0 0.0
        %2184 = vmatprep.subr.mxu0 0.0
        %2185 = vmatpush1.msra.mxu0 0.0
        %2186 = vmatprep.subr.mxu0 0.0
        %2187 = vmatpush1.msra.mxu0 0.0
        %2188 = vmatprep.subr.mxu0 0.0
        %2189 = vmatpush1.msra.mxu0 0.0
        %2190 = vmatprep.subr.mxu0 0.0
        %2191 = vmatpush1.msra.mxu0 0.0
        %2192 = vmatprep.subr.mxu0 0.0
        %2193 = vmatpush1.msra.mxu0 0.0
        %2194 = vmatprep.subr.mxu0 0.0
        %2195 = vmatpush1.msra.mxu0 0.0
        %2196 = vmatprep.subr.mxu0 0.0
        %2197 = vmatpush1.msra.mxu0 0.0
        %2198 = vmatprep.subr.mxu0 0.0
        %2199 = vmatpush1.msra.mxu0 0.0
        %2200 = vmatprep.subr.mxu0 0.0
        %2201 = vmatpush1.msra.mxu0 0.0
        %2202 = vmatprep.subr.mxu0 0.0
        %2203 = vmatpush1.msra.mxu0 0.0
        %2204 = vmatprep.subr.mxu0 0.0
        %2205 = vmatpush1.msra.mxu0 0.0
        %2206 = vmatprep.subr.mxu0 0.0
        %2207 = vmatpush1.msra.mxu0 0.0
        %2208 = vmatprep.subr.mxu0 0.0
        %2209 = vmatpush1.msra.mxu0 0.0
        %2210 = vmatprep.subr.mxu0 0.0
        %2211 = vmatpush1.msra.mxu0 0.0
        %2212 = vmatprep.subr.mxu0 0.0
        %2213 = vmatpush1.msra.mxu0 0.0
        %2214 = vmatprep.subr.mxu0 0.0
        %2215 = vmatpush1.msra.mxu0 0.0
        %2216 = vmatprep.subr.mxu0 0.0
        %2217 = vmatpush1.msra.mxu0 0.0
        %2218 = vmatprep.mubr.f32.mxu0 0.0
        %2219 = vmatmul.mubr.f32.gmra.mrb[0].mxu0 %v2152
        %v2220 = vpop.f32.mrb[0].mxu0
        %v2221 = vadd.f32 %v2146, %v2220
        %v2222 = vpop.f32.mrb[0].mxu0
        %2223 = vdwg.mxu0
        %v2224 = vadd.f32 %v2221, %v547
        %v2225 = vadd.f32 %v2224, %v1682
        %2227 = vrot.lane.b32.xlu0 %v2224, 32
        %v2228 = vpop.permute.xlu0 %2227
        %v2230 = vmax.f32 %v2225, %v2228
        %2232 = vrot.lane.b32.xlu0 %v2230, 96
        %v2233 = vpop.permute.xlu0 %2232
        %v2235 = vsub.f32 %v2224, %v2233
        %v2236 = vmul.f32 %v2235, 1.442695
        %v2237 = vpow.pop %v2236
        %v2238 = vsub.f32 %v2224, %v2230
        %v2239 = vadd.f32 %v2238, %v1682
        %v2240 = vmul.f32 %v2239, 1.442695
        %v2241 = vpow.pop %v2240
        %v2242 = vtanh.pop %v2224
        %v2243 = vxor.u32 %v2224, 2147483648
        %v2244 = vmul.f32 %v2243, 1.442695
        %v2245 = vpow.pop %v2244
        %v2246 = vadd.f32 %v2245, 1.0
        %v2247 = vrcp.pop %v2246
        %v2248 = vmul.f32 1.0, %v2247
        %v2249 = vmul.f32 %v2241, %v1711
        %2251 = vrot.lane.b32.xlu0 %v2242, 64
        %v2252 = vpop.permute.xlu0 %2251
        %v2254 = vmul.f32 %v2237, %v2252
        %2256 = vrot.lane.b32.xlu0 %v2254, 32
        %v2257 = vpop.permute.xlu0 %2256
        %v2259 = vadd.f32 %v2249, %v2257
        %v2260 = vmul.f32 %v2241, %v1717
        %2262 = vrot.lane.b32.xlu0 %v2237, 32
        %v2263 = vpop.permute.xlu0 %2262
        %v2265 = vadd.f32 %v2260, %v2263
        %v2266 = vrcp.pop %v2265
        %v2267 = vmul.f32 %v2265, %v2266
        %v2268 = vsub.f32 2.0, %v2267
        %v2269 = vmul.f32 %v2266, %v2268
        %v2270 = vmul.f32 %v2259, %v2269
        %2272 = vrot.lane.b32.xlu0 %v2270, 64
        %v2273 = vpop.permute.xlu0 %2272
        %v2275 = vmul.f32 %v2248, %v2273
        %2277 = vrot.lane.b32.xlu0 %v2275, 32
        %v2278 = vpop.permute.xlu0 %2277
        %v2279 = vsel %vm371, %v2278, 0
        %2281 = vmatprep.subr.mxu0 0.0
        %2282 = vmatpush1.msra.mxu0 %v351
        %2283 = vmatprep.subr.mxu0 0.0
        %2284 = vmatpush1.msra.mxu0 %v352
        %2285 = vmatprep.subr.mxu0 0.0
        %2286 = vmatpush1.msra.mxu0 %v353
        %2287 = vmatprep.subr.mxu0 0.0
        %2288 = vmatpush1.msra.mxu0 %v354
        %2289 = vmatprep.subr.mxu0 0.0
        %2290 = vmatpush1.msra.mxu0 0.0
        %2291 = vmatprep.subr.mxu0 0.0
        %2292 = vmatpush1.msra.mxu0 0.0
        %2293 = vmatprep.subr.mxu0 0.0
        %2294 = vmatpush1.msra.mxu0 0.0
        %2295 = vmatprep.subr.mxu0 0.0
        %2296 = vmatpush1.msra.mxu0 0.0
        %2297 = vmatprep.subr.mxu0 0.0
        %2298 = vmatpush1.msra.mxu0 0.0
        %2299 = vmatprep.subr.mxu0 0.0
        %2300 = vmatpush1.msra.mxu0 0.0
        %2301 = vmatprep.subr.mxu0 0.0
        %2302 = vmatpush1.msra.mxu0 0.0
        %2303 = vmatprep.subr.mxu0 0.0
        %2304 = vmatpush1.msra.mxu0 0.0
        %2305 = vmatprep.subr.mxu0 0.0
        %2306 = vmatpush1.msra.mxu0 0.0
        %2307 = vmatprep.subr.mxu0 0.0
        %2308 = vmatpush1.msra.mxu0 0.0
        %2309 = vmatprep.subr.mxu0 0.0
        %2310 = vmatpush1.msra.mxu0 0.0
        %2311 = vmatprep.subr.mxu0 0.0
        %2312 = vmatpush1.msra.mxu0 0.0
        %2313 = vmatprep.subr.mxu0 0.0
        %2314 = vmatpush1.msra.mxu0 0.0
        %2315 = vmatprep.subr.mxu0 0.0
        %2316 = vmatpush1.msra.mxu0 0.0
        %2317 = vmatprep.subr.mxu0 0.0
        %2318 = vmatpush1.msra.mxu0 0.0
        %2319 = vmatprep.subr.mxu0 0.0
        %2320 = vmatpush1.msra.mxu0 0.0
        %2321 = vmatprep.subr.mxu0 0.0
        %2322 = vmatpush1.msra.mxu0 0.0
        %2323 = vmatprep.subr.mxu0 0.0
        %2324 = vmatpush1.msra.mxu0 0.0
        %2325 = vmatprep.subr.mxu0 0.0
        %2326 = vmatpush1.msra.mxu0 0.0
        %2327 = vmatprep.subr.mxu0 0.0
        %2328 = vmatpush1.msra.mxu0 0.0
        %2329 = vmatprep.subr.mxu0 0.0
        %2330 = vmatpush1.msra.mxu0 0.0
        %2331 = vmatprep.subr.mxu0 0.0
        %2332 = vmatpush1.msra.mxu0 0.0
        %2333 = vmatprep.subr.mxu0 0.0
        %2334 = vmatpush1.msra.mxu0 0.0
        %2335 = vmatprep.subr.mxu0 0.0
        %2336 = vmatpush1.msra.mxu0 0.0
        %2337 = vmatprep.subr.mxu0 0.0
        %2338 = vmatpush1.msra.mxu0 0.0
        %2339 = vmatprep.subr.mxu0 0.0
        %2340 = vmatpush1.msra.mxu0 0.0
        %2341 = vmatprep.subr.mxu0 0.0
        %2342 = vmatpush1.msra.mxu0 0.0
        %2343 = vmatprep.subr.mxu0 0.0
        %2344 = vmatpush1.msra.mxu0 0.0
        %2345 = vmatprep.mubr.f32.mxu0 0.0
        %2346 = vmatmul.mubr.f32.gmra.mrb[0].mxu0 %v2279
        %v2347 = vpop.f32.mrb[0].mxu0
        %v2348 = vadd.f32 0.0, %v2347
        %v2349 = vpop.f32.mrb[0].mxu0
        %2350 = vdwg.mxu0
        %2352 = vrot.lane.b32.xlu0 %v2348, 96
        %v2353 = vpop.permute.xlu0 %2352
        %v2355 = vsub.f32 %v2275, %v2353
        %v2356 = vmul.f32 %v2355, %v2355
        %2358 = vrot.lane.b32.xlu0 %v2356, 32
        %v2359 = vpop.permute.xlu0 %2358
        %v2360 = vsel %vm371, %v2359, 0
        %2362 = vmatprep.subr.mxu0 0.0
        %2363 = vmatpush1.msra.mxu0 %v351
        %2364 = vmatprep.subr.mxu0 0.0
        %2365 = vmatpush1.msra.mxu0 %v352
        %2366 = vmatprep.subr.mxu0 0.0
        %2367 = vmatpush1.msra.mxu0 %v353
        %2368 = vmatprep.subr.mxu0 0.0
        %2369 = vmatpush1.msra.mxu0 %v354
        %2370 = vmatprep.subr.mxu0 0.0
        %2371 = vmatpush1.msra.mxu0 0.0
        %2372 = vmatprep.subr.mxu0 0.0
        %2373 = vmatpush1.msra.mxu0 0.0
        %2374 = vmatprep.subr.mxu0 0.0
        %2375 = vmatpush1.msra.mxu0 0.0
        %2376 = vmatprep.subr.mxu0 0.0
        %2377 = vmatpush1.msra.mxu0 0.0
        %2378 = vmatprep.subr.mxu0 0.0
        %2379 = vmatpush1.msra.mxu0 0.0
        %2380 = vmatprep.subr.mxu0 0.0
        %2381 = vmatpush1.msra.mxu0 0.0
        %2382 = vmatprep.subr.mxu0 0.0
        %2383 = vmatpush1.msra.mxu0 0.0
        %2384 = vmatprep.subr.mxu0 0.0
        %2385 = vmatpush1.msra.mxu0 0.0
        %2386 = vmatprep.subr.mxu0 0.0
        %2387 = vmatpush1.msra.mxu0 0.0
        %2388 = vmatprep.subr.mxu0 0.0
        %2389 = vmatpush1.msra.mxu0 0.0
        %2390 = vmatprep.subr.mxu0 0.0
        %2391 = vmatpush1.msra.mxu0 0.0
        %2392 = vmatprep.subr.mxu0 0.0
        %2393 = vmatpush1.msra.mxu0 0.0
        %2394 = vmatprep.subr.mxu0 0.0
        %2395 = vmatpush1.msra.mxu0 0.0
        %2396 = vmatprep.subr.mxu0 0.0
        %2397 = vmatpush1.msra.mxu0 0.0
        %2398 = vmatprep.subr.mxu0 0.0
        %2399 = vmatpush1.msra.mxu0 0.0
        %2400 = vmatprep.subr.mxu0 0.0
        %2401 = vmatpush1.msra.mxu0 0.0
        %2402 = vmatprep.subr.mxu0 0.0
        %2403 = vmatpush1.msra.mxu0 0.0
        %2404 = vmatprep.subr.mxu0 0.0
        %2405 = vmatpush1.msra.mxu0 0.0
        %2406 = vmatprep.subr.mxu0 0.0
        %2407 = vmatpush1.msra.mxu0 0.0
        %2408 = vmatprep.subr.mxu0 0.0
        %2409 = vmatpush1.msra.mxu0 0.0
        %2410 = vmatprep.subr.mxu0 0.0
        %2411 = vmatpush1.msra.mxu0 0.0
        %2412 = vmatprep.subr.mxu0 0.0
        %2413 = vmatpush1.msra.mxu0 0.0
        %2414 = vmatprep.subr.mxu0 0.0
        %2415 = vmatpush1.msra.mxu0 0.0
        %2416 = vmatprep.subr.mxu0 0.0
        %2417 = vmatpush1.msra.mxu0 0.0
        %2418 = vmatprep.subr.mxu0 0.0
        %2419 = vmatpush1.msra.mxu0 0.0
        %2420 = vmatprep.subr.mxu0 0.0
        %2421 = vmatpush1.msra.mxu0 0.0
        %2422 = vmatprep.subr.mxu0 0.0
        %2423 = vmatpush1.msra.mxu0 0.0
        %2424 = vmatprep.subr.mxu0 0.0
        %2425 = vmatpush1.msra.mxu0 0.0
        %2426 = vmatprep.mubr.f32.mxu0 0.0
        %2427 = vmatmul.mubr.f32.gmra.mrb[0].mxu0 %v2360
        %v2428 = vpop.f32.mrb[0].mxu0
        %v2429 = vadd.f32 1e-05, %v2428
        %v2430 = vpop.f32.mrb[0].mxu0
        %2431 = vdwg.mxu0
        %v2432 = vrsqrt.pop %v2429
        %2434 = vrot.lane.b32.xlu0 %v2432, 96
        %v2435 = vpop.permute.xlu0 %2434
        %v2437 = vmul.f32 %v2355, %v2435
        %v2438 = vmul.f32 %v2437, %v772
        %v2439 = vadd.f32 %v2438, %v781
        %2441 = vrot.lane.b32.xlu0 %v2439, 32
        %v2442 = vpop.permute.xlu0 %2441
        %v2443 = vsel %vm371, %v2442, 0
        %2445 = vmatprep.subr.mxu0 0.0
        %2446 = vmatpush1.msra.mxu0 %v347
        %2447 = vmatprep.subr.mxu0 0.0
        %2448 = vmatpush1.msra.mxu0 %v348
        %2449 = vmatprep.subr.mxu0 0.0
        %2450 = vmatpush1.msra.mxu0 %v349
        %2451 = vmatprep.subr.mxu0 0.0
        %2452 = vmatpush1.msra.mxu0 %v350
        %2453 = vmatprep.subr.mxu0 0.0
        %2454 = vmatpush1.msra.mxu0 0.0
        %2455 = vmatprep.subr.mxu0 0.0
        %2456 = vmatpush1.msra.mxu0 0.0
        %2457 = vmatprep.subr.mxu0 0.0
        %2458 = vmatpush1.msra.mxu0 0.0
        %2459 = vmatprep.subr.mxu0 0.0
        %2460 = vmatpush1.msra.mxu0 0.0
        %2461 = vmatprep.subr.mxu0 0.0
        %2462 = vmatpush1.msra.mxu0 0.0
        %2463 = vmatprep.subr.mxu0 0.0
        %2464 = vmatpush1.msra.mxu0 0.0
        %2465 = vmatprep.subr.mxu0 0.0
        %2466 = vmatpush1.msra.mxu0 0.0
        %2467 = vmatprep.subr.mxu0 0.0
        %2468 = vmatpush1.msra.mxu0 0.0
        %2469 = vmatprep.subr.mxu0 0.0
        %2470 = vmatpush1.msra.mxu0 0.0
        %2471 = vmatprep.subr.mxu0 0.0
        %2472 = vmatpush1.msra.mxu0 0.0
        %2473 = vmatprep.subr.mxu0 0.0
        %2474 = vmatpush1.msra.mxu0 0.0
        %2475 = vmatprep.subr.mxu0 0.0
        %2476 = vmatpush1.msra.mxu0 0.0
        %2477 = vmatprep.subr.mxu0 0.0
        %2478 = vmatpush1.msra.mxu0 0.0
        %2479 = vmatprep.subr.mxu0 0.0
        %2480 = vmatpush1.msra.mxu0 0.0
        %2481 = vmatprep.subr.mxu0 0.0
        %2482 = vmatpush1.msra.mxu0 0.0
        %2483 = vmatprep.subr.mxu0 0.0
        %2484 = vmatpush1.msra.mxu0 0.0
        %2485 = vmatprep.subr.mxu0 0.0
        %2486 = vmatpush1.msra.mxu0 0.0
        %2487 = vmatprep.subr.mxu0 0.0
        %2488 = vmatpush1.msra.mxu0 0.0
        %2489 = vmatprep.subr.mxu0 0.0
        %2490 = vmatpush1.msra.mxu0 0.0
        %2491 = vmatprep.subr.mxu0 0.0
        %2492 = vmatpush1.msra.mxu0 0.0
        %2493 = vmatprep.subr.mxu0 0.0
        %2494 = vmatpush1.msra.mxu0 0.0
        %2495 = vmatprep.subr.mxu0 0.0
        %2496 = vmatpush1.msra.mxu0 0.0
        %2497 = vmatprep.subr.mxu0 0.0
        %2498 = vmatpush1.msra.mxu0 0.0
        %2499 = vmatprep.subr.mxu0 0.0
        %2500 = vmatpush1.msra.mxu0 0.0
        %2501 = vmatprep.subr.mxu0 0.0
        %2502 = vmatpush1.msra.mxu0 0.0
        %2503 = vmatprep.subr.mxu0 0.0
        %2504 = vmatpush1.msra.mxu0 0.0
        %2505 = vmatprep.subr.mxu0 0.0
        %2506 = vmatpush1.msra.mxu0 0.0
        %2507 = vmatprep.subr.mxu0 0.0
        %2508 = vmatpush1.msra.mxu0 0.0
        %2509 = vmatprep.mubr.f32.mxu0 0.0
        %2510 = vmatmul.mubr.f32.gmra.mrb[0].mxu0 %v2443
        %v2511 = vpop.f32.mrb[0].mxu0
        %v2512 = vadd.f32 %v787, %v2511
        %v2513 = vpop.f32.mrb[0].mxu0
        %2514 = vdwg.mxu0
        %v2515 = vmul.f32 %v2512, 0.5
        %v2516 = vmul.f32 %v2512, 0.70710677
        %v2517 = verf.f32.pop %v2516
        %v2518 = vadd.f32 %v2517, 1.0
        %v2519 = vmul.f32 %v2515, %v2518
        %2521 = vrot.lane.b32.xlu0 %v2519, 64
        %v2522 = vpop.permute.xlu0 %2521
        %v2524 = vadd.f32 %v2512, %v2522
        %v2526 = vsel %vm877, %v2524, 0
        %2528 = vmatprep.subr.mxu0 0.0
        %2529 = vmatpush1.msra.mxu0 %v355
        %2530 = vmatprep.subr.mxu0 0.0
        %2531 = vmatpush1.msra.mxu0 %v356
        %2532 = vmatprep.subr.mxu0 0.0
        %2533 = vmatpush1.msra.mxu0 %v357
        %2534 = vmatprep.subr.mxu0 0.0
        %2535 = vmatpush1.msra.mxu0 %v358
        %2536 = vmatprep.subr.mxu0 0.0
        %2537 = vmatpush1.msra.mxu0 %v359
        %2538 = vmatprep.subr.mxu0 0.0
        %2539 = vmatpush1.msra.mxu0 %v360
        %2540 = vmatprep.subr.mxu0 0.0
        %2541 = vmatpush1.msra.mxu0 %v361
        %2542 = vmatprep.subr.mxu0 0.0
        %2543 = vmatpush1.msra.mxu0 %v362
        %2544 = vmatprep.subr.mxu0 0.0
        %2545 = vmatpush1.msra.mxu0 0.0
        %2546 = vmatprep.subr.mxu0 0.0
        %2547 = vmatpush1.msra.mxu0 0.0
        %2548 = vmatprep.subr.mxu0 0.0
        %2549 = vmatpush1.msra.mxu0 0.0
        %2550 = vmatprep.subr.mxu0 0.0
        %2551 = vmatpush1.msra.mxu0 0.0
        %2552 = vmatprep.subr.mxu0 0.0
        %2553 = vmatpush1.msra.mxu0 0.0
        %2554 = vmatprep.subr.mxu0 0.0
        %2555 = vmatpush1.msra.mxu0 0.0
        %2556 = vmatprep.subr.mxu0 0.0
        %2557 = vmatpush1.msra.mxu0 0.0
        %2558 = vmatprep.subr.mxu0 0.0
        %2559 = vmatpush1.msra.mxu0 0.0
        %2560 = vmatprep.subr.mxu0 0.0
        %2561 = vmatpush1.msra.mxu0 0.0
        %2562 = vmatprep.subr.mxu0 0.0
        %2563 = vmatpush1.msra.mxu0 0.0
        %2564 = vmatprep.subr.mxu0 0.0
        %2565 = vmatpush1.msra.mxu0 0.0
        %2566 = vmatprep.subr.mxu0 0.0
        %2567 = vmatpush1.msra.mxu0 0.0
        %2568 = vmatprep.subr.mxu0 0.0
        %2569 = vmatpush1.msra.mxu0 0.0
        %2570 = vmatprep.subr.mxu0 0.0
        %2571 = vmatpush1.msra.mxu0 0.0
        %2572 = vmatprep.subr.mxu0 0.0
        %2573 = vmatpush1.msra.mxu0 0.0
        %2574 = vmatprep.subr.mxu0 0.0
        %2575 = vmatpush1.msra.mxu0 0.0
        %2576 = vmatprep.subr.mxu0 0.0
        %2577 = vmatpush1.msra.mxu0 0.0
        %2578 = vmatprep.subr.mxu0 0.0
        %2579 = vmatpush1.msra.mxu0 0.0
        %2580 = vmatprep.subr.mxu0 0.0
        %2581 = vmatpush1.msra.mxu0 0.0
        %2582 = vmatprep.subr.mxu0 0.0
        %2583 = vmatpush1.msra.mxu0 0.0
        %2584 = vmatprep.subr.mxu0 0.0
        %2585 = vmatpush1.msra.mxu0 0.0
        %2586 = vmatprep.subr.mxu0 0.0
        %2587 = vmatpush1.msra.mxu0 0.0
        %2588 = vmatprep.subr.mxu0 0.0
        %2589 = vmatpush1.msra.mxu0 0.0
        %2590 = vmatprep.subr.mxu0 0.0
        %2591 = vmatpush1.msra.mxu0 0.0
        %2592 = vmatprep.mubr.f32.mxu0 0.0
        %2593 = vmatmul.mubr.f32.gmra.mrb[0].mxu0 %v2526
        %v2594 = vpop.f32.mrb[0].mxu0
        %v2595 = vadd.f32 %v876, %v2594
        %v2596 = vpop.f32.mrb[0].mxu0
        %2597 = vdwg.mxu0
        %v2598 = vadd.f32 %v2595, %v2052
        %2600 = vrot.lane.b32.xlu0 %v1502, 32
        %v2601 = vpop.permute.xlu0 %2600
        %2604 = vrot.lane.b32.xlu0 %v2050, 64
        %v2605 = vpop.permute.xlu0 %2604
        %2608 = vrot.lane.b32.xlu0 %v2598, 96
        %v2609 = vpop.permute.xlu0 %2608
        %v2611 = vsel %vm371, %v951, %v2601
        %v2612 = vsel %vm877, %v2611, %v2605
        %vm2613 = vcmask 785408
        %v2614 = vsel %vm2613, %v2612, %v2609
        %2615 = vst [vmem:[%s328] sm:$0xff] %v2614
        %s2616 = scalar_lea.vmem %s282, 8 [#allocation3]
        %v2617 = vld [vmem:[%s2616] sm:$0xff]
        %v2618 = vsel %vm371, %v2617, 0.0
        %2619 = vadd.xlane.f32.xlu0 %v2618
        %v2620 = vpop.xlane.xlu0 %2619
        %v2621 = vmul.f32 %v2620, %v375
        %v2622 = vsub.f32 %v2617, %v2621
        %v2623 = vmul.f32 %v2622, %v2622
        %v2624 = vsel %vm371, %v2623, 0.0
        %2625 = vadd.xlane.f32.xlu0 %v2624
        %v2626 = vpop.xlane.xlu0 %2625
        %v2627 = vmul.f32 %v2626, %v375
        %v2628 = vadd.f32 %v2627, 1e-05
        %v2629 = vrsqrt.pop %v2628
        %v2630 = vmul.f32 %v2622, %v2629
        %v2631 = vmul.f32 %v2630, %v389
        %v2632 = vadd.f32 %v2631, %v394
        %2633 = vmatprep.subr.mxu0 0.0
        %2634 = vmatpush1.msra.mxu0 %v343
        %2635 = vmatprep.subr.mxu0 0.0
        %2636 = vmatpush1.msra.mxu0 %v344
        %2637 = vmatprep.subr.mxu0 0.0
        %2638 = vmatpush1.msra.mxu0 %v345
        %2639 = vmatprep.subr.mxu0 0.0
        %2640 = vmatpush1.msra.mxu0 %v346
        %2641 = vmatprep.subr.mxu0 0.0
        %2642 = vmatpush1.msra.mxu0 0.0
        %2643 = vmatprep.subr.mxu0 0.0
        %2644 = vmatpush1.msra.mxu0 0.0
        %2645 = vmatprep.subr.mxu0 0.0
        %2646 = vmatpush1.msra.mxu0 0.0
        %2647 = vmatprep.subr.mxu0 0.0
        %2648 = vmatpush1.msra.mxu0 0.0
        %2649 = vmatprep.subr.mxu0 0.0
        %2650 = vmatpush1.msra.mxu0 0.0
        %2651 = vmatprep.subr.mxu0 0.0
        %2652 = vmatpush1.msra.mxu0 0.0
        %2653 = vmatprep.subr.mxu0 0.0
        %2654 = vmatpush1.msra.mxu0 0.0
        %2655 = vmatprep.subr.mxu0 0.0
        %2656 = vmatpush1.msra.mxu0 0.0
        %2657 = vmatprep.subr.mxu0 0.0
        %2658 = vmatpush1.msra.mxu0 0.0
        %2659 = vmatprep.subr.mxu0 0.0
        %2660 = vmatpush1.msra.mxu0 0.0
        %2661 = vmatprep.subr.mxu0 0.0
        %2662 = vmatpush1.msra.mxu0 0.0
        %2663 = vmatprep.subr.mxu0 0.0
        %2664 = vmatpush1.msra.mxu0 0.0
        %2665 = vmatprep.subr.mxu0 0.0
        %2666 = vmatpush1.msra.mxu0 0.0
        %2667 = vmatprep.subr.mxu0 0.0
        %2668 = vmatpush1.msra.mxu0 0.0
        %2669 = vmatprep.subr.mxu0 0.0
        %2670 = vmatpush1.msra.mxu0 0.0
        %2671 = vmatprep.subr.mxu0 0.0
        %2672 = vmatpush1.msra.mxu0 0.0
        %2673 = vmatprep.subr.mxu0 0.0
        %2674 = vmatpush1.msra.mxu0 0.0
        %2675 = vmatprep.subr.mxu0 0.0
        %2676 = vmatpush1.msra.mxu0 0.0
        %2677 = vmatprep.subr.mxu0 0.0
        %2678 = vmatpush1.msra.mxu0 0.0
        %2679 = vmatprep.subr.mxu0 0.0
        %2680 = vmatpush1.msra.mxu0 0.0
        %2681 = vmatprep.subr.mxu0 0.0
        %2682 = vmatpush1.msra.mxu0 0.0
        %2683 = vmatprep.subr.mxu0 0.0
        %2684 = vmatpush1.msra.mxu0 0.0
        %2685 = vmatprep.subr.mxu0 0.0
        %2686 = vmatpush1.msra.mxu0 0.0
        %2687 = vmatprep.subr.mxu0 0.0
        %2688 = vmatpush1.msra.mxu0 0.0
        %2689 = vmatprep.subr.mxu0 0.0
        %2690 = vmatpush1.msra.mxu0 0.0
        %2691 = vmatprep.subr.mxu0 0.0
        %2692 = vmatpush1.msra.mxu0 0.0
        %2693 = vmatprep.subr.mxu0 0.0
        %2694 = vmatpush1.msra.mxu0 0.0
        %2695 = vmatprep.subr.mxu0 0.0
        %2696 = vmatpush1.msra.mxu0 0.0
        %2697 = vmatprep.mubr.f32.mxu0 0.0
        %2698 = vmatmul.mubr.f32.gmra.mrb[0].mxu0 %v2279
        %v2699 = vpop.f32.mrb[0].mxu0
        %v2700 = vadd.f32 0.0, %v2699
        %v2701 = vpop.f32.mrb[0].mxu0
        %2702 = vdwg.mxu0
        %v2704 = vsel %vm371, %v2632, 0
        %2706 = vmatprep.subr.mxu0 0.0
        %2707 = vmatpush1.msra.mxu0 %v339
        %2708 = vmatprep.subr.mxu0 0.0
        %2709 = vmatpush1.msra.mxu0 %v340
        %2710 = vmatprep.subr.mxu0 0.0
        %2711 = vmatpush1.msra.mxu0 %v341
        %2712 = vmatprep.subr.mxu0 0.0
        %2713 = vmatpush1.msra.mxu0 %v342
        %2714 = vmatprep.subr.mxu0 0.0
        %2715 = vmatpush1.msra.mxu0 0.0
        %2716 = vmatprep.subr.mxu0 0.0
        %2717 = vmatpush1.msra.mxu0 0.0
        %2718 = vmatprep.subr.mxu0 0.0
        %2719 = vmatpush1.msra.mxu0 0.0
        %2720 = vmatprep.subr.mxu0 0.0
        %2721 = vmatpush1.msra.mxu0 0.0
        %2722 = vmatprep.subr.mxu0 0.0
        %2723 = vmatpush1.msra.mxu0 0.0
        %2724 = vmatprep.subr.mxu0 0.0
        %2725 = vmatpush1.msra.mxu0 0.0
        %2726 = vmatprep.subr.mxu0 0.0
        %2727 = vmatpush1.msra.mxu0 0.0
        %2728 = vmatprep.subr.mxu0 0.0
        %2729 = vmatpush1.msra.mxu0 0.0
        %2730 = vmatprep.subr.mxu0 0.0
        %2731 = vmatpush1.msra.mxu0 0.0
        %2732 = vmatprep.subr.mxu0 0.0
        %2733 = vmatpush1.msra.mxu0 0.0
        %2734 = vmatprep.subr.mxu0 0.0
        %2735 = vmatpush1.msra.mxu0 0.0
        %2736 = vmatprep.subr.mxu0 0.0
        %2737 = vmatpush1.msra.mxu0 0.0
        %2738 = vmatprep.subr.mxu0 0.0
        %2739 = vmatpush1.msra.mxu0 0.0
        %2740 = vmatprep.subr.mxu0 0.0
        %2741 = vmatpush1.msra.mxu0 0.0
        %2742 = vmatprep.subr.mxu0 0.0
        %2743 = vmatpush1.msra.mxu0 0.0
        %2744 = vmatprep.subr.mxu0 0.0
        %2745 = vmatpush1.msra.mxu0 0.0
        %2746 = vmatprep.subr.mxu0 0.0
        %2747 = vmatpush1.msra.mxu0 0.0
        %2748 = vmatprep.subr.mxu0 0.0
        %2749 = vmatpush1.msra.mxu0 0.0
        %2750 = vmatprep.subr.mxu0 0.0
        %2751 = vmatpush1.msra.mxu0 0.0
        %2752 = vmatprep.subr.mxu0 0.0
        %2753 = vmatpush1.msra.mxu0 0.0
        %2754 = vmatprep.subr.mxu0 0.0
        %2755 = vmatpush1.msra.mxu0 0.0
        %2756 = vmatprep.subr.mxu0 0.0
        %2757 = vmatpush1.msra.mxu0 0.0
        %2758 = vmatprep.subr.mxu0 0.0
        %2759 = vmatpush1.msra.mxu0 0.0
        %2760 = vmatprep.subr.mxu0 0.0
        %2761 = vmatpush1.msra.mxu0 0.0
        %2762 = vmatprep.subr.mxu0 0.0
        %2763 = vmatpush1.msra.mxu0 0.0
        %2764 = vmatprep.subr.mxu0 0.0
        %2765 = vmatpush1.msra.mxu0 0.0
        %2766 = vmatprep.subr.mxu0 0.0
        %2767 = vmatpush1.msra.mxu0 0.0
        %2768 = vmatprep.subr.mxu0 0.0
        %2769 = vmatpush1.msra.mxu0 0.0
        %2770 = vmatprep.mubr.f32.mxu0 0.0
        %2771 = vmatmul.mubr.f32.gmra.mrb[0].mxu0 %v2704
        %v2772 = vpop.f32.mrb[0].mxu0
        %v2773 = vadd.f32 %v2700, %v2772
        %v2774 = vpop.f32.mrb[0].mxu0
        %2775 = vdwg.mxu0
        %v2776 = vadd.f32 %v2773, %v547
        %v2777 = vadd.f32 %v2776, %v2230
        %2779 = vrot.lane.b32.xlu0 %v2776, 32
        %v2780 = vpop.permute.xlu0 %2779
        %v2782 = vmax.f32 %v2777, %v2780
        %2784 = vrot.lane.b32.xlu0 %v2782, 96
        %v2785 = vpop.permute.xlu0 %2784
        %v2787 = vsub.f32 %v2776, %v2785
        %v2788 = vmul.f32 %v2787, 1.442695
        %v2789 = vpow.pop %v2788
        %v2790 = vsub.f32 %v2776, %v2782
        %v2791 = vadd.f32 %v2790, %v2230
        %v2792 = vmul.f32 %v2791, 1.442695
        %v2793 = vpow.pop %v2792
        %v2794 = vtanh.pop %v2776
        %v2795 = vxor.u32 %v2776, 2147483648
        %v2796 = vmul.f32 %v2795, 1.442695
        %v2797 = vpow.pop %v2796
        %v2798 = vadd.f32 %v2797, 1.0
        %v2799 = vrcp.pop %v2798
        %v2800 = vmul.f32 1.0, %v2799
        %v2801 = vmul.f32 %v2793, %v2259
        %2803 = vrot.lane.b32.xlu0 %v2794, 64
        %v2804 = vpop.permute.xlu0 %2803
        %v2806 = vmul.f32 %v2789, %v2804
        %2808 = vrot.lane.b32.xlu0 %v2806, 32
        %v2809 = vpop.permute.xlu0 %2808
        %v2811 = vadd.f32 %v2801, %v2809
        %v2812 = vmul.f32 %v2793, %v2265
        %2814 = vrot.lane.b32.xlu0 %v2789, 32
        %v2815 = vpop.permute.xlu0 %2814
        %v2817 = vadd.f32 %v2812, %v2815
        %v2818 = vrcp.pop %v2817
        %v2819 = vmul.f32 %v2817, %v2818
        %v2820 = vsub.f32 2.0, %v2819
        %v2821 = vmul.f32 %v2818, %v2820
        %v2822 = vmul.f32 %v2811, %v2821
        %2824 = vrot.lane.b32.xlu0 %v2822, 64
        %v2825 = vpop.permute.xlu0 %2824
        %v2827 = vmul.f32 %v2800, %v2825
        %2829 = vrot.lane.b32.xlu0 %v2827, 32
        %v2830 = vpop.permute.xlu0 %2829
        %v2831 = vsel %vm371, %v2830, 0
        %2833 = vmatprep.subr.mxu0 0.0
        %2834 = vmatpush1.msra.mxu0 %v351
        %2835 = vmatprep.subr.mxu0 0.0
        %2836 = vmatpush1.msra.mxu0 %v352
        %2837 = vmatprep.subr.mxu0 0.0
        %2838 = vmatpush1.msra.mxu0 %v353
        %2839 = vmatprep.subr.mxu0 0.0
        %2840 = vmatpush1.msra.mxu0 %v354
        %2841 = vmatprep.subr.mxu0 0.0
        %2842 = vmatpush1.msra.mxu0 0.0
        %2843 = vmatprep.subr.mxu0 0.0
        %2844 = vmatpush1.msra.mxu0 0.0
        %2845 = vmatprep.subr.mxu0 0.0
        %2846 = vmatpush1.msra.mxu0 0.0
        %2847 = vmatprep.subr.mxu0 0.0
        %2848 = vmatpush1.msra.mxu0 0.0
        %2849 = vmatprep.subr.mxu0 0.0
        %2850 = vmatpush1.msra.mxu0 0.0
        %2851 = vmatprep.subr.mxu0 0.0
        %2852 = vmatpush1.msra.mxu0 0.0
        %2853 = vmatprep.subr.mxu0 0.0
        %2854 = vmatpush1.msra.mxu0 0.0
        %2855 = vmatprep.subr.mxu0 0.0
        %2856 = vmatpush1.msra.mxu0 0.0
        %2857 = vmatprep.subr.mxu0 0.0
        %2858 = vmatpush1.msra.mxu0 0.0
        %2859 = vmatprep.subr.mxu0 0.0
        %2860 = vmatpush1.msra.mxu0 0.0
        %2861 = vmatprep.subr.mxu0 0.0
        %2862 = vmatpush1.msra.mxu0 0.0
        %2863 = vmatprep.subr.mxu0 0.0
        %2864 = vmatpush1.msra.mxu0 0.0
        %2865 = vmatprep.subr.mxu0 0.0
        %2866 = vmatpush1.msra.mxu0 0.0
        %2867 = vmatprep.subr.mxu0 0.0
        %2868 = vmatpush1.msra.mxu0 0.0
        %2869 = vmatprep.subr.mxu0 0.0
        %2870 = vmatpush1.msra.mxu0 0.0
        %2871 = vmatprep.subr.mxu0 0.0
        %2872 = vmatpush1.msra.mxu0 0.0
        %2873 = vmatprep.subr.mxu0 0.0
        %2874 = vmatpush1.msra.mxu0 0.0
        %2875 = vmatprep.subr.mxu0 0.0
        %2876 = vmatpush1.msra.mxu0 0.0
        %2877 = vmatprep.subr.mxu0 0.0
        %2878 = vmatpush1.msra.mxu0 0.0
        %2879 = vmatprep.subr.mxu0 0.0
        %2880 = vmatpush1.msra.mxu0 0.0
        %2881 = vmatprep.subr.mxu0 0.0
        %2882 = vmatpush1.msra.mxu0 0.0
        %2883 = vmatprep.subr.mxu0 0.0
        %2884 = vmatpush1.msra.mxu0 0.0
        %2885 = vmatprep.subr.mxu0 0.0
        %2886 = vmatpush1.msra.mxu0 0.0
        %2887 = vmatprep.subr.mxu0 0.0
        %2888 = vmatpush1.msra.mxu0 0.0
        %2889 = vmatprep.subr.mxu0 0.0
        %2890 = vmatpush1.msra.mxu0 0.0
        %2891 = vmatprep.subr.mxu0 0.0
        %2892 = vmatpush1.msra.mxu0 0.0
        %2893 = vmatprep.subr.mxu0 0.0
        %2894 = vmatpush1.msra.mxu0 0.0
        %2895 = vmatprep.subr.mxu0 0.0
        %2896 = vmatpush1.msra.mxu0 0.0
        %2897 = vmatprep.mubr.f32.mxu0 0.0
        %2898 = vmatmul.mubr.f32.gmra.mrb[0].mxu0 %v2831
        %v2899 = vpop.f32.mrb[0].mxu0
        %v2900 = vadd.f32 0.0, %v2899
        %v2901 = vpop.f32.mrb[0].mxu0
        %2902 = vdwg.mxu0
        %2904 = vrot.lane.b32.xlu0 %v2900, 96
        %v2905 = vpop.permute.xlu0 %2904
        %v2907 = vsub.f32 %v2827, %v2905
        %v2908 = vmul.f32 %v2907, %v2907
        %2910 = vrot.lane.b32.xlu0 %v2908, 32
        %v2911 = vpop.permute.xlu0 %2910
        %v2912 = vsel %vm371, %v2911, 0
        %2914 = vmatprep.subr.mxu0 0.0
        %2915 = vmatpush1.msra.mxu0 %v351
        %2916 = vmatprep.subr.mxu0 0.0
        %2917 = vmatpush1.msra.mxu0 %v352
        %2918 = vmatprep.subr.mxu0 0.0
        %2919 = vmatpush1.msra.mxu0 %v353
        %2920 = vmatprep.subr.mxu0 0.0
        %2921 = vmatpush1.msra.mxu0 %v354
        %2922 = vmatprep.subr.mxu0 0.0
        %2923 = vmatpush1.msra.mxu0 0.0
        %2924 = vmatprep.subr.mxu0 0.0
        %2925 = vmatpush1.msra.mxu0 0.0
        %2926 = vmatprep.subr.mxu0 0.0
        %2927 = vmatpush1.msra.mxu0 0.0
        %2928 = vmatprep.subr.mxu0 0.0
        %2929 = vmatpush1.msra.mxu0 0.0
        %2930 = vmatprep.subr.mxu0 0.0
        %2931 = vmatpush1.msra.mxu0 0.0
        %2932 = vmatprep.subr.mxu0 0.0
        %2933 = vmatpush1.msra.mxu0 0.0
        %2934 = vmatprep.subr.mxu0 0.0
        %2935 = vmatpush1.msra.mxu0 0.0
        %2936 = vmatprep.subr.mxu0 0.0
        %2937 = vmatpush1.msra.mxu0 0.0
        %2938 = vmatprep.subr.mxu0 0.0
        %2939 = vmatpush1.msra.mxu0 0.0
        %2940 = vmatprep.subr.mxu0 0.0
        %2941 = vmatpush1.msra.mxu0 0.0
        %2942 = vmatprep.subr.mxu0 0.0
        %2943 = vmatpush1.msra.mxu0 0.0
        %2944 = vmatprep.subr.mxu0 0.0
        %2945 = vmatpush1.msra.mxu0 0.0
        %2946 = vmatprep.subr.mxu0 0.0
        %2947 = vmatpush1.msra.mxu0 0.0
        %2948 = vmatprep.subr.mxu0 0.0
        %2949 = vmatpush1.msra.mxu0 0.0
        %2950 = vmatprep.subr.mxu0 0.0
        %2951 = vmatpush1.msra.mxu0 0.0
        %2952 = vmatprep.subr.mxu0 0.0
        %2953 = vmatpush1.msra.mxu0 0.0
        %2954 = vmatprep.subr.mxu0 0.0
        %2955 = vmatpush1.msra.mxu0 0.0
        %2956 = vmatprep.subr.mxu0 0.0
        %2957 = vmatpush1.msra.mxu0 0.0
        %2958 = vmatprep.subr.mxu0 0.0
        %2959 = vmatpush1.msra.mxu0 0.0
        %2960 = vmatprep.subr.mxu0 0.0
        %2961 = vmatpush1.msra.mxu0 0.0
        %2962 = vmatprep.subr.mxu0 0.0
        %2963 = vmatpush1.msra.mxu0 0.0
        %2964 = vmatprep.subr.mxu0 0.0
        %2965 = vmatpush1.msra.mxu0 0.0
        %2966 = vmatprep.subr.mxu0 0.0
        %2967 = vmatpush1.msra.mxu0 0.0
        %2968 = vmatprep.subr.mxu0 0.0
        %2969 = vmatpush1.msra.mxu0 0.0
        %2970 = vmatprep.subr.mxu0 0.0
        %2971 = vmatpush1.msra.mxu0 0.0
        %2972 = vmatprep.subr.mxu0 0.0
        %2973 = vmatpush1.msra.mxu0 0.0
        %2974 = vmatprep.subr.mxu0 0.0
        %2975 = vmatpush1.msra.mxu0 0.0
        %2976 = vmatprep.subr.mxu0 0.0
        %2977 = vmatpush1.msra.mxu0 0.0
        %2978 = vmatprep.mubr.f32.mxu0 0.0
        %2979 = vmatmul.mubr.f32.gmra.mrb[0].mxu0 %v2912
        %v2980 = vpop.f32.mrb[0].mxu0
        %v2981 = vadd.f32 1e-05, %v2980
        %v2982 = vpop.f32.mrb[0].mxu0
        %2983 = vdwg.mxu0
        %v2984 = vrsqrt.pop %v2981
        %2986 = vrot.lane.b32.xlu0 %v2984, 96
        %v2987 = vpop.permute.xlu0 %2986
        %v2989 = vmul.f32 %v2907, %v2987
        %v2990 = vmul.f32 %v2989, %v772
        %v2991 = vadd.f32 %v2990, %v781
        %2993 = vrot.lane.b32.xlu0 %v2991, 32
        %v2994 = vpop.permute.xlu0 %2993
        %v2995 = vsel %vm371, %v2994, 0
        %2997 = vmatprep.subr.mxu0 0.0
        %2998 = vmatpush1.msra.mxu0 %v347
        %2999 = vmatprep.subr.mxu0 0.0
        %3000 = vmatpush1.msra.mxu0 %v348
        %3001 = vmatprep.subr.mxu0 0.0
        %3002 = vmatpush1.msra.mxu0 %v349
        %3003 = vmatprep.subr.mxu0 0.0
        %3004 = vmatpush1.msra.mxu0 %v350
        %3005 = vmatprep.subr.mxu0 0.0
        %3006 = vmatpush1.msra.mxu0 0.0
        %3007 = vmatprep.subr.mxu0 0.0
        %3008 = vmatpush1.msra.mxu0 0.0
        %3009 = vmatprep.subr.mxu0 0.0
        %3010 = vmatpush1.msra.mxu0 0.0
        %3011 = vmatprep.subr.mxu0 0.0
        %3012 = vmatpush1.msra.mxu0 0.0
        %3013 = vmatprep.subr.mxu0 0.0
        %3014 = vmatpush1.msra.mxu0 0.0
        %3015 = vmatprep.subr.mxu0 0.0
        %3016 = vmatpush1.msra.mxu0 0.0
        %3017 = vmatprep.subr.mxu0 0.0
        %3018 = vmatpush1.msra.mxu0 0.0
        %3019 = vmatprep.subr.mxu0 0.0
        %3020 = vmatpush1.msra.mxu0 0.0
        %3021 = vmatprep.subr.mxu0 0.0
        %3022 = vmatpush1.msra.mxu0 0.0
        %3023 = vmatprep.subr.mxu0 0.0
        %3024 = vmatpush1.msra.mxu0 0.0
        %3025 = vmatprep.subr.mxu0 0.0
        %3026 = vmatpush1.msra.mxu0 0.0
        %3027 = vmatprep.subr.mxu0 0.0
        %3028 = vmatpush1.msra.mxu0 0.0
        %3029 = vmatprep.subr.mxu0 0.0
        %3030 = vmatpush1.msra.mxu0 0.0
        %3031 = vmatprep.subr.mxu0 0.0
        %3032 = vmatpush1.msra.mxu0 0.0
        %3033 = vmatprep.subr.mxu0 0.0
        %3034 = vmatpush1.msra.mxu0 0.0
        %3035 = vmatprep.subr.mxu0 0.0
        %3036 = vmatpush1.msra.mxu0 0.0
        %3037 = vmatprep.subr.mxu0 0.0
        %3038 = vmatpush1.msra.mxu0 0.0
        %3039 = vmatprep.subr.mxu0 0.0
        %3040 = vmatpush1.msra.mxu0 0.0
        %3041 = vmatprep.subr.mxu0 0.0
        %3042 = vmatpush1.msra.mxu0 0.0
        %3043 = vmatprep.subr.mxu0 0.0
        %3044 = vmatpush1.msra.mxu0 0.0
        %3045 = vmatprep.subr.mxu0 0.0
        %3046 = vmatpush1.msra.mxu0 0.0
        %3047 = vmatprep.subr.mxu0 0.0
        %3048 = vmatpush1.msra.mxu0 0.0
        %3049 = vmatprep.subr.mxu0 0.0
        %3050 = vmatpush1.msra.mxu0 0.0
        %3051 = vmatprep.subr.mxu0 0.0
        %3052 = vmatpush1.msra.mxu0 0.0
        %3053 = vmatprep.subr.mxu0 0.0
        %3054 = vmatpush1.msra.mxu0 0.0
        %3055 = vmatprep.subr.mxu0 0.0
        %3056 = vmatpush1.msra.mxu0 0.0
        %3057 = vmatprep.subr.mxu0 0.0
        %3058 = vmatpush1.msra.mxu0 0.0
        %3059 = vmatprep.subr.mxu0 0.0
        %3060 = vmatpush1.msra.mxu0 0.0
        %3061 = vmatprep.mubr.f32.mxu0 0.0
        %3062 = vmatmul.mubr.f32.gmra.mrb[0].mxu0 %v2995
        %v3063 = vpop.f32.mrb[0].mxu0
        %v3064 = vadd.f32 %v787, %v3063
        %v3065 = vpop.f32.mrb[0].mxu0
        %3066 = vdwg.mxu0
        %v3067 = vmul.f32 %v3064, 0.5
        %v3068 = vmul.f32 %v3064, 0.70710677
        %v3069 = verf.f32.pop %v3068
        %v3070 = vadd.f32 %v3069, 1.0
        %v3071 = vmul.f32 %v3067, %v3070
        %3073 = vrot.lane.b32.xlu0 %v3071, 64
        %v3074 = vpop.permute.xlu0 %3073
        %v3076 = vadd.f32 %v3064, %v3074
        %v3078 = vsel %vm877, %v3076, 0
        %3080 = vmatprep.subr.mxu0 0.0
        %3081 = vmatpush1.msra.mxu0 %v355
        %3082 = vmatprep.subr.mxu0 0.0
        %3083 = vmatpush1.msra.mxu0 %v356
        %3084 = vmatprep.subr.mxu0 0.0
        %3085 = vmatpush1.msra.mxu0 %v357
        %3086 = vmatprep.subr.mxu0 0.0
        %3087 = vmatpush1.msra.mxu0 %v358
        %3088 = vmatprep.subr.mxu0 0.0
        %3089 = vmatpush1.msra.mxu0 %v359
        %3090 = vmatprep.subr.mxu0 0.0
        %3091 = vmatpush1.msra.mxu0 %v360
        %3092 = vmatprep.subr.mxu0 0.0
        %3093 = vmatpush1.msra.mxu0 %v361
        %3094 = vmatprep.subr.mxu0 0.0
        %3095 = vmatpush1.msra.mxu0 %v362
        %3096 = vmatprep.subr.mxu0 0.0
        %3097 = vmatpush1.msra.mxu0 0.0
        %3098 = vmatprep.subr.mxu0 0.0
        %3099 = vmatpush1.msra.mxu0 0.0
        %3100 = vmatprep.subr.mxu0 0.0
        %3101 = vmatpush1.msra.mxu0 0.0
        %3102 = vmatprep.subr.mxu0 0.0
        %3103 = vmatpush1.msra.mxu0 0.0
        %3104 = vmatprep.subr.mxu0 0.0
        %3105 = vmatpush1.msra.mxu0 0.0
        %3106 = vmatprep.subr.mxu0 0.0
        %3107 = vmatpush1.msra.mxu0 0.0
        %3108 = vmatprep.subr.mxu0 0.0
        %3109 = vmatpush1.msra.mxu0 0.0
        %3110 = vmatprep.subr.mxu0 0.0
        %3111 = vmatpush1.msra.mxu0 0.0
        %3112 = vmatprep.subr.mxu0 0.0
        %3113 = vmatpush1.msra.mxu0 0.0
        %3114 = vmatprep.subr.mxu0 0.0
        %3115 = vmatpush1.msra.mxu0 0.0
        %3116 = vmatprep.subr.mxu0 0.0
        %3117 = vmatpush1.msra.mxu0 0.0
        %3118 = vmatprep.subr.mxu0 0.0
        %3119 = vmatpush1.msra.mxu0 0.0
        %3120 = vmatprep.subr.mxu0 0.0
        %3121 = vmatpush1.msra.mxu0 0.0
        %3122 = vmatprep.subr.mxu0 0.0
        %3123 = vmatpush1.msra.mxu0 0.0
        %3124 = vmatprep.subr.mxu0 0.0
        %3125 = vmatpush1.msra.mxu0 0.0
        %3126 = vmatprep.subr.mxu0 0.0
        %3127 = vmatpush1.msra.mxu0 0.0
        %3128 = vmatprep.subr.mxu0 0.0
        %3129 = vmatpush1.msra.mxu0 0.0
        %3130 = vmatprep.subr.mxu0 0.0
        %3131 = vmatpush1.msra.mxu0 0.0
        %3132 = vmatprep.subr.mxu0 0.0
        %3133 = vmatpush1.msra.mxu0 0.0
        %3134 = vmatprep.subr.mxu0 0.0
        %3135 = vmatpush1.msra.mxu0 0.0
        %3136 = vmatprep.subr.mxu0 0.0
        %3137 = vmatpush1.msra.mxu0 0.0
        %3138 = vmatprep.subr.mxu0 0.0
        %3139 = vmatpush1.msra.mxu0 0.0
        %3140 = vmatprep.subr.mxu0 0.0
        %3141 = vmatpush1.msra.mxu0 0.0
        %3142 = vmatprep.subr.mxu0 0.0
        %3143 = vmatpush1.msra.mxu0 0.0
        %3144 = vmatprep.mubr.f32.mxu0 0.0
        %3145 = vmatmul.mubr.f32.gmra.mrb[0].mxu0 %v3078
        %v3146 = vpop.f32.mrb[0].mxu0
        %v3147 = vadd.f32 %v876, %v3146
        %v3148 = vpop.f32.mrb[0].mxu0
        %3149 = vdwg.mxu0
        %v3150 = vadd.f32 %v3147, %v2617
        %3152 = vrot.lane.b32.xlu0 %v2617, 96
        %v3153 = vpop.permute.xlu0 %3152
        %v3155 = vsel %vm371, %v3153, 0.0
        %3156 = vadd.xlane.f32.xlu0 %v3155
        %v3157 = vpop.xlane.xlu0 %3156
        %v3158 = vmul.f32 %v3157, %v375
        %v3159 = vsub.f32 %v2617, %v3158
        %v3160 = vmul.f32 %v3159, %v3159
        %3162 = vrot.lane.b32.xlu0 %v3160, 96
        %v3163 = vpop.permute.xlu0 %3162
        %v3165 = vsel %vm371, %v3163, 0.0
        %3166 = vadd.xlane.f32.xlu0 %v3165
        %v3167 = vpop.xlane.xlu0 %3166
        %v3168 = vmul.f32 %v3167, %v375
        %v3169 = vadd.f32 %v3168, 1e-05
        %v3170 = vrsqrt.pop %v3169
        %v3171 = vmul.f32 %v3159, %v3170
        %v3172 = vmul.f32 %v3171, %v975
        %v3173 = vadd.f32 %v3172, %v980
        %3174 = vmatprep.subr.mxu0 0.0
        %3175 = vmatpush1.msra.mxu0 %v343
        %3176 = vmatprep.subr.mxu0 0.0
        %3177 = vmatpush1.msra.mxu0 %v344
        %3178 = vmatprep.subr.mxu0 0.0
        %3179 = vmatpush1.msra.mxu0 %v345
        %3180 = vmatprep.subr.mxu0 0.0
        %3181 = vmatpush1.msra.mxu0 %v346
        %3182 = vmatprep.subr.mxu0 0.0
        %3183 = vmatpush1.msra.mxu0 0.0
        %3184 = vmatprep.subr.mxu0 0.0
        %3185 = vmatpush1.msra.mxu0 0.0
        %3186 = vmatprep.subr.mxu0 0.0
        %3187 = vmatpush1.msra.mxu0 0.0
        %3188 = vmatprep.subr.mxu0 0.0
        %3189 = vmatpush1.msra.mxu0 0.0
        %3190 = vmatprep.subr.mxu0 0.0
        %3191 = vmatpush1.msra.mxu0 0.0
        %3192 = vmatprep.subr.mxu0 0.0
        %3193 = vmatpush1.msra.mxu0 0.0
        %3194 = vmatprep.subr.mxu0 0.0
        %3195 = vmatpush1.msra.mxu0 0.0
        %3196 = vmatprep.subr.mxu0 0.0
        %3197 = vmatpush1.msra.mxu0 0.0
        %3198 = vmatprep.subr.mxu0 0.0
        %3199 = vmatpush1.msra.mxu0 0.0
        %3200 = vmatprep.subr.mxu0 0.0
        %3201 = vmatpush1.msra.mxu0 0.0
        %3202 = vmatprep.subr.mxu0 0.0
        %3203 = vmatpush1.msra.mxu0 0.0
        %3204 = vmatprep.subr.mxu0 0.0
        %3205 = vmatpush1.msra.mxu0 0.0
        %3206 = vmatprep.subr.mxu0 0.0
        %3207 = vmatpush1.msra.mxu0 0.0
        %3208 = vmatprep.subr.mxu0 0.0
        %3209 = vmatpush1.msra.mxu0 0.0
        %3210 = vmatprep.subr.mxu0 0.0
        %3211 = vmatpush1.msra.mxu0 0.0
        %3212 = vmatprep.subr.mxu0 0.0
        %3213 = vmatpush1.msra.mxu0 0.0
        %3214 = vmatprep.subr.mxu0 0.0
        %3215 = vmatpush1.msra.mxu0 0.0
        %3216 = vmatprep.subr.mxu0 0.0
        %3217 = vmatpush1.msra.mxu0 0.0
        %3218 = vmatprep.subr.mxu0 0.0
        %3219 = vmatpush1.msra.mxu0 0.0
        %3220 = vmatprep.subr.mxu0 0.0
        %3221 = vmatpush1.msra.mxu0 0.0
        %3222 = vmatprep.subr.mxu0 0.0
        %3223 = vmatpush1.msra.mxu0 0.0
        %3224 = vmatprep.subr.mxu0 0.0
        %3225 = vmatpush1.msra.mxu0 0.0
        %3226 = vmatprep.subr.mxu0 0.0
        %3227 = vmatpush1.msra.mxu0 0.0
        %3228 = vmatprep.subr.mxu0 0.0
        %3229 = vmatpush1.msra.mxu0 0.0
        %3230 = vmatprep.subr.mxu0 0.0
        %3231 = vmatpush1.msra.mxu0 0.0
        %3232 = vmatprep.subr.mxu0 0.0
        %3233 = vmatpush1.msra.mxu0 0.0
        %3234 = vmatprep.subr.mxu0 0.0
        %3235 = vmatpush1.msra.mxu0 0.0
        %3236 = vmatprep.subr.mxu0 0.0
        %3237 = vmatpush1.msra.mxu0 0.0
        %3238 = vmatprep.mubr.f32.mxu0 0.0
        %3239 = vmatmul.mubr.f32.gmra.mrb[0].mxu0 %v2831
        %v3240 = vpop.f32.mrb[0].mxu0
        %v3241 = vadd.f32 0.0, %v3240
        %v3242 = vpop.f32.mrb[0].mxu0
        %3243 = vdwg.mxu0
        %3245 = vrot.lane.b32.xlu0 %v3173, 96
        %v3246 = vpop.permute.xlu0 %3245
        %v3247 = vsel %vm371, %v3246, 0
        %3249 = vmatprep.subr.mxu0 0.0
        %3250 = vmatpush1.msra.mxu0 %v339
        %3251 = vmatprep.subr.mxu0 0.0
        %3252 = vmatpush1.msra.mxu0 %v340
        %3253 = vmatprep.subr.mxu0 0.0
        %3254 = vmatpush1.msra.mxu0 %v341
        %3255 = vmatprep.subr.mxu0 0.0
        %3256 = vmatpush1.msra.mxu0 %v342
        %3257 = vmatprep.subr.mxu0 0.0
        %3258 = vmatpush1.msra.mxu0 0.0
        %3259 = vmatprep.subr.mxu0 0.0
        %3260 = vmatpush1.msra.mxu0 0.0
        %3261 = vmatprep.subr.mxu0 0.0
        %3262 = vmatpush1.msra.mxu0 0.0
        %3263 = vmatprep.subr.mxu0 0.0
        %3264 = vmatpush1.msra.mxu0 0.0
        %3265 = vmatprep.subr.mxu0 0.0
        %3266 = vmatpush1.msra.mxu0 0.0
        %3267 = vmatprep.subr.mxu0 0.0
        %3268 = vmatpush1.msra.mxu0 0.0
        %3269 = vmatprep.subr.mxu0 0.0
        %3270 = vmatpush1.msra.mxu0 0.0
        %3271 = vmatprep.subr.mxu0 0.0
        %3272 = vmatpush1.msra.mxu0 0.0
        %3273 = vmatprep.subr.mxu0 0.0
        %3274 = vmatpush1.msra.mxu0 0.0
        %3275 = vmatprep.subr.mxu0 0.0
        %3276 = vmatpush1.msra.mxu0 0.0
        %3277 = vmatprep.subr.mxu0 0.0
        %3278 = vmatpush1.msra.mxu0 0.0
        %3279 = vmatprep.subr.mxu0 0.0
        %3280 = vmatpush1.msra.mxu0 0.0
        %3281 = vmatprep.subr.mxu0 0.0
        %3282 = vmatpush1.msra.mxu0 0.0
        %3283 = vmatprep.subr.mxu0 0.0
        %3284 = vmatpush1.msra.mxu0 0.0
        %3285 = vmatprep.subr.mxu0 0.0
        %3286 = vmatpush1.msra.mxu0 0.0
        %3287 = vmatprep.subr.mxu0 0.0
        %3288 = vmatpush1.msra.mxu0 0.0
        %3289 = vmatprep.subr.mxu0 0.0
        %3290 = vmatpush1.msra.mxu0 0.0
        %3291 = vmatprep.subr.mxu0 0.0
        %3292 = vmatpush1.msra.mxu0 0.0
        %3293 = vmatprep.subr.mxu0 0.0
        %3294 = vmatpush1.msra.mxu0 0.0
        %3295 = vmatprep.subr.mxu0 0.0
        %3296 = vmatpush1.msra.mxu0 0.0
        %3297 = vmatprep.subr.mxu0 0.0
        %3298 = vmatpush1.msra.mxu0 0.0
        %3299 = vmatprep.subr.mxu0 0.0
        %3300 = vmatpush1.msra.mxu0 0.0
        %3301 = vmatprep.subr.mxu0 0.0
        %3302 = vmatpush1.msra.mxu0 0.0
        %3303 = vmatprep.subr.mxu0 0.0
        %3304 = vmatpush1.msra.mxu0 0.0
        %3305 = vmatprep.subr.mxu0 0.0
        %3306 = vmatpush1.msra.mxu0 0.0
        %3307 = vmatprep.subr.mxu0 0.0
        %3308 = vmatpush1.msra.mxu0 0.0
        %3309 = vmatprep.subr.mxu0 0.0
        %3310 = vmatpush1.msra.mxu0 0.0
        %3311 = vmatprep.subr.mxu0 0.0
        %3312 = vmatpush1.msra.mxu0 0.0
        %3313 = vmatprep.mubr.f32.mxu0 0.0
        %3314 = vmatmul.mubr.f32.gmra.mrb[0].mxu0 %v3247
        %v3315 = vpop.f32.mrb[0].mxu0
        %v3316 = vadd.f32 %v3241, %v3315
        %v3317 = vpop.f32.mrb[0].mxu0
        %3318 = vdwg.mxu0
        %v3319 = vadd.f32 %v3316, %v547
        %v3320 = vadd.f32 %v3319, %v2782
        %3322 = vrot.lane.b32.xlu0 %v3319, 32
        %v3323 = vpop.permute.xlu0 %3322
        %v3325 = vmax.f32 %v3320, %v3323
        %3327 = vrot.lane.b32.xlu0 %v3325, 96
        %v3328 = vpop.permute.xlu0 %3327
        %v3330 = vsub.f32 %v3319, %v3328
        %v3331 = vmul.f32 %v3330, 1.442695
        %v3332 = vpow.pop %v3331
        %v3333 = vsub.f32 %v3319, %v3325
        %v3334 = vadd.f32 %v3333, %v2782
        %v3335 = vmul.f32 %v3334, 1.442695
        %v3336 = vpow.pop %v3335
        %v3337 = vtanh.pop %v3319
        %v3338 = vxor.u32 %v3319, 2147483648
        %v3339 = vmul.f32 %v3338, 1.442695
        %v3340 = vpow.pop %v3339
        %v3341 = vadd.f32 %v3340, 1.0
        %v3342 = vrcp.pop %v3341
        %v3343 = vmul.f32 1.0, %v3342
        %v3344 = vmul.f32 %v3336, %v2811
        %3346 = vrot.lane.b32.xlu0 %v3337, 64
        %v3347 = vpop.permute.xlu0 %3346
        %v3349 = vmul.f32 %v3332, %v3347
        %3351 = vrot.lane.b32.xlu0 %v3349, 32
        %v3352 = vpop.permute.xlu0 %3351
        %v3354 = vadd.f32 %v3344, %v3352
        %v3355 = vmul.f32 %v3336, %v2817
        %3357 = vrot.lane.b32.xlu0 %v3332, 32
        %v3358 = vpop.permute.xlu0 %3357
        %v3360 = vadd.f32 %v3355, %v3358
        %v3361 = vrcp.pop %v3360
        %v3362 = vmul.f32 %v3360, %v3361
        %v3363 = vsub.f32 2.0, %v3362
        %v3364 = vmul.f32 %v3361, %v3363
        %v3365 = vmul.f32 %v3354, %v3364
        %3367 = vrot.lane.b32.xlu0 %v3365, 64
        %v3368 = vpop.permute.xlu0 %3367
        %v3370 = vmul.f32 %v3343, %v3368
        %3372 = vrot.lane.b32.xlu0 %v3370, 32
        %v3373 = vpop.permute.xlu0 %3372
        %v3374 = vsel %vm371, %v3373, 0
        %3376 = vmatprep.subr.mxu0 0.0
        %3377 = vmatpush1.msra.mxu0 %v351
        %3378 = vmatprep.subr.mxu0 0.0
        %3379 = vmatpush1.msra.mxu0 %v352
        %3380 = vmatprep.subr.mxu0 0.0
        %3381 = vmatpush1.msra.mxu0 %v353
        %3382 = vmatprep.subr.mxu0 0.0
        %3383 = vmatpush1.msra.mxu0 %v354
        %3384 = vmatprep.subr.mxu0 0.0
        %3385 = vmatpush1.msra.mxu0 0.0
        %3386 = vmatprep.subr.mxu0 0.0
        %3387 = vmatpush1.msra.mxu0 0.0
        %3388 = vmatprep.subr.mxu0 0.0
        %3389 = vmatpush1.msra.mxu0 0.0
        %3390 = vmatprep.subr.mxu0 0.0
        %3391 = vmatpush1.msra.mxu0 0.0
        %3392 = vmatprep.subr.mxu0 0.0
        %3393 = vmatpush1.msra.mxu0 0.0
        %3394 = vmatprep.subr.mxu0 0.0
        %3395 = vmatpush1.msra.mxu0 0.0
        %3396 = vmatprep.subr.mxu0 0.0
        %3397 = vmatpush1.msra.mxu0 0.0
        %3398 = vmatprep.subr.mxu0 0.0
        %3399 = vmatpush1.msra.mxu0 0.0
        %3400 = vmatprep.subr.mxu0 0.0
        %3401 = vmatpush1.msra.mxu0 0.0
        %3402 = vmatprep.subr.mxu0 0.0
        %3403 = vmatpush1.msra.mxu0 0.0
        %3404 = vmatprep.subr.mxu0 0.0
        %3405 = vmatpush1.msra.mxu0 0.0
        %3406 = vmatprep.subr.mxu0 0.0
        %3407 = vmatpush1.msra.mxu0 0.0
        %3408 = vmatprep.subr.mxu0 0.0
        %3409 = vmatpush1.msra.mxu0 0.0
        %3410 = vmatprep.subr.mxu0 0.0
        %3411 = vmatpush1.msra.mxu0 0.0
        %3412 = vmatprep.subr.mxu0 0.0
        %3413 = vmatpush1.msra.mxu0 0.0
        %3414 = vmatprep.subr.mxu0 0.0
        %3415 = vmatpush1.msra.mxu0 0.0
        %3416 = vmatprep.subr.mxu0 0.0
        %3417 = vmatpush1.msra.mxu0 0.0
        %3418 = vmatprep.subr.mxu0 0.0
        %3419 = vmatpush1.msra.mxu0 0.0
        %3420 = vmatprep.subr.mxu0 0.0
        %3421 = vmatpush1.msra.mxu0 0.0
        %3422 = vmatprep.subr.mxu0 0.0
        %3423 = vmatpush1.msra.mxu0 0.0
        %3424 = vmatprep.subr.mxu0 0.0
        %3425 = vmatpush1.msra.mxu0 0.0
        %3426 = vmatprep.subr.mxu0 0.0
        %3427 = vmatpush1.msra.mxu0 0.0
        %3428 = vmatprep.subr.mxu0 0.0
        %3429 = vmatpush1.msra.mxu0 0.0
        %3430 = vmatprep.subr.mxu0 0.0
        %3431 = vmatpush1.msra.mxu0 0.0
        %3432 = vmatprep.subr.mxu0 0.0
        %3433 = vmatpush1.msra.mxu0 0.0
        %3434 = vmatprep.subr.mxu0 0.0
        %3435 = vmatpush1.msra.mxu0 0.0
        %3436 = vmatprep.subr.mxu0 0.0
        %3437 = vmatpush1.msra.mxu0 0.0
        %3438 = vmatprep.subr.mxu0 0.0
        %3439 = vmatpush1.msra.mxu0 0.0
        %3440 = vmatprep.mubr.f32.mxu0 0.0
        %3441 = vmatmul.mubr.f32.gmra.mrb[0].mxu0 %v3374
        %v3442 = vpop.f32.mrb[0].mxu0
        %v3443 = vadd.f32 0.0, %v3442
        %v3444 = vpop.f32.mrb[0].mxu0
        %3445 = vdwg.mxu0
        %3447 = vrot.lane.b32.xlu0 %v3443, 96
        %v3448 = vpop.permute.xlu0 %3447
        %v3450 = vsub.f32 %v3370, %v3448
        %v3451 = vmul.f32 %v3450, %v3450
        %3453 = vrot.lane.b32.xlu0 %v3451, 32
        %v3454 = vpop.permute.xlu0 %3453
        %v3455 = vsel %vm371, %v3454, 0
        %3457 = vmatprep.subr.mxu0 0.0
        %3458 = vmatpush1.msra.mxu0 %v351
        %3459 = vmatprep.subr.mxu0 0.0
        %3460 = vmatpush1.msra.mxu0 %v352
        %3461 = vmatprep.subr.mxu0 0.0
        %3462 = vmatpush1.msra.mxu0 %v353
        %3463 = vmatprep.subr.mxu0 0.0
        %3464 = vmatpush1.msra.mxu0 %v354
        %3465 = vmatprep.subr.mxu0 0.0
        %3466 = vmatpush1.msra.mxu0 0.0
        %3467 = vmatprep.subr.mxu0 0.0
        %3468 = vmatpush1.msra.mxu0 0.0
        %3469 = vmatprep.subr.mxu0 0.0
        %3470 = vmatpush1.msra.mxu0 0.0
        %3471 = vmatprep.subr.mxu0 0.0
        %3472 = vmatpush1.msra.mxu0 0.0
        %3473 = vmatprep.subr.mxu0 0.0
        %3474 = vmatpush1.msra.mxu0 0.0
        %3475 = vmatprep.subr.mxu0 0.0
        %3476 = vmatpush1.msra.mxu0 0.0
        %3477 = vmatprep.subr.mxu0 0.0
        %3478 = vmatpush1.msra.mxu0 0.0
        %3479 = vmatprep.subr.mxu0 0.0
        %3480 = vmatpush1.msra.mxu0 0.0
        %3481 = vmatprep.subr.mxu0 0.0
        %3482 = vmatpush1.msra.mxu0 0.0
        %3483 = vmatprep.subr.mxu0 0.0
        %3484 = vmatpush1.msra.mxu0 0.0
        %3485 = vmatprep.subr.mxu0 0.0
        %3486 = vmatpush1.msra.mxu0 0.0
        %3487 = vmatprep.subr.mxu0 0.0
        %3488 = vmatpush1.msra.mxu0 0.0
        %3489 = vmatprep.subr.mxu0 0.0
        %3490 = vmatpush1.msra.mxu0 0.0
        %3491 = vmatprep.subr.mxu0 0.0
        %3492 = vmatpush1.msra.mxu0 0.0
        %3493 = vmatprep.subr.mxu0 0.0
        %3494 = vmatpush1.msra.mxu0 0.0
        %3495 = vmatprep.subr.mxu0 0.0
        %3496 = vmatpush1.msra.mxu0 0.0
        %3497 = vmatprep.subr.mxu0 0.0
        %3498 = vmatpush1.msra.mxu0 0.0
        %3499 = vmatprep.subr.mxu0 0.0
        %3500 = vmatpush1.msra.mxu0 0.0
        %3501 = vmatprep.subr.mxu0 0.0
        %3502 = vmatpush1.msra.mxu0 0.0
        %3503 = vmatprep.subr.mxu0 0.0
        %3504 = vmatpush1.msra.mxu0 0.0
        %3505 = vmatprep.subr.mxu0 0.0
        %3506 = vmatpush1.msra.mxu0 0.0
        %3507 = vmatprep.subr.mxu0 0.0
        %3508 = vmatpush1.msra.mxu0 0.0
        %3509 = vmatprep.subr.mxu0 0.0
        %3510 = vmatpush1.msra.mxu0 0.0
        %3511 = vmatprep.subr.mxu0 0.0
        %3512 = vmatpush1.msra.mxu0 0.0
        %3513 = vmatprep.subr.mxu0 0.0
        %3514 = vmatpush1.msra.mxu0 0.0
        %3515 = vmatprep.subr.mxu0 0.0
        %3516 = vmatpush1.msra.mxu0 0.0
        %3517 = vmatprep.subr.mxu0 0.0
        %3518 = vmatpush1.msra.mxu0 0.0
        %3519 = vmatprep.subr.mxu0 0.0
        %3520 = vmatpush1.msra.mxu0 0.0
        %3521 = vmatprep.mubr.f32.mxu0 0.0
        %3522 = vmatmul.mubr.f32.gmra.mrb[0].mxu0 %v3455
        %v3523 = vpop.f32.mrb[0].mxu0
        %v3524 = vadd.f32 1e-05, %v3523
        %v3525 = vpop.f32.mrb[0].mxu0
        %3526 = vdwg.mxu0
        %v3527 = vrsqrt.pop %v3524
        %3529 = vrot.lane.b32.xlu0 %v3527, 96
        %v3530 = vpop.permute.xlu0 %3529
        %v3532 = vmul.f32 %v3450, %v3530
        %v3533 = vmul.f32 %v3532, %v772
        %v3534 = vadd.f32 %v3533, %v781
        %3536 = vrot.lane.b32.xlu0 %v3534, 32
        %v3537 = vpop.permute.xlu0 %3536
        %v3538 = vsel %vm371, %v3537, 0
        %3540 = vmatprep.subr.mxu0 0.0
        %3541 = vmatpush1.msra.mxu0 %v347
        %3542 = vmatprep.subr.mxu0 0.0
        %3543 = vmatpush1.msra.mxu0 %v348
        %3544 = vmatprep.subr.mxu0 0.0
        %3545 = vmatpush1.msra.mxu0 %v349
        %3546 = vmatprep.subr.mxu0 0.0
        %3547 = vmatpush1.msra.mxu0 %v350
        %3548 = vmatprep.subr.mxu0 0.0
        %3549 = vmatpush1.msra.mxu0 0.0
        %3550 = vmatprep.subr.mxu0 0.0
        %3551 = vmatpush1.msra.mxu0 0.0
        %3552 = vmatprep.subr.mxu0 0.0
        %3553 = vmatpush1.msra.mxu0 0.0
        %3554 = vmatprep.subr.mxu0 0.0
        %3555 = vmatpush1.msra.mxu0 0.0
        %3556 = vmatprep.subr.mxu0 0.0
        %3557 = vmatpush1.msra.mxu0 0.0
        %3558 = vmatprep.subr.mxu0 0.0
        %3559 = vmatpush1.msra.mxu0 0.0
        %3560 = vmatprep.subr.mxu0 0.0
        %3561 = vmatpush1.msra.mxu0 0.0
        %3562 = vmatprep.subr.mxu0 0.0
        %3563 = vmatpush1.msra.mxu0 0.0
        %3564 = vmatprep.subr.mxu0 0.0
        %3565 = vmatpush1.msra.mxu0 0.0
        %3566 = vmatprep.subr.mxu0 0.0
        %3567 = vmatpush1.msra.mxu0 0.0
        %3568 = vmatprep.subr.mxu0 0.0
        %3569 = vmatpush1.msra.mxu0 0.0
        %3570 = vmatprep.subr.mxu0 0.0
        %3571 = vmatpush1.msra.mxu0 0.0
        %3572 = vmatprep.subr.mxu0 0.0
        %3573 = vmatpush1.msra.mxu0 0.0
        %3574 = vmatprep.subr.mxu0 0.0
        %3575 = vmatpush1.msra.mxu0 0.0
        %3576 = vmatprep.subr.mxu0 0.0
        %3577 = vmatpush1.msra.mxu0 0.0
        %3578 = vmatprep.subr.mxu0 0.0
        %3579 = vmatpush1.msra.mxu0 0.0
        %3580 = vmatprep.subr.mxu0 0.0
        %3581 = vmatpush1.msra.mxu0 0.0
        %3582 = vmatprep.subr.mxu0 0.0
        %3583 = vmatpush1.msra.mxu0 0.0
        %3584 = vmatprep.subr.mxu0 0.0
        %3585 = vmatpush1.msra.mxu0 0.0
        %3586 = vmatprep.subr.mxu0 0.0
        %3587 = vmatpush1.msra.mxu0 0.0
        %3588 = vmatprep.subr.mxu0 0.0
        %3589 = vmatpush1.msra.mxu0 0.0
        %3590 = vmatprep.subr.mxu0 0.0
        %3591 = vmatpush1.msra.mxu0 0.0
        %3592 = vmatprep.subr.mxu0 0.0
        %3593 = vmatpush1.msra.mxu0 0.0
        %3594 = vmatprep.subr.mxu0 0.0
        %3595 = vmatpush1.msra.mxu0 0.0
        %3596 = vmatprep.subr.mxu0 0.0
        %3597 = vmatpush1.msra.mxu0 0.0
        %3598 = vmatprep.subr.mxu0 0.0
        %3599 = vmatpush1.msra.mxu0 0.0
        %3600 = vmatprep.subr.mxu0 0.0
        %3601 = vmatpush1.msra.mxu0 0.0
        %3602 = vmatprep.subr.mxu0 0.0
        %3603 = vmatpush1.msra.mxu0 0.0
        %3604 = vmatprep.mubr.f32.mxu0 0.0
        %3605 = vmatmul.mubr.f32.gmra.mrb[0].mxu0 %v3538
        %v3606 = vpop.f32.mrb[0].mxu0
        %v3607 = vadd.f32 %v787, %v3606
        %v3608 = vpop.f32.mrb[0].mxu0
        %3609 = vdwg.mxu0
        %v3610 = vmul.f32 %v3607, 0.5
        %v3611 = vmul.f32 %v3607, 0.70710677
        %v3612 = verf.f32.pop %v3611
        %v3613 = vadd.f32 %v3612, 1.0
        %v3614 = vmul.f32 %v3610, %v3613
        %3616 = vrot.lane.b32.xlu0 %v3614, 64
        %v3617 = vpop.permute.xlu0 %3616
        %v3619 = vadd.f32 %v3607, %v3617
        %v3621 = vsel %vm877, %v3619, 0
        %3623 = vmatprep.subr.mxu0 0.0
        %3624 = vmatpush1.msra.mxu0 %v355
        %3625 = vmatprep.subr.mxu0 0.0
        %3626 = vmatpush1.msra.mxu0 %v356
        %3627 = vmatprep.subr.mxu0 0.0
        %3628 = vmatpush1.msra.mxu0 %v357
        %3629 = vmatprep.subr.mxu0 0.0
        %3630 = vmatpush1.msra.mxu0 %v358
        %3631 = vmatprep.subr.mxu0 0.0
        %3632 = vmatpush1.msra.mxu0 %v359
        %3633 = vmatprep.subr.mxu0 0.0
        %3634 = vmatpush1.msra.mxu0 %v360
        %3635 = vmatprep.subr.mxu0 0.0
        %3636 = vmatpush1.msra.mxu0 %v361
        %3637 = vmatprep.subr.mxu0 0.0
        %3638 = vmatpush1.msra.mxu0 %v362
        %3639 = vmatprep.subr.mxu0 0.0
        %3640 = vmatpush1.msra.mxu0 0.0
        %3641 = vmatprep.subr.mxu0 0.0
        %3642 = vmatpush1.msra.mxu0 0.0
        %3643 = vmatprep.subr.mxu0 0.0
        %3644 = vmatpush1.msra.mxu0 0.0
        %3645 = vmatprep.subr.mxu0 0.0
        %3646 = vmatpush1.msra.mxu0 0.0
        %3647 = vmatprep.subr.mxu0 0.0
        %3648 = vmatpush1.msra.mxu0 0.0
        %3649 = vmatprep.subr.mxu0 0.0
        %3650 = vmatpush1.msra.mxu0 0.0
        %3651 = vmatprep.subr.mxu0 0.0
        %3652 = vmatpush1.msra.mxu0 0.0
        %3653 = vmatprep.subr.mxu0 0.0
        %3654 = vmatpush1.msra.mxu0 0.0
        %3655 = vmatprep.subr.mxu0 0.0
        %3656 = vmatpush1.msra.mxu0 0.0
        %3657 = vmatprep.subr.mxu0 0.0
        %3658 = vmatpush1.msra.mxu0 0.0
        %3659 = vmatprep.subr.mxu0 0.0
        %3660 = vmatpush1.msra.mxu0 0.0
        %3661 = vmatprep.subr.mxu0 0.0
        %3662 = vmatpush1.msra.mxu0 0.0
        %3663 = vmatprep.subr.mxu0 0.0
        %3664 = vmatpush1.msra.mxu0 0.0
        %3665 = vmatprep.subr.mxu0 0.0
        %3666 = vmatpush1.msra.mxu0 0.0
        %3667 = vmatprep.subr.mxu0 0.0
        %3668 = vmatpush1.msra.mxu0 0.0
        %3669 = vmatprep.subr.mxu0 0.0
        %3670 = vmatpush1.msra.mxu0 0.0
        %3671 = vmatprep.subr.mxu0 0.0
        %3672 = vmatpush1.msra.mxu0 0.0
        %3673 = vmatprep.subr.mxu0 0.0
        %3674 = vmatpush1.msra.mxu0 0.0
        %3675 = vmatprep.subr.mxu0 0.0
        %3676 = vmatpush1.msra.mxu0 0.0
        %3677 = vmatprep.subr.mxu0 0.0
        %3678 = vmatpush1.msra.mxu0 0.0
        %3679 = vmatprep.subr.mxu0 0.0
        %3680 = vmatpush1.msra.mxu0 0.0
        %3681 = vmatprep.subr.mxu0 0.0
        %3682 = vmatpush1.msra.mxu0 0.0
        %3683 = vmatprep.subr.mxu0 0.0
        %3684 = vmatpush1.msra.mxu0 0.0
        %3685 = vmatprep.subr.mxu0 0.0
        %3686 = vmatpush1.msra.mxu0 0.0
        %3687 = vmatprep.mubr.f32.mxu0 0.0
        %3688 = vmatmul.mubr.f32.gmra.mrb[0].mxu0 %v3621
        %v3689 = vpop.f32.mrb[0].mxu0
        %v3690 = vadd.f32 %v876, %v3689
        %v3691 = vpop.f32.mrb[0].mxu0
        %3692 = vdwg.mxu0
        %v3693 = vadd.f32 %v3690, %v3153
        %3694 = vrot.lane.b32.xlu0 %v2617, 64
        %v3695 = vpop.permute.xlu0 %3694
        %v3697 = vsel %vm371, %v3695, 0.0
        %3698 = vadd.xlane.f32.xlu0 %v3697
        %v3699 = vpop.xlane.xlu0 %3698
        %v3700 = vmul.f32 %v3699, %v375
        %v3701 = vsub.f32 %v2617, %v3700
        %v3702 = vmul.f32 %v3701, %v3701
        %3704 = vrot.lane.b32.xlu0 %v3702, 64
        %v3705 = vpop.permute.xlu0 %3704
        %v3707 = vsel %vm371, %v3705, 0.0
        %3708 = vadd.xlane.f32.xlu0 %v3707
        %v3709 = vpop.xlane.xlu0 %3708
        %v3710 = vmul.f32 %v3709, %v375
        %v3711 = vadd.f32 %v3710, 1e-05
        %v3712 = vrsqrt.pop %v3711
        %v3713 = vmul.f32 %v3701, %v3712
        %v3714 = vmul.f32 %v3713, %v1524
        %v3715 = vadd.f32 %v3714, %v1528
        %3716 = vmatprep.subr.mxu0 0.0
        %3717 = vmatpush1.msra.mxu0 %v343
        %3718 = vmatprep.subr.mxu0 0.0
        %3719 = vmatpush1.msra.mxu0 %v344
        %3720 = vmatprep.subr.mxu0 0.0
        %3721 = vmatpush1.msra.mxu0 %v345
        %3722 = vmatprep.subr.mxu0 0.0
        %3723 = vmatpush1.msra.mxu0 %v346
        %3724 = vmatprep.subr.mxu0 0.0
        %3725 = vmatpush1.msra.mxu0 0.0
        %3726 = vmatprep.subr.mxu0 0.0
        %3727 = vmatpush1.msra.mxu0 0.0
        %3728 = vmatprep.subr.mxu0 0.0
        %3729 = vmatpush1.msra.mxu0 0.0
        %3730 = vmatprep.subr.mxu0 0.0
        %3731 = vmatpush1.msra.mxu0 0.0
        %3732 = vmatprep.subr.mxu0 0.0
        %3733 = vmatpush1.msra.mxu0 0.0
        %3734 = vmatprep.subr.mxu0 0.0
        %3735 = vmatpush1.msra.mxu0 0.0
        %3736 = vmatprep.subr.mxu0 0.0
        %3737 = vmatpush1.msra.mxu0 0.0
        %3738 = vmatprep.subr.mxu0 0.0
        %3739 = vmatpush1.msra.mxu0 0.0
        %3740 = vmatprep.subr.mxu0 0.0
        %3741 = vmatpush1.msra.mxu0 0.0
        %3742 = vmatprep.subr.mxu0 0.0
        %3743 = vmatpush1.msra.mxu0 0.0
        %3744 = vmatprep.subr.mxu0 0.0
        %3745 = vmatpush1.msra.mxu0 0.0
        %3746 = vmatprep.subr.mxu0 0.0
        %3747 = vmatpush1.msra.mxu0 0.0
        %3748 = vmatprep.subr.mxu0 0.0
        %3749 = vmatpush1.msra.mxu0 0.0
        %3750 = vmatprep.subr.mxu0 0.0
        %3751 = vmatpush1.msra.mxu0 0.0
        %3752 = vmatprep.subr.mxu0 0.0
        %3753 = vmatpush1.msra.mxu0 0.0
        %3754 = vmatprep.subr.mxu0 0.0
        %3755 = vmatpush1.msra.mxu0 0.0
        %3756 = vmatprep.subr.mxu0 0.0
        %3757 = vmatpush1.msra.mxu0 0.0
        %3758 = vmatprep.subr.mxu0 0.0
        %3759 = vmatpush1.msra.mxu0 0.0
        %3760 = vmatprep.subr.mxu0 0.0
        %3761 = vmatpush1.msra.mxu0 0.0
        %3762 = vmatprep.subr.mxu0 0.0
        %3763 = vmatpush1.msra.mxu0 0.0
        %3764 = vmatprep.subr.mxu0 0.0
        %3765 = vmatpush1.msra.mxu0 0.0
        %3766 = vmatprep.subr.mxu0 0.0
        %3767 = vmatpush1.msra.mxu0 0.0
        %3768 = vmatprep.subr.mxu0 0.0
        %3769 = vmatpush1.msra.mxu0 0.0
        %3770 = vmatprep.subr.mxu0 0.0
        %3771 = vmatpush1.msra.mxu0 0.0
        %3772 = vmatprep.subr.mxu0 0.0
        %3773 = vmatpush1.msra.mxu0 0.0
        %3774 = vmatprep.subr.mxu0 0.0
        %3775 = vmatpush1.msra.mxu0 0.0
        %3776 = vmatprep.subr.mxu0 0.0
        %3777 = vmatpush1.msra.mxu0 0.0
        %3778 = vmatprep.subr.mxu0 0.0
        %3779 = vmatpush1.msra.mxu0 0.0
        %3780 = vmatprep.mubr.f32.mxu0 0.0
        %3781 = vmatmul.mubr.f32.gmra.mrb[0].mxu0 %v3374
        %v3782 = vpop.f32.mrb[0].mxu0
        %v3783 = vadd.f32 0.0, %v3782
        %v3784 = vpop.f32.mrb[0].mxu0
        %3785 = vdwg.mxu0
        %3787 = vrot.lane.b32.xlu0 %v3715, 64
        %v3788 = vpop.permute.xlu0 %3787
        %v3789 = vsel %vm371, %v3788, 0
        %3791 = vmatprep.subr.mxu0 0.0
        %3792 = vmatpush1.msra.mxu0 %v339
        %3793 = vmatprep.subr.mxu0 0.0
        %3794 = vmatpush1.msra.mxu0 %v340
        %3795 = vmatprep.subr.mxu0 0.0
        %3796 = vmatpush1.msra.mxu0 %v341
        %3797 = vmatprep.subr.mxu0 0.0
        %3798 = vmatpush1.msra.mxu0 %v342
        %3799 = vmatprep.subr.mxu0 0.0
        %3800 = vmatpush1.msra.mxu0 0.0
        %3801 = vmatprep.subr.mxu0 0.0
        %3802 = vmatpush1.msra.mxu0 0.0
        %3803 = vmatprep.subr.mxu0 0.0
        %3804 = vmatpush1.msra.mxu0 0.0
        %3805 = vmatprep.subr.mxu0 0.0
        %3806 = vmatpush1.msra.mxu0 0.0
        %3807 = vmatprep.subr.mxu0 0.0
        %3808 = vmatpush1.msra.mxu0 0.0
        %3809 = vmatprep.subr.mxu0 0.0
        %3810 = vmatpush1.msra.mxu0 0.0
        %3811 = vmatprep.subr.mxu0 0.0
        %3812 = vmatpush1.msra.mxu0 0.0
        %3813 = vmatprep.subr.mxu0 0.0
        %3814 = vmatpush1.msra.mxu0 0.0
        %3815 = vmatprep.subr.mxu0 0.0
        %3816 = vmatpush1.msra.mxu0 0.0
        %3817 = vmatprep.subr.mxu0 0.0
        %3818 = vmatpush1.msra.mxu0 0.0
        %3819 = vmatprep.subr.mxu0 0.0
        %3820 = vmatpush1.msra.mxu0 0.0
        %3821 = vmatprep.subr.mxu0 0.0
        %3822 = vmatpush1.msra.mxu0 0.0
        %3823 = vmatprep.subr.mxu0 0.0
        %3824 = vmatpush1.msra.mxu0 0.0
        %3825 = vmatprep.subr.mxu0 0.0
        %3826 = vmatpush1.msra.mxu0 0.0
        %3827 = vmatprep.subr.mxu0 0.0
        %3828 = vmatpush1.msra.mxu0 0.0
        %3829 = vmatprep.subr.mxu0 0.0
        %3830 = vmatpush1.msra.mxu0 0.0
        %3831 = vmatprep.subr.mxu0 0.0
        %3832 = vmatpush1.msra.mxu0 0.0
        %3833 = vmatprep.subr.mxu0 0.0
        %3834 = vmatpush1.msra.mxu0 0.0
        %3835 = vmatprep.subr.mxu0 0.0
        %3836 = vmatpush1.msra.mxu0 0.0
        %3837 = vmatprep.subr.mxu0 0.0
        %3838 = vmatpush1.msra.mxu0 0.0
        %3839 = vmatprep.subr.mxu0 0.0
        %3840 = vmatpush1.msra.mxu0 0.0
        %3841 = vmatprep.subr.mxu0 0.0
        %3842 = vmatpush1.msra.mxu0 0.0
        %3843 = vmatprep.subr.mxu0 0.0
        %3844 = vmatpush1.msra.mxu0 0.0
        %3845 = vmatprep.subr.mxu0 0.0
        %3846 = vmatpush1.msra.mxu0 0.0
        %3847 = vmatprep.subr.mxu0 0.0
        %3848 = vmatpush1.msra.mxu0 0.0
        %3849 = vmatprep.subr.mxu0 0.0
        %3850 = vmatpush1.msra.mxu0 0.0
        %3851 = vmatprep.subr.mxu0 0.0
        %3852 = vmatpush1.msra.mxu0 0.0
        %3853 = vmatprep.subr.mxu0 0.0
        %3854 = vmatpush1.msra.mxu0 0.0
        %3855 = vmatprep.mubr.f32.mxu0 0.0
        %3856 = vmatmul.mubr.f32.gmra.mrb[0].mxu0 %v3789
        %v3857 = vpop.f32.mrb[0].mxu0
        %v3858 = vadd.f32 %v3783, %v3857
        %v3859 = vpop.f32.mrb[0].mxu0
        %3860 = vdwg.mxu0
        %v3861 = vadd.f32 %v3858, %v547
        %v3862 = vadd.f32 %v3861, %v3325
        %3864 = vrot.lane.b32.xlu0 %v3861, 32
        %v3865 = vpop.permute.xlu0 %3864
        %v3867 = vmax.f32 %v3862, %v3865
        %3869 = vrot.lane.b32.xlu0 %v3867, 96
        %v3870 = vpop.permute.xlu0 %3869
        %v3872 = vsub.f32 %v3861, %v3870
        %v3873 = vmul.f32 %v3872, 1.442695
        %v3874 = vpow.pop %v3873
        %v3875 = vsub.f32 %v3861, %v3867
        %v3876 = vadd.f32 %v3875, %v3325
        %v3877 = vmul.f32 %v3876, 1.442695
        %v3878 = vpow.pop %v3877
        %v3879 = vtanh.pop %v3861
        %v3880 = vxor.u32 %v3861, 2147483648
        %v3881 = vmul.f32 %v3880, 1.442695
        %v3882 = vpow.pop %v3881
        %v3883 = vadd.f32 %v3882, 1.0
        %v3884 = vrcp.pop %v3883
        %v3885 = vmul.f32 1.0, %v3884
        %v3886 = vmul.f32 %v3878, %v3354
        %3888 = vrot.lane.b32.xlu0 %v3879, 64
        %v3889 = vpop.permute.xlu0 %3888
        %v3891 = vmul.f32 %v3874, %v3889
        %3893 = vrot.lane.b32.xlu0 %v3891, 32
        %v3894 = vpop.permute.xlu0 %3893
        %v3896 = vadd.f32 %v3886, %v3894
        %v3897 = vmul.f32 %v3878, %v3360
        %3899 = vrot.lane.b32.xlu0 %v3874, 32
        %v3900 = vpop.permute.xlu0 %3899
        %v3902 = vadd.f32 %v3897, %v3900
        %v3903 = vrcp.pop %v3902
        %v3904 = vmul.f32 %v3902, %v3903
        %v3905 = vsub.f32 2.0, %v3904
        %v3906 = vmul.f32 %v3903, %v3905
        %v3907 = vmul.f32 %v3896, %v3906
        %3909 = vrot.lane.b32.xlu0 %v3907, 64
        %v3910 = vpop.permute.xlu0 %3909
        %v3912 = vmul.f32 %v3885, %v3910
        %3914 = vrot.lane.b32.xlu0 %v3912, 32
        %v3915 = vpop.permute.xlu0 %3914
        %v3916 = vsel %vm371, %v3915, 0
        %3918 = vmatprep.subr.mxu0 0.0
        %3919 = vmatpush1.msra.mxu0 %v351
        %3920 = vmatprep.subr.mxu0 0.0
        %3921 = vmatpush1.msra.mxu0 %v352
        %3922 = vmatprep.subr.mxu0 0.0
        %3923 = vmatpush1.msra.mxu0 %v353
        %3924 = vmatprep.subr.mxu0 0.0
        %3925 = vmatpush1.msra.mxu0 %v354
        %3926 = vmatprep.subr.mxu0 0.0
        %3927 = vmatpush1.msra.mxu0 0.0
        %3928 = vmatprep.subr.mxu0 0.0
        %3929 = vmatpush1.msra.mxu0 0.0
        %3930 = vmatprep.subr.mxu0 0.0
        %3931 = vmatpush1.msra.mxu0 0.0
        %3932 = vmatprep.subr.mxu0 0.0
        %3933 = vmatpush1.msra.mxu0 0.0
        %3934 = vmatprep.subr.mxu0 0.0
        %3935 = vmatpush1.msra.mxu0 0.0
        %3936 = vmatprep.subr.mxu0 0.0
        %3937 = vmatpush1.msra.mxu0 0.0
        %3938 = vmatprep.subr.mxu0 0.0
        %3939 = vmatpush1.msra.mxu0 0.0
        %3940 = vmatprep.subr.mxu0 0.0
        %3941 = vmatpush1.msra.mxu0 0.0
        %3942 = vmatprep.subr.mxu0 0.0
        %3943 = vmatpush1.msra.mxu0 0.0
        %3944 = vmatprep.subr.mxu0 0.0
        %3945 = vmatpush1.msra.mxu0 0.0
        %3946 = vmatprep.subr.mxu0 0.0
        %3947 = vmatpush1.msra.mxu0 0.0
        %3948 = vmatprep.subr.mxu0 0.0
        %3949 = vmatpush1.msra.mxu0 0.0
        %3950 = vmatprep.subr.mxu0 0.0
        %3951 = vmatpush1.msra.mxu0 0.0
        %3952 = vmatprep.subr.mxu0 0.0
        %3953 = vmatpush1.msra.mxu0 0.0
        %3954 = vmatprep.subr.mxu0 0.0
        %3955 = vmatpush1.msra.mxu0 0.0
        %3956 = vmatprep.subr.mxu0 0.0
        %3957 = vmatpush1.msra.mxu0 0.0
        %3958 = vmatprep.subr.mxu0 0.0
        %3959 = vmatpush1.msra.mxu0 0.0
        %3960 = vmatprep.subr.mxu0 0.0
        %3961 = vmatpush1.msra.mxu0 0.0
        %3962 = vmatprep.subr.mxu0 0.0
        %3963 = vmatpush1.msra.mxu0 0.0
        %3964 = vmatprep.subr.mxu0 0.0
        %3965 = vmatpush1.msra.mxu0 0.0
        %3966 = vmatprep.subr.mxu0 0.0
        %3967 = vmatpush1.msra.mxu0 0.0
        %3968 = vmatprep.subr.mxu0 0.0
        %3969 = vmatpush1.msra.mxu0 0.0
        %3970 = vmatprep.subr.mxu0 0.0
        %3971 = vmatpush1.msra.mxu0 0.0
        %3972 = vmatprep.subr.mxu0 0.0
        %3973 = vmatpush1.msra.mxu0 0.0
        %3974 = vmatprep.subr.mxu0 0.0
        %3975 = vmatpush1.msra.mxu0 0.0
        %3976 = vmatprep.subr.mxu0 0.0
        %3977 = vmatpush1.msra.mxu0 0.0
        %3978 = vmatprep.subr.mxu0 0.0
        %3979 = vmatpush1.msra.mxu0 0.0
        %3980 = vmatprep.subr.mxu0 0.0
        %3981 = vmatpush1.msra.mxu0 0.0
        %3982 = vmatprep.mubr.f32.mxu0 0.0
        %3983 = vmatmul.mubr.f32.gmra.mrb[0].mxu0 %v3916
        %v3984 = vpop.f32.mrb[0].mxu0
        %v3985 = vadd.f32 0.0, %v3984
        %v3986 = vpop.f32.mrb[0].mxu0
        %3987 = vdwg.mxu0
        %3989 = vrot.lane.b32.xlu0 %v3985, 96
        %v3990 = vpop.permute.xlu0 %3989
        %v3992 = vsub.f32 %v3912, %v3990
        %v3993 = vmul.f32 %v3992, %v3992
        %3995 = vrot.lane.b32.xlu0 %v3993, 32
        %v3996 = vpop.permute.xlu0 %3995
        %v3997 = vsel %vm371, %v3996, 0
        %3999 = vmatprep.subr.mxu0 0.0
        %4000 = vmatpush1.msra.mxu0 %v351
        %4001 = vmatprep.subr.mxu0 0.0
        %4002 = vmatpush1.msra.mxu0 %v352
        %4003 = vmatprep.subr.mxu0 0.0
        %4004 = vmatpush1.msra.mxu0 %v353
        %4005 = vmatprep.subr.mxu0 0.0
        %4006 = vmatpush1.msra.mxu0 %v354
        %4007 = vmatprep.subr.mxu0 0.0
        %4008 = vmatpush1.msra.mxu0 0.0
        %4009 = vmatprep.subr.mxu0 0.0
        %4010 = vmatpush1.msra.mxu0 0.0
        %4011 = vmatprep.subr.mxu0 0.0
        %4012 = vmatpush1.msra.mxu0 0.0
        %4013 = vmatprep.subr.mxu0 0.0
        %4014 = vmatpush1.msra.mxu0 0.0
        %4015 = vmatprep.subr.mxu0 0.0
        %4016 = vmatpush1.msra.mxu0 0.0
        %4017 = vmatprep.subr.mxu0 0.0
        %4018 = vmatpush1.msra.mxu0 0.0
        %4019 = vmatprep.subr.mxu0 0.0
        %4020 = vmatpush1.msra.mxu0 0.0
        %4021 = vmatprep.subr.mxu0 0.0
        %4022 = vmatpush1.msra.mxu0 0.0
        %4023 = vmatprep.subr.mxu0 0.0
        %4024 = vmatpush1.msra.mxu0 0.0
        %4025 = vmatprep.subr.mxu0 0.0
        %4026 = vmatpush1.msra.mxu0 0.0
        %4027 = vmatprep.subr.mxu0 0.0
        %4028 = vmatpush1.msra.mxu0 0.0
        %4029 = vmatprep.subr.mxu0 0.0
        %4030 = vmatpush1.msra.mxu0 0.0
        %4031 = vmatprep.subr.mxu0 0.0
        %4032 = vmatpush1.msra.mxu0 0.0
        %4033 = vmatprep.subr.mxu0 0.0
        %4034 = vmatpush1.msra.mxu0 0.0
        %4035 = vmatprep.subr.mxu0 0.0
        %4036 = vmatpush1.msra.mxu0 0.0
        %4037 = vmatprep.subr.mxu0 0.0
        %4038 = vmatpush1.msra.mxu0 0.0
        %4039 = vmatprep.subr.mxu0 0.0
        %4040 = vmatpush1.msra.mxu0 0.0
        %4041 = vmatprep.subr.mxu0 0.0
        %4042 = vmatpush1.msra.mxu0 0.0
        %4043 = vmatprep.subr.mxu0 0.0
        %4044 = vmatpush1.msra.mxu0 0.0
        %4045 = vmatprep.subr.mxu0 0.0
        %4046 = vmatpush1.msra.mxu0 0.0
        %4047 = vmatprep.subr.mxu0 0.0
        %4048 = vmatpush1.msra.mxu0 0.0
        %4049 = vmatprep.subr.mxu0 0.0
        %4050 = vmatpush1.msra.mxu0 0.0
        %4051 = vmatprep.subr.mxu0 0.0
        %4052 = vmatpush1.msra.mxu0 0.0
        %4053 = vmatprep.subr.mxu0 0.0
        %4054 = vmatpush1.msra.mxu0 0.0
        %4055 = vmatprep.subr.mxu0 0.0
        %4056 = vmatpush1.msra.mxu0 0.0
        %4057 = vmatprep.subr.mxu0 0.0
        %4058 = vmatpush1.msra.mxu0 0.0
        %4059 = vmatprep.subr.mxu0 0.0
        %4060 = vmatpush1.msra.mxu0 0.0
        %4061 = vmatprep.subr.mxu0 0.0
        %4062 = vmatpush1.msra.mxu0 0.0
        %4063 = vmatprep.mubr.f32.mxu0 0.0
        %4064 = vmatmul.mubr.f32.gmra.mrb[0].mxu0 %v3997
        %v4065 = vpop.f32.mrb[0].mxu0
        %v4066 = vadd.f32 1e-05, %v4065
        %v4067 = vpop.f32.mrb[0].mxu0
        %4068 = vdwg.mxu0
        %v4069 = vrsqrt.pop %v4066
        %4071 = vrot.lane.b32.xlu0 %v4069, 96
        %v4072 = vpop.permute.xlu0 %4071
        %v4074 = vmul.f32 %v3992, %v4072
        %v4075 = vmul.f32 %v4074, %v772
        %v4076 = vadd.f32 %v4075, %v781
        %4078 = vrot.lane.b32.xlu0 %v4076, 32
        %v4079 = vpop.permute.xlu0 %4078
        %v4080 = vsel %vm371, %v4079, 0
        %4082 = vmatprep.subr.mxu0 0.0
        %4083 = vmatpush1.msra.mxu0 %v347
        %4084 = vmatprep.subr.mxu0 0.0
        %4085 = vmatpush1.msra.mxu0 %v348
        %4086 = vmatprep.subr.mxu0 0.0
        %4087 = vmatpush1.msra.mxu0 %v349
        %4088 = vmatprep.subr.mxu0 0.0
        %4089 = vmatpush1.msra.mxu0 %v350
        %4090 = vmatprep.subr.mxu0 0.0
        %4091 = vmatpush1.msra.mxu0 0.0
        %4092 = vmatprep.subr.mxu0 0.0
        %4093 = vmatpush1.msra.mxu0 0.0
        %4094 = vmatprep.subr.mxu0 0.0
        %4095 = vmatpush1.msra.mxu0 0.0
        %4096 = vmatprep.subr.mxu0 0.0
        %4097 = vmatpush1.msra.mxu0 0.0
        %4098 = vmatprep.subr.mxu0 0.0
        %4099 = vmatpush1.msra.mxu0 0.0
        %4100 = vmatprep.subr.mxu0 0.0
        %4101 = vmatpush1.msra.mxu0 0.0
        %4102 = vmatprep.subr.mxu0 0.0
        %4103 = vmatpush1.msra.mxu0 0.0
        %4104 = vmatprep.subr.mxu0 0.0
        %4105 = vmatpush1.msra.mxu0 0.0
        %4106 = vmatprep.subr.mxu0 0.0
        %4107 = vmatpush1.msra.mxu0 0.0
        %4108 = vmatprep.subr.mxu0 0.0
        %4109 = vmatpush1.msra.mxu0 0.0
        %4110 = vmatprep.subr.mxu0 0.0
        %4111 = vmatpush1.msra.mxu0 0.0
        %4112 = vmatprep.subr.mxu0 0.0
        %4113 = vmatpush1.msra.mxu0 0.0
        %4114 = vmatprep.subr.mxu0 0.0
        %4115 = vmatpush1.msra.mxu0 0.0
        %4116 = vmatprep.subr.mxu0 0.0
        %4117 = vmatpush1.msra.mxu0 0.0
        %4118 = vmatprep.subr.mxu0 0.0
        %4119 = vmatpush1.msra.mxu0 0.0
        %4120 = vmatprep.subr.mxu0 0.0
        %4121 = vmatpush1.msra.mxu0 0.0
        %4122 = vmatprep.subr.mxu0 0.0
        %4123 = vmatpush1.msra.mxu0 0.0
        %4124 = vmatprep.subr.mxu0 0.0
        %4125 = vmatpush1.msra.mxu0 0.0
        %4126 = vmatprep.subr.mxu0 0.0
        %4127 = vmatpush1.msra.mxu0 0.0
        %4128 = vmatprep.subr.mxu0 0.0
        %4129 = vmatpush1.msra.mxu0 0.0
        %4130 = vmatprep.subr.mxu0 0.0
        %4131 = vmatpush1.msra.mxu0 0.0
        %4132 = vmatprep.subr.mxu0 0.0
        %4133 = vmatpush1.msra.mxu0 0.0
        %4134 = vmatprep.subr.mxu0 0.0
        %4135 = vmatpush1.msra.mxu0 0.0
        %4136 = vmatprep.subr.mxu0 0.0
        %4137 = vmatpush1.msra.mxu0 0.0
        %4138 = vmatprep.subr.mxu0 0.0
        %4139 = vmatpush1.msra.mxu0 0.0
        %4140 = vmatprep.subr.mxu0 0.0
        %4141 = vmatpush1.msra.mxu0 0.0
        %4142 = vmatprep.subr.mxu0 0.0
        %4143 = vmatpush1.msra.mxu0 0.0
        %4144 = vmatprep.subr.mxu0 0.0
        %4145 = vmatpush1.msra.mxu0 0.0
        %4146 = vmatprep.mubr.f32.mxu0 0.0
        %4147 = vmatmul.mubr.f32.gmra.mrb[0].mxu0 %v4080
        %v4148 = vpop.f32.mrb[0].mxu0
        %v4149 = vadd.f32 %v787, %v4148
        %v4150 = vpop.f32.mrb[0].mxu0
        %4151 = vdwg.mxu0
        %v4152 = vmul.f32 %v4149, 0.5
        %v4153 = vmul.f32 %v4149, 0.70710677
        %v4154 = verf.f32.pop %v4153
        %v4155 = vadd.f32 %v4154, 1.0
        %v4156 = vmul.f32 %v4152, %v4155
        %4158 = vrot.lane.b32.xlu0 %v4156, 64
        %v4159 = vpop.permute.xlu0 %4158
        %v4161 = vadd.f32 %v4149, %v4159
        %v4163 = vsel %vm877, %v4161, 0
        %4165 = vmatprep.subr.mxu0 0.0
        %4166 = vmatpush1.msra.mxu0 %v355
        %4167 = vmatprep.subr.mxu0 0.0
        %4168 = vmatpush1.msra.mxu0 %v356
        %4169 = vmatprep.subr.mxu0 0.0
        %4170 = vmatpush1.msra.mxu0 %v357
        %4171 = vmatprep.subr.mxu0 0.0
        %4172 = vmatpush1.msra.mxu0 %v358
        %4173 = vmatprep.subr.mxu0 0.0
        %4174 = vmatpush1.msra.mxu0 %v359
        %4175 = vmatprep.subr.mxu0 0.0
        %4176 = vmatpush1.msra.mxu0 %v360
        %4177 = vmatprep.subr.mxu0 0.0
        %4178 = vmatpush1.msra.mxu0 %v361
        %4179 = vmatprep.subr.mxu0 0.0
        %4180 = vmatpush1.msra.mxu0 %v362
        %4181 = vmatprep.subr.mxu0 0.0
        %4182 = vmatpush1.msra.mxu0 0.0
        %4183 = vmatprep.subr.mxu0 0.0
        %4184 = vmatpush1.msra.mxu0 0.0
        %4185 = vmatprep.subr.mxu0 0.0
        %4186 = vmatpush1.msra.mxu0 0.0
        %4187 = vmatprep.subr.mxu0 0.0
        %4188 = vmatpush1.msra.mxu0 0.0
        %4189 = vmatprep.subr.mxu0 0.0
        %4190 = vmatpush1.msra.mxu0 0.0
        %4191 = vmatprep.subr.mxu0 0.0
        %4192 = vmatpush1.msra.mxu0 0.0
        %4193 = vmatprep.subr.mxu0 0.0
        %4194 = vmatpush1.msra.mxu0 0.0
        %4195 = vmatprep.subr.mxu0 0.0
        %4196 = vmatpush1.msra.mxu0 0.0
        %4197 = vmatprep.subr.mxu0 0.0
        %4198 = vmatpush1.msra.mxu0 0.0
        %4199 = vmatprep.subr.mxu0 0.0
        %4200 = vmatpush1.msra.mxu0 0.0
        %4201 = vmatprep.subr.mxu0 0.0
        %4202 = vmatpush1.msra.mxu0 0.0
        %4203 = vmatprep.subr.mxu0 0.0
        %4204 = vmatpush1.msra.mxu0 0.0
        %4205 = vmatprep.subr.mxu0 0.0
        %4206 = vmatpush1.msra.mxu0 0.0
        %4207 = vmatprep.subr.mxu0 0.0
        %4208 = vmatpush1.msra.mxu0 0.0
        %4209 = vmatprep.subr.mxu0 0.0
        %4210 = vmatpush1.msra.mxu0 0.0
        %4211 = vmatprep.subr.mxu0 0.0
        %4212 = vmatpush1.msra.mxu0 0.0
        %4213 = vmatprep.subr.mxu0 0.0
        %4214 = vmatpush1.msra.mxu0 0.0
        %4215 = vmatprep.subr.mxu0 0.0
        %4216 = vmatpush1.msra.mxu0 0.0
        %4217 = vmatprep.subr.mxu0 0.0
        %4218 = vmatpush1.msra.mxu0 0.0
        %4219 = vmatprep.subr.mxu0 0.0
        %4220 = vmatpush1.msra.mxu0 0.0
        %4221 = vmatprep.subr.mxu0 0.0
        %4222 = vmatpush1.msra.mxu0 0.0
        %4223 = vmatprep.subr.mxu0 0.0
        %4224 = vmatpush1.msra.mxu0 0.0
        %4225 = vmatprep.subr.mxu0 0.0
        %4226 = vmatpush1.msra.mxu0 0.0
        %4227 = vmatprep.subr.mxu0 0.0
        %4228 = vmatpush1.msra.mxu0 0.0
        %4229 = vmatprep.mubr.f32.mxu0 0.0
        %4230 = vmatmul.mubr.f32.gmra.mrb[0].mxu0 %v4163
        %v4231 = vpop.f32.mrb[0].mxu0
        %v4232 = vadd.f32 %v876, %v4231
        %v4233 = vpop.f32.mrb[0].mxu0
        %4234 = vdwg.mxu0
        %v4235 = vadd.f32 %v4232, %v3695
        %4236 = vrot.lane.b32.xlu0 %v2617, 32
        %v4237 = vpop.permute.xlu0 %4236
        %v4239 = vsel %vm371, %v4237, 0.0
        %4240 = vadd.xlane.f32.xlu0 %v4239
        %v4241 = vpop.xlane.xlu0 %4240
        %v4242 = vmul.f32 %v4241, %v375
        %v4243 = vsub.f32 %v2617, %v4242
        %v4244 = vmul.f32 %v4243, %v4243
        %4246 = vrot.lane.b32.xlu0 %v4244, 32
        %v4247 = vpop.permute.xlu0 %4246
        %v4249 = vsel %vm371, %v4247, 0.0
        %4250 = vadd.xlane.f32.xlu0 %v4249
        %v4251 = vpop.xlane.xlu0 %4250
        %v4252 = vmul.f32 %v4251, %v375
        %v4253 = vadd.f32 %v4252, 1e-05
        %v4254 = vrsqrt.pop %v4253
        %v4255 = vmul.f32 %v4243, %v4254
        %v4256 = vmul.f32 %v4255, %v2072
        %v4257 = vadd.f32 %v4256, %v2076
        %4258 = vmatprep.subr.mxu0 0.0
        %4259 = vmatpush1.msra.mxu0 %v343
        %4260 = vmatprep.subr.mxu0 0.0
        %4261 = vmatpush1.msra.mxu0 %v344
        %4262 = vmatprep.subr.mxu0 0.0
        %4263 = vmatpush1.msra.mxu0 %v345
        %4264 = vmatprep.subr.mxu0 0.0
        %4265 = vmatpush1.msra.mxu0 %v346
        %4266 = vmatprep.subr.mxu0 0.0
        %4267 = vmatpush1.msra.mxu0 0.0
        %4268 = vmatprep.subr.mxu0 0.0
        %4269 = vmatpush1.msra.mxu0 0.0
        %4270 = vmatprep.subr.mxu0 0.0
        %4271 = vmatpush1.msra.mxu0 0.0
        %4272 = vmatprep.subr.mxu0 0.0
        %4273 = vmatpush1.msra.mxu0 0.0
        %4274 = vmatprep.subr.mxu0 0.0
        %4275 = vmatpush1.msra.mxu0 0.0
        %4276 = vmatprep.subr.mxu0 0.0
        %4277 = vmatpush1.msra.mxu0 0.0
        %4278 = vmatprep.subr.mxu0 0.0
        %4279 = vmatpush1.msra.mxu0 0.0
        %4280 = vmatprep.subr.mxu0 0.0
        %4281 = vmatpush1.msra.mxu0 0.0
        %4282 = vmatprep.subr.mxu0 0.0
        %4283 = vmatpush1.msra.mxu0 0.0
        %4284 = vmatprep.subr.mxu0 0.0
        %4285 = vmatpush1.msra.mxu0 0.0
        %4286 = vmatprep.subr.mxu0 0.0
        %4287 = vmatpush1.msra.mxu0 0.0
        %4288 = vmatprep.subr.mxu0 0.0
        %4289 = vmatpush1.msra.mxu0 0.0
        %4290 = vmatprep.subr.mxu0 0.0
        %4291 = vmatpush1.msra.mxu0 0.0
        %4292 = vmatprep.subr.mxu0 0.0
        %4293 = vmatpush1.msra.mxu0 0.0
        %4294 = vmatprep.subr.mxu0 0.0
        %4295 = vmatpush1.msra.mxu0 0.0
        %4296 = vmatprep.subr.mxu0 0.0
        %4297 = vmatpush1.msra.mxu0 0.0
        %4298 = vmatprep.subr.mxu0 0.0
        %4299 = vmatpush1.msra.mxu0 0.0
        %4300 = vmatprep.subr.mxu0 0.0
        %4301 = vmatpush1.msra.mxu0 0.0
        %4302 = vmatprep.subr.mxu0 0.0
        %4303 = vmatpush1.msra.mxu0 0.0
        %4304 = vmatprep.subr.mxu0 0.0
        %4305 = vmatpush1.msra.mxu0 0.0
        %4306 = vmatprep.subr.mxu0 0.0
        %4307 = vmatpush1.msra.mxu0 0.0
        %4308 = vmatprep.subr.mxu0 0.0
        %4309 = vmatpush1.msra.mxu0 0.0
        %4310 = vmatprep.subr.mxu0 0.0
        %4311 = vmatpush1.msra.mxu0 0.0
        %4312 = vmatprep.subr.mxu0 0.0
        %4313 = vmatpush1.msra.mxu0 0.0
        %4314 = vmatprep.subr.mxu0 0.0
        %4315 = vmatpush1.msra.mxu0 0.0
        %4316 = vmatprep.subr.mxu0 0.0
        %4317 = vmatpush1.msra.mxu0 0.0
        %4318 = vmatprep.subr.mxu0 0.0
        %4319 = vmatpush1.msra.mxu0 0.0
        %4320 = vmatprep.subr.mxu0 0.0
        %4321 = vmatpush1.msra.mxu0 0.0
        %4322 = vmatprep.mubr.f32.mxu0 0.0
        %4323 = vmatmul.mubr.f32.gmra.mrb[0].mxu0 %v3916
        %v4324 = vpop.f32.mrb[0].mxu0
        %v4325 = vadd.f32 0.0, %v4324
        %v4326 = vpop.f32.mrb[0].mxu0
        %4327 = vdwg.mxu0
        %4329 = vrot.lane.b32.xlu0 %v4257, 32
        %v4330 = vpop.permute.xlu0 %4329
        %v4331 = vsel %vm371, %v4330, 0
        %4333 = vmatprep.subr.mxu0 0.0
        %4334 = vmatpush1.msra.mxu0 %v339
        %4335 = vmatprep.subr.mxu0 0.0
        %4336 = vmatpush1.msra.mxu0 %v340
        %4337 = vmatprep.subr.mxu0 0.0
        %4338 = vmatpush1.msra.mxu0 %v341
        %4339 = vmatprep.subr.mxu0 0.0
        %4340 = vmatpush1.msra.mxu0 %v342
        %4341 = vmatprep.subr.mxu0 0.0
        %4342 = vmatpush1.msra.mxu0 0.0
        %4343 = vmatprep.subr.mxu0 0.0
        %4344 = vmatpush1.msra.mxu0 0.0
        %4345 = vmatprep.subr.mxu0 0.0
        %4346 = vmatpush1.msra.mxu0 0.0
        %4347 = vmatprep.subr.mxu0 0.0
        %4348 = vmatpush1.msra.mxu0 0.0
        %4349 = vmatprep.subr.mxu0 0.0
        %4350 = vmatpush1.msra.mxu0 0.0
        %4351 = vmatprep.subr.mxu0 0.0
        %4352 = vmatpush1.msra.mxu0 0.0
        %4353 = vmatprep.subr.mxu0 0.0
        %4354 = vmatpush1.msra.mxu0 0.0
        %4355 = vmatprep.subr.mxu0 0.0
        %4356 = vmatpush1.msra.mxu0 0.0
        %4357 = vmatprep.subr.mxu0 0.0
        %4358 = vmatpush1.msra.mxu0 0.0
        %4359 = vmatprep.subr.mxu0 0.0
        %4360 = vmatpush1.msra.mxu0 0.0
        %4361 = vmatprep.subr.mxu0 0.0
        %4362 = vmatpush1.msra.mxu0 0.0
        %4363 = vmatprep.subr.mxu0 0.0
        %4364 = vmatpush1.msra.mxu0 0.0
        %4365 = vmatprep.subr.mxu0 0.0
        %4366 = vmatpush1.msra.mxu0 0.0
        %4367 = vmatprep.subr.mxu0 0.0
        %4368 = vmatpush1.msra.mxu0 0.0
        %4369 = vmatprep.subr.mxu0 0.0
        %4370 = vmatpush1.msra.mxu0 0.0
        %4371 = vmatprep.subr.mxu0 0.0
        %4372 = vmatpush1.msra.mxu0 0.0
        %4373 = vmatprep.subr.mxu0 0.0
        %4374 = vmatpush1.msra.mxu0 0.0
        %4375 = vmatprep.subr.mxu0 0.0
        %4376 = vmatpush1.msra.mxu0 0.0
        %4377 = vmatprep.subr.mxu0 0.0
        %4378 = vmatpush1.msra.mxu0 0.0
        %4379 = vmatprep.subr.mxu0 0.0
        %4380 = vmatpush1.msra.mxu0 0.0
        %4381 = vmatprep.subr.mxu0 0.0
        %4382 = vmatpush1.msra.mxu0 0.0
        %4383 = vmatprep.subr.mxu0 0.0
        %4384 = vmatpush1.msra.mxu0 0.0
        %4385 = vmatprep.subr.mxu0 0.0
        %4386 = vmatpush1.msra.mxu0 0.0
        %4387 = vmatprep.subr.mxu0 0.0
        %4388 = vmatpush1.msra.mxu0 0.0
        %4389 = vmatprep.subr.mxu0 0.0
        %4390 = vmatpush1.msra.mxu0 0.0
        %4391 = vmatprep.subr.mxu0 0.0
        %4392 = vmatpush1.msra.mxu0 0.0
        %4393 = vmatprep.subr.mxu0 0.0
        %4394 = vmatpush1.msra.mxu0 0.0
        %4395 = vmatprep.subr.mxu0 0.0
        %4396 = vmatpush1.msra.mxu0 0.0
        %4397 = vmatprep.mubr.f32.mxu0 0.0
        %4398 = vmatmul.mubr.f32.gmra.mrb[0].mxu0 %v4331
        %v4399 = vpop.f32.mrb[0].mxu0
        %v4400 = vadd.f32 %v4325, %v4399
        %v4401 = vpop.f32.mrb[0].mxu0
        %4402 = vdwg.mxu0
        %v4403 = vadd.f32 %v4400, %v547
        %v4404 = vadd.f32 %v4403, %v3867
        %4406 = vrot.lane.b32.xlu0 %v4403, 32
        %v4407 = vpop.permute.xlu0 %4406
        %v4409 = vmax.f32 %v4404, %v4407
        %4411 = vrot.lane.b32.xlu0 %v4409, 96
        %v4412 = vpop.permute.xlu0 %4411
        %v4414 = vsub.f32 %v4403, %v4412
        %v4415 = vmul.f32 %v4414, 1.442695
        %v4416 = vpow.pop %v4415
        %v4417 = vsub.f32 %v4403, %v4409
        %v4418 = vadd.f32 %v4417, %v3867
        %v4419 = vmul.f32 %v4418, 1.442695
        %v4420 = vpow.pop %v4419
        %v4421 = vtanh.pop %v4403
        %v4422 = vxor.u32 %v4403, 2147483648
        %v4423 = vmul.f32 %v4422, 1.442695
        %v4424 = vpow.pop %v4423
        %v4425 = vadd.f32 %v4424, 1.0
        %v4426 = vrcp.pop %v4425
        %v4427 = vmul.f32 1.0, %v4426
        %v4428 = vmul.f32 %v4420, %v3896
        %4430 = vrot.lane.b32.xlu0 %v4421, 64
        %v4431 = vpop.permute.xlu0 %4430
        %v4433 = vmul.f32 %v4416, %v4431
        %4435 = vrot.lane.b32.xlu0 %v4433, 32
        %v4436 = vpop.permute.xlu0 %4435
        %v4438 = vadd.f32 %v4428, %v4436
        %v4439 = vmul.f32 %v4420, %v3902
        %4441 = vrot.lane.b32.xlu0 %v4416, 32
        %v4442 = vpop.permute.xlu0 %4441
        %v4444 = vadd.f32 %v4439, %v4442
        %v4445 = vrcp.pop %v4444
        %v4446 = vmul.f32 %v4444, %v4445
        %v4447 = vsub.f32 2.0, %v4446
        %v4448 = vmul.f32 %v4445, %v4447
        %v4449 = vmul.f32 %v4438, %v4448
        %4451 = vrot.lane.b32.xlu0 %v4449, 64
        %v4452 = vpop.permute.xlu0 %4451
        %v4454 = vmul.f32 %v4427, %v4452
        %4456 = vrot.lane.b32.xlu0 %v4454, 32
        %v4457 = vpop.permute.xlu0 %4456
        %v4458 = vsel %vm371, %v4457, 0
        %4460 = vmatprep.subr.mxu0 0.0
        %4461 = vmatpush1.msra.mxu0 %v351
        %4462 = vmatprep.subr.mxu0 0.0
        %4463 = vmatpush1.msra.mxu0 %v352
        %4464 = vmatprep.subr.mxu0 0.0
        %4465 = vmatpush1.msra.mxu0 %v353
        %4466 = vmatprep.subr.mxu0 0.0
        %4467 = vmatpush1.msra.mxu0 %v354
        %4468 = vmatprep.subr.mxu0 0.0
        %4469 = vmatpush1.msra.mxu0 0.0
        %4470 = vmatprep.subr.mxu0 0.0
        %4471 = vmatpush1.msra.mxu0 0.0
        %4472 = vmatprep.subr.mxu0 0.0
        %4473 = vmatpush1.msra.mxu0 0.0
        %4474 = vmatprep.subr.mxu0 0.0
        %4475 = vmatpush1.msra.mxu0 0.0
        %4476 = vmatprep.subr.mxu0 0.0
        %4477 = vmatpush1.msra.mxu0 0.0
        %4478 = vmatprep.subr.mxu0 0.0
        %4479 = vmatpush1.msra.mxu0 0.0
        %4480 = vmatprep.subr.mxu0 0.0
        %4481 = vmatpush1.msra.mxu0 0.0
        %4482 = vmatprep.subr.mxu0 0.0
        %4483 = vmatpush1.msra.mxu0 0.0
        %4484 = vmatprep.subr.mxu0 0.0
        %4485 = vmatpush1.msra.mxu0 0.0
        %4486 = vmatprep.subr.mxu0 0.0
        %4487 = vmatpush1.msra.mxu0 0.0
        %4488 = vmatprep.subr.mxu0 0.0
        %4489 = vmatpush1.msra.mxu0 0.0
        %4490 = vmatprep.subr.mxu0 0.0
        %4491 = vmatpush1.msra.mxu0 0.0
        %4492 = vmatprep.subr.mxu0 0.0
        %4493 = vmatpush1.msra.mxu0 0.0
        %4494 = vmatprep.subr.mxu0 0.0
        %4495 = vmatpush1.msra.mxu0 0.0
        %4496 = vmatprep.subr.mxu0 0.0
        %4497 = vmatpush1.msra.mxu0 0.0
        %4498 = vmatprep.subr.mxu0 0.0
        %4499 = vmatpush1.msra.mxu0 0.0
        %4500 = vmatprep.subr.mxu0 0.0
        %4501 = vmatpush1.msra.mxu0 0.0
        %4502 = vmatprep.subr.mxu0 0.0
        %4503 = vmatpush1.msra.mxu0 0.0
        %4504 = vmatprep.subr.mxu0 0.0
        %4505 = vmatpush1.msra.mxu0 0.0
        %4506 = vmatprep.subr.mxu0 0.0
        %4507 = vmatpush1.msra.mxu0 0.0
        %4508 = vmatprep.subr.mxu0 0.0
        %4509 = vmatpush1.msra.mxu0 0.0
        %4510 = vmatprep.subr.mxu0 0.0
        %4511 = vmatpush1.msra.mxu0 0.0
        %4512 = vmatprep.subr.mxu0 0.0
        %4513 = vmatpush1.msra.mxu0 0.0
        %4514 = vmatprep.subr.mxu0 0.0
        %4515 = vmatpush1.msra.mxu0 0.0
        %4516 = vmatprep.subr.mxu0 0.0
        %4517 = vmatpush1.msra.mxu0 0.0
        %4518 = vmatprep.subr.mxu0 0.0
        %4519 = vmatpush1.msra.mxu0 0.0
        %4520 = vmatprep.subr.mxu0 0.0
        %4521 = vmatpush1.msra.mxu0 0.0
        %4522 = vmatprep.subr.mxu0 0.0
        %4523 = vmatpush1.msra.mxu0 0.0
        %4524 = vmatprep.mubr.f32.mxu0 0.0
        %4525 = vmatmul.mubr.f32.gmra.mrb[0].mxu0 %v4458
        %v4526 = vpop.f32.mrb[0].mxu0
        %v4527 = vadd.f32 0.0, %v4526
        %v4528 = vpop.f32.mrb[0].mxu0
        %4529 = vdwg.mxu0
        %4531 = vrot.lane.b32.xlu0 %v4527, 96
        %v4532 = vpop.permute.xlu0 %4531
        %v4534 = vsub.f32 %v4454, %v4532
        %v4535 = vmul.f32 %v4534, %v4534
        %4537 = vrot.lane.b32.xlu0 %v4535, 32
        %v4538 = vpop.permute.xlu0 %4537
        %v4539 = vsel %vm371, %v4538, 0
        %4541 = vmatprep.subr.mxu0 0.0
        %4542 = vmatpush1.msra.mxu0 %v351
        %4543 = vmatprep.subr.mxu0 0.0
        %4544 = vmatpush1.msra.mxu0 %v352
        %4545 = vmatprep.subr.mxu0 0.0
        %4546 = vmatpush1.msra.mxu0 %v353
        %4547 = vmatprep.subr.mxu0 0.0
        %4548 = vmatpush1.msra.mxu0 %v354
        %4549 = vmatprep.subr.mxu0 0.0
        %4550 = vmatpush1.msra.mxu0 0.0
        %4551 = vmatprep.subr.mxu0 0.0
        %4552 = vmatpush1.msra.mxu0 0.0
        %4553 = vmatprep.subr.mxu0 0.0
        %4554 = vmatpush1.msra.mxu0 0.0
        %4555 = vmatprep.subr.mxu0 0.0
        %4556 = vmatpush1.msra.mxu0 0.0
        %4557 = vmatprep.subr.mxu0 0.0
        %4558 = vmatpush1.msra.mxu0 0.0
        %4559 = vmatprep.subr.mxu0 0.0
        %4560 = vmatpush1.msra.mxu0 0.0
        %4561 = vmatprep.subr.mxu0 0.0
        %4562 = vmatpush1.msra.mxu0 0.0
        %4563 = vmatprep.subr.mxu0 0.0
        %4564 = vmatpush1.msra.mxu0 0.0
        %4565 = vmatprep.subr.mxu0 0.0
        %4566 = vmatpush1.msra.mxu0 0.0
        %4567 = vmatprep.subr.mxu0 0.0
        %4568 = vmatpush1.msra.mxu0 0.0
        %4569 = vmatprep.subr.mxu0 0.0
        %4570 = vmatpush1.msra.mxu0 0.0
        %4571 = vmatprep.subr.mxu0 0.0
        %4572 = vmatpush1.msra.mxu0 0.0
        %4573 = vmatprep.subr.mxu0 0.0
        %4574 = vmatpush1.msra.mxu0 0.0
        %4575 = vmatprep.subr.mxu0 0.0
        %4576 = vmatpush1.msra.mxu0 0.0
        %4577 = vmatprep.subr.mxu0 0.0
        %4578 = vmatpush1.msra.mxu0 0.0
        %4579 = vmatprep.subr.mxu0 0.0
        %4580 = vmatpush1.msra.mxu0 0.0
        %4581 = vmatprep.subr.mxu0 0.0
        %4582 = vmatpush1.msra.mxu0 0.0
        %4583 = vmatprep.subr.mxu0 0.0
        %4584 = vmatpush1.msra.mxu0 0.0
        %4585 = vmatprep.subr.mxu0 0.0
        %4586 = vmatpush1.msra.mxu0 0.0
        %4587 = vmatprep.subr.mxu0 0.0
        %4588 = vmatpush1.msra.mxu0 0.0
        %4589 = vmatprep.subr.mxu0 0.0
        %4590 = vmatpush1.msra.mxu0 0.0
        %4591 = vmatprep.subr.mxu0 0.0
        %4592 = vmatpush1.msra.mxu0 0.0
        %4593 = vmatprep.subr.mxu0 0.0
        %4594 = vmatpush1.msra.mxu0 0.0
        %4595 = vmatprep.subr.mxu0 0.0
        %4596 = vmatpush1.msra.mxu0 0.0
        %4597 = vmatprep.subr.mxu0 0.0
        %4598 = vmatpush1.msra.mxu0 0.0
        %4599 = vmatprep.subr.mxu0 0.0
        %4600 = vmatpush1.msra.mxu0 0.0
        %4601 = vmatprep.subr.mxu0 0.0
        %4602 = vmatpush1.msra.mxu0 0.0
        %4603 = vmatprep.subr.mxu0 0.0
        %4604 = vmatpush1.msra.mxu0 0.0
        %4605 = vmatprep.mubr.f32.mxu0 0.0
        %4606 = vmatmul.mubr.f32.gmra.mrb[0].mxu0 %v4539
        %v4607 = vpop.f32.mrb[0].mxu0
        %v4608 = vadd.f32 1e-05, %v4607
        %v4609 = vpop.f32.mrb[0].mxu0
        %4610 = vdwg.mxu0
        %v4611 = vrsqrt.pop %v4608
        %4613 = vrot.lane.b32.xlu0 %v4611, 96
        %v4614 = vpop.permute.xlu0 %4613
        %v4616 = vmul.f32 %v4534, %v4614
        %v4617 = vmul.f32 %v4616, %v772
        %v4618 = vadd.f32 %v4617, %v781
        %4620 = vrot.lane.b32.xlu0 %v4618, 32
        %v4621 = vpop.permute.xlu0 %4620
        %v4622 = vsel %vm371, %v4621, 0
        %4624 = vmatprep.subr.mxu0 0.0
        %4625 = vmatpush1.msra.mxu0 %v347
        %4626 = vmatprep.subr.mxu0 0.0
        %4627 = vmatpush1.msra.mxu0 %v348
        %4628 = vmatprep.subr.mxu0 0.0
        %4629 = vmatpush1.msra.mxu0 %v349
        %4630 = vmatprep.subr.mxu0 0.0
        %4631 = vmatpush1.msra.mxu0 %v350
        %4632 = vmatprep.subr.mxu0 0.0
        %4633 = vmatpush1.msra.mxu0 0.0
        %4634 = vmatprep.subr.mxu0 0.0
        %4635 = vmatpush1.msra.mxu0 0.0
        %4636 = vmatprep.subr.mxu0 0.0
        %4637 = vmatpush1.msra.mxu0 0.0
        %4638 = vmatprep.subr.mxu0 0.0
        %4639 = vmatpush1.msra.mxu0 0.0
        %4640 = vmatprep.subr.mxu0 0.0
        %4641 = vmatpush1.msra.mxu0 0.0
        %4642 = vmatprep.subr.mxu0 0.0
        %4643 = vmatpush1.msra.mxu0 0.0
        %4644 = vmatprep.subr.mxu0 0.0
        %4645 = vmatpush1.msra.mxu0 0.0
        %4646 = vmatprep.subr.mxu0 0.0
        %4647 = vmatpush1.msra.mxu0 0.0
        %4648 = vmatprep.subr.mxu0 0.0
        %4649 = vmatpush1.msra.mxu0 0.0
        %4650 = vmatprep.subr.mxu0 0.0
        %4651 = vmatpush1.msra.mxu0 0.0
        %4652 = vmatprep.subr.mxu0 0.0
        %4653 = vmatpush1.msra.mxu0 0.0
        %4654 = vmatprep.subr.mxu0 0.0
        %4655 = vmatpush1.msra.mxu0 0.0
        %4656 = vmatprep.subr.mxu0 0.0
        %4657 = vmatpush1.msra.mxu0 0.0
        %4658 = vmatprep.subr.mxu0 0.0
        %4659 = vmatpush1.msra.mxu0 0.0
        %4660 = vmatprep.subr.mxu0 0.0
        %4661 = vmatpush1.msra.mxu0 0.0
        %4662 = vmatprep.subr.mxu0 0.0
        %4663 = vmatpush1.msra.mxu0 0.0
        %4664 = vmatprep.subr.mxu0 0.0
        %4665 = vmatpush1.msra.mxu0 0.0
        %4666 = vmatprep.subr.mxu0 0.0
        %4667 = vmatpush1.msra.mxu0 0.0
        %4668 = vmatprep.subr.mxu0 0.0
        %4669 = vmatpush1.msra.mxu0 0.0
        %4670 = vmatprep.subr.mxu0 0.0
        %4671 = vmatpush1.msra.mxu0 0.0
        %4672 = vmatprep.subr.mxu0 0.0
        %4673 = vmatpush1.msra.mxu0 0.0
        %4674 = vmatprep.subr.mxu0 0.0
        %4675 = vmatpush1.msra.mxu0 0.0
        %4676 = vmatprep.subr.mxu0 0.0
        %4677 = vmatpush1.msra.mxu0 0.0
        %4678 = vmatprep.subr.mxu0 0.0
        %4679 = vmatpush1.msra.mxu0 0.0
        %4680 = vmatprep.subr.mxu0 0.0
        %4681 = vmatpush1.msra.mxu0 0.0
        %4682 = vmatprep.subr.mxu0 0.0
        %4683 = vmatpush1.msra.mxu0 0.0
        %4684 = vmatprep.subr.mxu0 0.0
        %4685 = vmatpush1.msra.mxu0 0.0
        %4686 = vmatprep.subr.mxu0 0.0
        %4687 = vmatpush1.msra.mxu0 0.0
        %4688 = vmatprep.mubr.f32.mxu0 0.0
        %4689 = vmatmul.mubr.f32.gmra.mrb[0].mxu0 %v4622
        %v4690 = vpop.f32.mrb[0].mxu0
        %v4691 = vadd.f32 %v787, %v4690
        %v4692 = vpop.f32.mrb[0].mxu0
        %4693 = vdwg.mxu0
        %v4694 = vmul.f32 %v4691, 0.5
        %v4695 = vmul.f32 %v4691, 0.70710677
        %v4696 = verf.f32.pop %v4695
        %v4697 = vadd.f32 %v4696, 1.0
        %v4698 = vmul.f32 %v4694, %v4697
        %4700 = vrot.lane.b32.xlu0 %v4698, 64
        %v4701 = vpop.permute.xlu0 %4700
        %v4703 = vadd.f32 %v4691, %v4701
        %v4705 = vsel %vm877, %v4703, 0
        %4707 = vmatprep.subr.mxu0 0.0
        %4708 = vmatpush1.msra.mxu0 %v355
        %4709 = vmatprep.subr.mxu0 0.0
        %4710 = vmatpush1.msra.mxu0 %v356
        %4711 = vmatprep.subr.mxu0 0.0
        %4712 = vmatpush1.msra.mxu0 %v357
        %4713 = vmatprep.subr.mxu0 0.0
        %4714 = vmatpush1.msra.mxu0 %v358
        %4715 = vmatprep.subr.mxu0 0.0
        %4716 = vmatpush1.msra.mxu0 %v359
        %4717 = vmatprep.subr.mxu0 0.0
        %4718 = vmatpush1.msra.mxu0 %v360
        %4719 = vmatprep.subr.mxu0 0.0
        %4720 = vmatpush1.msra.mxu0 %v361
        %4721 = vmatprep.subr.mxu0 0.0
        %4722 = vmatpush1.msra.mxu0 %v362
        %4723 = vmatprep.subr.mxu0 0.0
        %4724 = vmatpush1.msra.mxu0 0.0
        %4725 = vmatprep.subr.mxu0 0.0
        %4726 = vmatpush1.msra.mxu0 0.0
        %4727 = vmatprep.subr.mxu0 0.0
        %4728 = vmatpush1.msra.mxu0 0.0
        %4729 = vmatprep.subr.mxu0 0.0
        %4730 = vmatpush1.msra.mxu0 0.0
        %4731 = vmatprep.subr.mxu0 0.0
        %4732 = vmatpush1.msra.mxu0 0.0
        %4733 = vmatprep.subr.mxu0 0.0
        %4734 = vmatpush1.msra.mxu0 0.0
        %4735 = vmatprep.subr.mxu0 0.0
        %4736 = vmatpush1.msra.mxu0 0.0
        %4737 = vmatprep.subr.mxu0 0.0
        %4738 = vmatpush1.msra.mxu0 0.0
        %4739 = vmatprep.subr.mxu0 0.0
        %4740 = vmatpush1.msra.mxu0 0.0
        %4741 = vmatprep.subr.mxu0 0.0
        %4742 = vmatpush1.msra.mxu0 0.0
        %4743 = vmatprep.subr.mxu0 0.0
        %4744 = vmatpush1.msra.mxu0 0.0
        %4745 = vmatprep.subr.mxu0 0.0
        %4746 = vmatpush1.msra.mxu0 0.0
        %4747 = vmatprep.subr.mxu0 0.0
        %4748 = vmatpush1.msra.mxu0 0.0
        %4749 = vmatprep.subr.mxu0 0.0
        %4750 = vmatpush1.msra.mxu0 0.0
        %4751 = vmatprep.subr.mxu0 0.0
        %4752 = vmatpush1.msra.mxu0 0.0
        %4753 = vmatprep.subr.mxu0 0.0
        %4754 = vmatpush1.msra.mxu0 0.0
        %4755 = vmatprep.subr.mxu0 0.0
        %4756 = vmatpush1.msra.mxu0 0.0
        %4757 = vmatprep.subr.mxu0 0.0
        %4758 = vmatpush1.msra.mxu0 0.0
        %4759 = vmatprep.subr.mxu0 0.0
        %4760 = vmatpush1.msra.mxu0 0.0
        %4761 = vmatprep.subr.mxu0 0.0
        %4762 = vmatpush1.msra.mxu0 0.0
        %4763 = vmatprep.subr.mxu0 0.0
        %4764 = vmatpush1.msra.mxu0 0.0
        %4765 = vmatprep.subr.mxu0 0.0
        %4766 = vmatpush1.msra.mxu0 0.0
        %4767 = vmatprep.subr.mxu0 0.0
        %4768 = vmatpush1.msra.mxu0 0.0
        %4769 = vmatprep.subr.mxu0 0.0
        %4770 = vmatpush1.msra.mxu0 0.0
        %4771 = vmatprep.mubr.f32.mxu0 0.0
        %4772 = vmatmul.mubr.f32.gmra.mrb[0].mxu0 %v4705
        %v4773 = vpop.f32.mrb[0].mxu0
        %v4774 = vadd.f32 %v876, %v4773
        %v4775 = vpop.f32.mrb[0].mxu0
        %4776 = vdwg.mxu0
        %v4777 = vadd.f32 %v4774, %v4237
        %4779 = vrot.lane.b32.xlu0 %v3693, 32
        %v4780 = vpop.permute.xlu0 %4779
        %4783 = vrot.lane.b32.xlu0 %v4235, 64
        %v4784 = vpop.permute.xlu0 %4783
        %4787 = vrot.lane.b32.xlu0 %v4777, 96
        %v4788 = vpop.permute.xlu0 %4787
        %v4790 = vsel %vm371, %v3150, %v4780
        %v4791 = vsel %vm877, %v4790, %v4784
        %v4792 = vsel %vm2613, %v4791, %v4788
        %s4793 = scalar_lea.vmem %s328, 8 [#allocation11]
        %4794 = vst [vmem:[%s4793] sm:$0xff] %v4792
        %4796 = vrot.lane.b32.xlu0 %v4438, 96
        %v4797 = vpop.permute.xlu0 %4796
        %4799 = vrot.lane.b32.xlu0 %v4454, 96
        %v4800 = vpop.permute.xlu0 %4799
        %4802 = vrot.lane.b32.xlu0 %v4409, 64
        %v4803 = vpop.permute.xlu0 %4802
        %v4805 = vsel %vm371, %v4797, %v4444
        %v4806 = vsel %vm877, %v4805, %v4800
        %v4807 = vsel %vm2613, %v4806, %v4803
        %4808 = vst [vmem:[#allocation2] sm:$0xff] %v4807
        %p4809 = scmp.eq.s32.totalorder %s35, 1
        // Predicated region
        $region57: #{tpu_custom_call.1} parent=35 // pred_check
          %p4810 = pneg %p4809
        $region58: #{tpu_custom_call.1} parent=35 // pred_check_branch
          %4812 = sbr.rel (%p4810) target = $region60
        $region59: #{tpu_custom_call.1} parent=35 // pred_region
          %v4813 = vld [vmem:[#allocation2] sm:$0xff]
          %4814 = vst [vmem:[%s335] sm:$0xff] %v4813
        $region60: #{tpu_custom_call.1} parent=35 // pred_fallthru
          _
        %s4815 = sand.u32 %s148, 1
        %s4816 = scalar_lea.sflag [#allocation5], %s4815
        %s4817 = sand.u32 %s148, 1
        %s4818 = smul.addr %s4817, 16
        %s4819 = scalar_lea.vmem [#allocation11], %s4818
        %s4820 = sand.u32 %s174, 1
        %s4821 = scalar_lea.sflag [#allocation13], %s4820
        %s4822 = sand.u32 %s174, 1
        %s4823 = smul.addr %s4822, 8
        %s4824 = scalar_lea.vmem [#allocation12], %s4823
        // Predicated region
        $region61: #{tpu_custom_call.1} parent=35 // pred_check
          %p4825 = pneg %p158
        $region62: #{tpu_custom_call.1} parent=35 // pred_check_branch
          %4827 = sbr.rel (%p4825) target = $region64
        $region63: #{tpu_custom_call.1} parent=35 // pred_region
          %s4828 = smul.u32 2, %s35
          %s4830 = ssub.s32 256, 256
          %4831 = vsyncadd %s4816, %s4830
          %s4832 = smul.addr %s4828, 2
          %s4833 = sadd.s32 %s34, %s4832
          %s4834 = smul.addr %s4833, 128
          %s4835 = scalar_lea.hbm %s4, %s4834
          %s4836 = sshll.u32 %s4819, 4
          %s4837 = int_to_ptr.vmem [resolvable:$true] %s4836
          %4842 = dma.vmem_to_hbm [thread:$0]  %s4837, 256, %s4835, %s4816, 128, 256, 8
        $region64: #{tpu_custom_call.1} parent=35 // pred_fallthru
          _
        // Predicated region
        $region65: #{tpu_custom_call.1} parent=35 // pred_check
          %p4843 = pneg %p184
        $region66: #{tpu_custom_call.1} parent=35 // pred_check_branch
          %4845 = sbr.rel (%p4843) target = $region68
        $region67: #{tpu_custom_call.1} parent=35 // pred_region
          %s4847 = ssub.s32 128, 128
          %4848 = vsyncadd %s4821, %s4847
          %s4849 = smul.addr %s34, 128
          %s4850 = scalar_lea.hbm %s5, %s4849
          %s4852 = sshll.u32 %s4824, 4
          %s4853 = int_to_ptr.vmem [resolvable:$true] %s4852
          %4855 = dma.vmem_to_hbm [thread:$0]  %s4853, 128, %s4850, %s4821
        $region68: #{tpu_custom_call.1} parent=35 // pred_fallthru
          _
      $region36: #{tpu_custom_call.1} parent=5 // pred_fallthru
        _
      %p4856 = scmp.le.s32.totalorder 2, %s25
      // Predicated region
      $region69: #{tpu_custom_call.1} parent=5 // pred_check
        %p4857 = pneg %p4856
      $region70: #{tpu_custom_call.1} parent=5 // pred_check_branch
        %4859 = sbr.rel (%p4857) target = $region72
      $region71: #{tpu_custom_call.1} parent=5 // pred_region
        %s4860 = ssub.s32 %s25, 2
        // Predicated region
        $region73: #{tpu_custom_call.1} parent=71 // pred_check
          %p4861 = pneg %p164
        $region74: #{tpu_custom_call.1} parent=71 // pred_check_branch
          %4863 = sbr.rel (%p4861) target = $region76
        $region75: #{tpu_custom_call.1} parent=71 // pred_region
          %s4864 = sand.u32 %s149, 1
          %s4865 = scalar_lea.sflag [#allocation5], %s4864
          %s4866 = sand.u32 %s149, 1
          %s4867 = smul.addr %s4866, 16
          %s4868 = scalar_lea.vmem [#allocation11], %s4867
          %4869 = dma.done %s4865, 256
        $region76: #{tpu_custom_call.1} parent=71 // pred_fallthru
          _
        // Predicated region
        $region77: #{tpu_custom_call.1} parent=71 // pred_check
          %p4870 = pneg %p190
        $region78: #{tpu_custom_call.1} parent=71 // pred_check_branch
          %4872 = sbr.rel (%p4870) target = $region80
        $region79: #{tpu_custom_call.1} parent=71 // pred_region
          %s4873 = sand.u32 %s175, 1
          %s4874 = scalar_lea.sflag [#allocation13], %s4873
          %s4875 = sand.u32 %s175, 1
          %s4876 = smul.addr %s4875, 8
          %s4877 = scalar_lea.vmem [#allocation12], %s4876
          %4878 = dma.done %s4874, 128
        $region80: #{tpu_custom_call.1} parent=71 // pred_fallthru
          _
      $region72: #{tpu_custom_call.1} parent=5 // pred_fallthru
        _
    $region6: #{tpu_custom_call.1} parent=1 // loop_footer
      %s29 = sadd.s32 1, %s25
    $region7: #{tpu_custom_call.1} parent=1 // loop_footer_branch
      %24 = sbr.rel target = $region3
    $region8: #{tpu_custom_call.1} parent=1 // loop_exit
      _
    %4879 = vsyncpa [#allocation4], 1
    %s4880 = scalar_lea.sflag [#allocation4], 1
    %4881 = vsyncpa %s4880, 1
    %4882 = vsyncpa [#allocation7], 1
    %s4883 = scalar_lea.sflag [#allocation7], 1
    %4884 = vsyncpa %s4883, 1
    %4885 = vsyncpa [#allocation10], 1
    %4886 = vsyncpa [#allocation5], 1
    %s4887 = scalar_lea.sflag [#allocation5], 1
    %4888 = vsyncpa %s4887, 1
    %4889 = vsyncpa [#allocation13], 1
    %s4890 = scalar_lea.sflag [#allocation13], 1
    %4891 = vsyncpa %s4890, 1

</llo_original>
